<compile_context>
chip_gen: v7x
topology: tpu7x:2x2x1
jax: 0.10.0
libtpu: 0.0.40
codegen_flags: <defaults>
</compile_context>

<pallas_src>
import math

import jax
import jax.numpy as jnp
from jax.experimental import pallas as pl
from jax.experimental.pallas import tpu as pltpu


_BF16 = jnp.bfloat16                     # MXU input dtype (f32 accumulation)
_VMEM_LIMIT_BYTES = 32 * 1024 * 1024     # safe on v5e/v6e (128 MiB) and v7x (64 MiB)


# ----------------------------------------------------------------------------
# Pallas kernel: the whole forward pass for one image per grid step
# ----------------------------------------------------------------------------
def _resnet_kernel(lhs1_ref, w1_ref, b1_ref,
                   wl1_ref, bl1_ref,
                   w21_ref, b21_ref, bds_ref,
                   w2b_ref, b2b_ref,
                   o_ref,
                   lhs8_ref, lhs4a_ref, lhs4b_ref):
    f32 = jnp.float32

    # Zero the im2row scratch buffers: the cells that are never written below
    # are exactly the zero-padding rows/taps of every conv that reuses them.
    lhs8_ref[...] = jnp.zeros(lhs8_ref.shape, lhs8_ref.dtype)
    lhs4a_ref[...] = jnp.zeros(lhs4a_ref.shape, lhs4a_ref.dtype)
    lhs4b_ref[...] = jnp.zeros(lhs4b_ref.shape, lhs4b_ref.dtype)

    # ---------------- conv1 (7x7 /2, 3->16) + BN + ReLU: one MXU dot ---------
    # lhs1 rows  = conv1 output rows ordered (row parity, row//2)
    # w1 columns = conv1 output cols ordered (col parity, col//2, channel)
    # so the fused maxpool below only needs vreg-aligned slices.
    o1 = jnp.dot(lhs1_ref[0], w1_ref[...], preferred_element_type=f32)
    o1 = jnp.maximum(o1 + b1_ref[...], 0.0)                 # [16, 256] f32

    # ---------------- maxpool 3x3 /2 pad 1, fused into the epilogue ----------
    # Output row A needs conv1 rows {2A-1, 2A, 2A+1}; values are post-ReLU so
    # a 0 pad is exactly equivalent to -inf padding.
    ev = o1[0:8, :]                                          # conv1 rows 0,2,..,14
    od = o1[8:16, :]                                         # conv1 rows 1,3,..,15
    od_up = pltpu.roll(od, shift=1, axis=0)                  # row A -> conv1 row 2A-1
    row_id = jax.lax.broadcasted_iota(jnp.int32, od_up.shape, 0)
    od_up = jnp.where(row_id >= 1, od_up, 0.0)               # top pad
    rmax = jnp.maximum(jnp.maximum(ev, od), od_up)           # [8, 256]
    # Output col B needs conv1 cols {2B-1, 2B, 2B+1} (16 lanes per column).
    ce = rmax[:, 0:128]                                      # conv1 cols 0,2,..,14
    co = rmax[:, 128:256]                                    # conv1 cols 1,3,..,15
    co_up = pltpu.roll(co, shift=16, axis=1)                 # col B -> conv1 col 2B-1
    lane_id = jax.lax.broadcasted_iota(jnp.int32, co_up.shape, 1)
    co_up = jnp.where(lane_id >= 16, co_up, 0.0)             # left pad
    pooled = jnp.maximum(jnp.maximum(ce, co), co_up)         # [8,128] f32, (h, w*16+c)

    # ------------- fused 3x3 stride-1 conv + BN [+ residual] [+ ReLU] --------
    # Activations live in a lane-dense [H, W*C] (=128 lane) layout; the banded
    # weight already contains the column taps / zero padding / BN scale, so an
    # im2row over ROWS only (3 vreg-aligned copies) + one dot does the conv.
    def conv3x3(x, lhs_ref, w, brow, residual=None, relu=True):
        h = x.shape[0]
        lhs_ref[1:h, 0:128] = x[0:h - 1, :].astype(_BF16)    # tap row -1
        lhs_ref[0:h, 128:256] = x.astype(_BF16)              # tap row  0
        lhs_ref[0:h - 1, 256:384] = x[1:h, :].astype(_BF16)  # tap row +1
        y = jnp.dot(lhs_ref[...], w, preferred_element_type=f32) + brow
        if residual is not None:
            y = y + residual
        if relu:
            y = jnp.maximum(y, 0.0)
        return y

    # ---------------- layer1: 2 BasicBlocks, 16 ch, stride 1 -----------------
    y = conv3x3(pooled, lhs8_ref, wl1_ref[0], bl1_ref[0])
    x1 = conv3x3(y, lhs8_ref, wl1_ref[1], bl1_ref[1], residual=pooled)
    y = conv3x3(x1, lhs8_ref, wl1_ref[2], bl1_ref[2])
    x2 = conv3x3(y, lhs8_ref, wl1_ref[3], bl1_ref[3], residual=x1)   # [8,128]

    # ---------------- layer2 block0 (stride 2, 16 -> 32) ---------------------
    # The 3x3/2 conv and the 1x1/2 downsample share one im2row LHS (rows of the
    # input selected with stride 2); their banded weights are concatenated
    # column-wise, so both are computed by a single [4,384]x[384,256] dot.
    for ki in range(3):
        for a in range(4):
            r = 2 * a + ki - 1
            if 0 <= r <= 7:
                lhs4a_ref[a:a + 1, ki * 128:(ki + 1) * 128] = \
                    x2[r:r + 1, :].astype(_BF16)
    both = jnp.dot(lhs4a_ref[...], w21_ref[...], preferred_element_type=f32)
    o21 = jnp.maximum(both[:, 0:128] + b21_ref[...], 0.0)    # conv1 + bn1 + relu
    ods = both[:, 128:256] + bds_ref[...]                    # downsample + bn
    z = conv3x3(o21, lhs4b_ref, w2b_ref[0], b2b_ref[0], residual=ods)

    # ---------------- layer2 block1 (stride 1, 32 ch) ------------------------
    y = conv3x3(z, lhs4b_ref, w2b_ref[1], b2b_ref[1])
    out = conv3x3(y, lhs4b_ref, w2b_ref[2], b2b_ref[2], residual=z)  # [4,128]

    o_ref[0, :, :] = out                                     # lane-dense f32 store


# ----------------------------------------------------------------------------
# wrapper-side weight packing (banded "taps + column stride fused into K")
# ----------------------------------------------------------------------------
def _banded_weight(w_oihw, scale, *, stride, pad, in_w, out_w, wout_order=None):
    """Conv weight [OC,IC,KH,KW] -> banded matmul weight [KH*in_w*IC, out_w*OC].

    Row index = ki*(in_w*IC) + w*IC + c  (tap row ki, input col w, in-channel c)
    Col index = j*OC + oc                 (output col wout[j], out-channel oc)
    entry     = scale[oc] * W[oc,c,ki,kj] with kj = w - stride*wout[j] + pad,
                zero if kj is outside [0,KW).  Out-of-range column taps simply
                have no row, i.e. implicit zero padding.
    """
    OC, IC, KH, KW = w_oihw.shape
    wf = w_oihw.astype(jnp.float32) * scale.astype(jnp.float32)[:, None, None, None]
    wout = (jnp.arange(out_w, dtype=jnp.int32) if wout_order is None
            else jnp.asarray(wout_order, jnp.int32))
    k_shape = (KH, in_w, IC)
    ki_r = jnp.broadcast_to(jnp.arange(KH, dtype=jnp.int32)[:, None, None], k_shape).reshape(-1)
    wi_r = jnp.broadcast_to(jnp.arange(in_w, dtype=jnp.int32)[None, :, None], k_shape).reshape(-1)
    ci_r = jnp.broadcast_to(jnp.arange(IC, dtype=jnp.int32)[None, None, :], k_shape).reshape(-1)
    c_shape = (out_w, OC)
    wo_c = jnp.broadcast_to(wout[:, None], c_shape).reshape(-1)
    oc_c = jnp.broadcast_to(jnp.arange(OC, dtype=jnp.int32)[None, :], c_shape).reshape(-1)
    kj = wi_r[:, None] - stride * wo_c[None, :] + pad
    valid = (kj >= 0) & (kj < KW)
    kj_c = jnp.clip(kj, 0, KW - 1)
    vals = wf[oc_c[None, :], ci_r[:, None], ki_r[:, None], kj_c]
    return jnp.where(valid, vals, 0.0).astype(_BF16)


def _tiled_bias(bias, out_w):
    """BN bias [OC] -> [1, out_w*OC] f32 row matching the (w, oc) lane layout."""
    b = bias.astype(jnp.float32)
    return jnp.tile(b, out_w).reshape(1, out_w * b.shape[0])


def pack_params(params):
    """Fold BN into weights/biases and build the banded matmul operands."""
    wout16 = jnp.concatenate([jnp.arange(0, 16, 2), jnp.arange(1, 16, 2)])
    s1, b1 = params["bn1"]
    packed = {
        "w1": _banded_weight(params["conv1_w"], s1, stride=2, pad=3,
                             in_w=32, out_w=16, wout_order=wout16),   # [672,256]
        "b1": _tiled_bias(b1, 16),                                    # [1,256]
    }
    # layer1: four 3x3/1 convs on 8x8x16
    wl1, bl1 = [], []
    for blk in params["layer1"]:
        for wname, bnname in (("conv1_w", "bn1"), ("conv2_w", "bn2")):
            s, b = blk[bnname]
            wl1.append(_banded_weight(blk[wname], s, stride=1, pad=1, in_w=8, out_w=8))
            bl1.append(_tiled_bias(b, 8))
    packed["wl1"] = jnp.stack(wl1)                                    # [4,384,128]
    packed["bl1"] = jnp.stack(bl1)                                    # [4,1,128]

    blk0, blk1 = params["layer2"]
    # layer2 block0: 3x3/2 conv + fused 1x1/2 downsample (as a center-tap 3x3)
    s, b = blk0["bn1"]
    w_s2 = _banded_weight(blk0["conv1_w"], s, stride=2, pad=1, in_w=8, out_w=4)
    sd, bd = blk0["downsample"]["bn"]
    wds = blk0["downsample"]["w"]                                     # [32,16,1,1]
    wds_v = jnp.zeros((32, 16, 3, 3), jnp.float32).at[:, :, 1, 1].set(wds[:, :, 0, 0])
    w_ds = _banded_weight(wds_v, sd, stride=2, pad=1, in_w=8, out_w=4)
    packed["w21"] = jnp.concatenate([w_s2, w_ds], axis=1)             # [384,256]
    packed["b21"] = _tiled_bias(b, 4)
    packed["bds"] = _tiled_bias(bd, 4)
    # remaining three 3x3/1 convs of layer2 (block0.conv2, block1.conv1/conv2)
    w2b, b2b = [], []
    s, b = blk0["bn2"]
    w2b.append(_banded_weight(blk0["conv2_w"], s, stride=1, pad=1, in_w=4, out_w=4))
    b2b.append(_tiled_bias(b, 4))
    for wname, bnname in (("conv1_w", "bn1"), ("conv2_w", "bn2")):
        s, b = blk1[bnname]
        w2b.append(_banded_weight(blk1[wname], s, stride=1, pad=1, in_w=4, out_w=4))
        b2b.append(_tiled_bias(b, 4))
    packed["w2b"] = jnp.stack(w2b)                                    # [3,384,128]
    packed["b2b"] = jnp.stack(b2b)                                    # [3,1,128]
    return packed


# ----------------------------------------------------------------------------
# forward
# ----------------------------------------------------------------------------
def _conv1_lhs(x_nhwc):
    """im2row LHS for conv1: [N, 16, 7*32*3], rows ordered (row parity, row//2)."""
    n = x_nhwc.shape[0]
    xp = jnp.pad(x_nhwc, ((0, 0), (3, 3), (0, 0), (0, 0)))            # pad rows only
    h_out = jnp.concatenate([jnp.arange(0, 16, 2), jnp.arange(1, 16, 2)])
    rows = 2 * h_out[:, None] + jnp.arange(7)[None, :]                # [16, 7]
    lhs = xp[:, rows]                                                 # [N,16,7,32,3]
    return lhs.reshape(n, 16, 7 * 32 * 3).astype(_BF16)


def resnet_forward(x_nchw, packed):
    n, c, h, w = x_nchw.shape
    assert (c, h, w) == (3, 32, 32), "this packed kernel is specialized to 3x32x32"
    x = jnp.transpose(x_nchw, (0, 2, 3, 1))                           # NCHW -> NHWC
    lhs1 = _conv1_lhs(x)

    out = pl.pallas_call(
        _resnet_kernel,
        out_shape=jax.ShapeDtypeStruct((n, 4, 128), jnp.float32),
        grid=(n,),
        in_specs=[
            pl.BlockSpec((1, 16, 672), lambda i: (i, 0, 0)),
            pl.BlockSpec((672, 256), lambda i: (0, 0)),
            pl.BlockSpec((1, 256), lambda i: (0, 0)),
            pl.BlockSpec((4, 384, 128), lambda i: (0, 0, 0)),
            pl.BlockSpec((4, 1, 128), lambda i: (0, 0, 0)),
            pl.BlockSpec((384, 256), lambda i: (0, 0)),
            pl.BlockSpec((1, 128), lambda i: (0, 0)),
            pl.BlockSpec((1, 128), lambda i: (0, 0)),
            pl.BlockSpec((3, 384, 128), lambda i: (0, 0, 0)),
            pl.BlockSpec((3, 1, 128), lambda i: (0, 0, 0)),
        ],
        out_specs=pl.BlockSpec((1, 4, 128), lambda i: (i, 0, 0)),
        scratch_shapes=[
            pltpu.VMEM((8, 384), _BF16),   # im2row LHS for 8x8x16 convs
            pltpu.VMEM((4, 384), _BF16),   # im2row LHS for the stride-2 conv
            pltpu.VMEM((4, 384), _BF16),   # im2row LHS for 4x4x32 convs
        ],
        compiler_params=pltpu.CompilerParams(
            dimension_semantics=("parallel",),
            vmem_limit_bytes=_VMEM_LIMIT_BYTES),
    )(lhs1, packed["w1"], packed["b1"], packed["wl1"], packed["bl1"],
      packed["w21"], packed["b21"], packed["bds"], packed["w2b"], packed["b2b"])

    # dropout (p=0.5) -> identity in inference
    out = out.reshape(n, 4, 4, 32)                                    # (h, w, c)
    return jnp.transpose(out, (0, 3, 1, 2))                           # NCHW [N,32,4,4]


# ----------------------------------------------------------------------------
# deterministic parameter construction (mirrors ResNet.__init__ inits)
# ----------------------------------------------------------------------------
def _make_conv(key, oc, ic, kh, kw):
    n = kh * kw * oc
    return jax.random.normal(key, (oc, ic, kh, kw), jnp.float32) * math.sqrt(2.0 / n)


def _make_bn(c, eps=1e-5):
    gamma = jnp.ones((c,), jnp.float32)
    beta = jnp.zeros((c,), jnp.float32)
    mean = jnp.zeros((c,), jnp.float32)
    var = jnp.ones((c,), jnp.float32)
    scale = gamma / jnp.sqrt(var + eps)
    bias = beta - mean * scale
    return scale, bias


def init_params(key):
    keys = iter(jax.random.split(key, 16))
    params = {"conv1_w": _make_conv(next(keys), 16, 3, 7, 7), "bn1": _make_bn(16)}
    inplanes = 16

    def make_layer(planes, blocks, stride):
        nonlocal inplanes
        layer = []
        for b in range(blocks):
            s = stride if b == 0 else 1
            blk = {"conv1_w": _make_conv(next(keys), planes, inplanes, 3, 3),
                   "bn1": _make_bn(planes),
                   "conv2_w": _make_conv(next(keys), planes, planes, 3, 3),
                   "bn2": _make_bn(planes),
                   "stride": s}
            if s != 1 or inplanes != planes:      # BasicBlock.expansion == 1
                blk["downsample"] = {"w": _make_conv(next(keys), planes, inplanes, 1, 1),
                                     "bn": _make_bn(planes)}
            layer.append(blk)
            inplanes = planes
        return layer

    params["layer1"] = make_layer(16, 2, 1)
    params["layer2"] = make_layer(32, 2, 2)
    return params


# ----------------------------------------------------------------------------
if __name__ == "__main__":
    key = jax.random.PRNGKey(0)
    pkey, xkey = jax.random.split(key)
    params = init_params(pkey)
    packed = pack_params(params)            # BN folded + banded weights (one-time)

    # small input consistent with conv1 (3 input channels), NCHW like PyTorch
    x = jax.random.normal(xkey, (2, 3, 32, 32), jnp.float32)

    out = jax.jit(resnet_forward)(x, packed)
    out = jax.block_until_ready(out)

    assert out.shape == (2, 32, 4, 4), out.shape
    assert bool(jnp.all(jnp.isfinite(out)))
    print("KERNEL_OK")
</pallas_src>

<mosaic_0001>
module attributes {stable_mosaic.version = 11 : i64} {
  func.func @_resnet_kernel(%arg0: i32, %arg1: memref<1x16x672xbf16, #tpu.memory_space<vmem>>, %arg2: memref<672x256xbf16, #tpu.memory_space<vmem>>, %arg3: memref<1x256xf32, #tpu.memory_space<vmem>>, %arg4: memref<4x384x128xbf16, #tpu.memory_space<vmem>>, %arg5: memref<4x1x128xf32, #tpu.memory_space<vmem>>, %arg6: memref<384x256xbf16, #tpu.memory_space<vmem>>, %arg7: memref<1x128xf32, #tpu.memory_space<vmem>>, %arg8: memref<1x128xf32, #tpu.memory_space<vmem>>, %arg9: memref<3x384x128xbf16, #tpu.memory_space<vmem>>, %arg10: memref<3x1x128xf32, #tpu.memory_space<vmem>>, %arg11: memref<1x4x128xf32, #tpu.memory_space<vmem>>, %arg12: memref<8x384xbf16, #tpu.memory_space<vmem>>, %arg13: memref<4x384xbf16, #tpu.memory_space<vmem>>, %arg14: memref<4x384xbf16, #tpu.memory_space<vmem>>) attributes {dimension_semantics = [#tpu.dimension_semantics<parallel>], iteration_bounds = array<i64: 2>, scalar_prefetch = 0 : i64, scratch_operands = 3 : i64, tpu.core_type = #tpu.core_type<tc>, window_params = [{transform_indices = @transform_0, window_bounds = array<i64: 1, 16, 672>}, {pipeline_mode = #tpu.pipeline_mode<synchronous>, transform_indices = @transform_1, window_bounds = array<i64: 672, 256>}, {pipeline_mode = #tpu.pipeline_mode<synchronous>, transform_indices = @transform_2, window_bounds = array<i64: 1, 256>}, {pipeline_mode = #tpu.pipeline_mode<synchronous>, transform_indices = @transform_3, window_bounds = array<i64: 4, 384, 128>}, {pipeline_mode = #tpu.pipeline_mode<synchronous>, transform_indices = @transform_4, window_bounds = array<i64: 4, 1, 128>}, {pipeline_mode = #tpu.pipeline_mode<synchronous>, transform_indices = @transform_5, window_bounds = array<i64: 384, 256>}, {pipeline_mode = #tpu.pipeline_mode<synchronous>, transform_indices = @transform_6, window_bounds = array<i64: 1, 128>}, {pipeline_mode = #tpu.pipeline_mode<synchronous>, transform_indices = @transform_7, window_bounds = array<i64: 1, 128>}, {pipeline_mode = #tpu.pipeline_mode<synchronous>, transform_indices = @transform_8, window_bounds = array<i64: 3, 384, 128>}, {pipeline_mode = #tpu.pipeline_mode<synchronous>, transform_indices = @transform_9, window_bounds = array<i64: 3, 1, 128>}, {transform_indices = @transform_10, window_bounds = array<i64: 1, 4, 128>}]} {
    %cst = arith.constant 0.000000e+00 : bf16
    %0 = vector.broadcast %cst : bf16 to vector<8x384xbf16>
    %c0 = arith.constant 0 : index
    %c0_0 = arith.constant 0 : index
    %1 = vector.load %arg12[%c0, %c0_0] : memref<8x384xbf16, #tpu.memory_space<vmem>>, vector<8x384xbf16>
    tpu.vector_store %arg12[%c0, %c0_0], %0 {strides = array<i32>} : memref<8x384xbf16, #tpu.memory_space<vmem>>, vector<8x384xbf16>,
    %cst_1 = arith.constant 0.000000e+00 : bf16
    %2 = vector.broadcast %cst_1 : bf16 to vector<4x384xbf16>
    %c0_2 = arith.constant 0 : index
    %c0_3 = arith.constant 0 : index
    %3 = vector.load %arg13[%c0_2, %c0_3] : memref<4x384xbf16, #tpu.memory_space<vmem>>, vector<4x384xbf16>
    tpu.vector_store %arg13[%c0_2, %c0_3], %2 {strides = array<i32>} : memref<4x384xbf16, #tpu.memory_space<vmem>>, vector<4x384xbf16>,
    %cst_4 = arith.constant 0.000000e+00 : bf16
    %4 = vector.broadcast %cst_4 : bf16 to vector<4x384xbf16>
    %c0_5 = arith.constant 0 : index
    %c0_6 = arith.constant 0 : index
    %5 = vector.load %arg14[%c0_5, %c0_6] : memref<4x384xbf16, #tpu.memory_space<vmem>>, vector<4x384xbf16>
    tpu.vector_store %arg14[%c0_5, %c0_6], %4 {strides = array<i32>} : memref<4x384xbf16, #tpu.memory_space<vmem>>, vector<4x384xbf16>,
    %c0_7 = arith.constant 0 : index
    %c0_8 = arith.constant 0 : index
    %c0_9 = arith.constant 0 : index
    %6 = vector.load %arg1[%c0_7, %c0_8, %c0_9] : memref<1x16x672xbf16, #tpu.memory_space<vmem>>, vector<1x16x672xbf16>
    %7 = vector.shape_cast %6 : vector<1x16x672xbf16> to vector<16x672xbf16>
    %c0_10 = arith.constant 0 : index
    %c0_11 = arith.constant 0 : index
    %8 = vector.load %arg2[%c0_10, %c0_11] : memref<672x256xbf16, #tpu.memory_space<vmem>>, vector<672x256xbf16>
    %cst_12 = arith.constant dense<0.000000e+00> : vector<16x256xf32>
    %9 = tpu.matmul %7, %8, %cst_12 {dimension_numbers = #tpu.dot_dimension_numbers<[1], [0], [0], [1], [0, 0, 1, 1], [], []>} : vector<16x672xbf16>, vector<672x256xbf16>, vector<16x256xf32> -> vector<16x256xf32>
    %c0_13 = arith.constant 0 : index
    %c0_14 = arith.constant 0 : index
    %10 = vector.load %arg3[%c0_13, %c0_14] : memref<1x256xf32, #tpu.memory_space<vmem>>, vector<1x256xf32>
    %11 = vector.broadcast %10 : vector<1x256xf32> to vector<16x256xf32>
    %12 = arith.addf %9, %11 : vector<16x256xf32>
    %cst_15 = arith.constant 0.000000e+00 : f32
    %13 = vector.broadcast %cst_15 : f32 to vector<16x256xf32>
    %14 = arith.maximumf %12, %13 : vector<16x256xf32>
    %15 = vector.extract_strided_slice %14 {offsets = [0, 0], sizes = [8, 256], strides = [1, 1]} : vector<16x256xf32> to vector<8x256xf32>
    %16 = vector.extract_strided_slice %14 {offsets = [8, 0], sizes = [8, 256], strides = [1, 1]} : vector<16x256xf32> to vector<8x256xf32>
    %c1_i32 = arith.constant 1 : i32
    %17 = tpu.dynamic_rotate %16 by %c1_i32 dim 0 : vector<8x256xf32>, i32 -> vector<8x256xf32>
    %18 = tpu.iota {dimensions = array<i32: 0>} : vector<8x256xi32>
    %c1_i32_16 = arith.constant 1 : i32
    %19 = vector.broadcast %c1_i32_16 : i32 to vector<8x256xi32>
    %20 = arith.cmpi sge, %18, %19 : vector<8x256xi32>
    %cst_17 = arith.constant 0.000000e+00 : f32
    %21 = vector.broadcast %cst_17 : f32 to vector<8x256xf32>
    %22 = arith.select %20, %17, %21 : vector<8x256xi1>, vector<8x256xf32>
    %23 = arith.maximumf %15, %16 : vector<8x256xf32>
    %24 = arith.maximumf %23, %22 : vector<8x256xf32>
    %25 = vector.extract_strided_slice %24 {offsets = [0, 0], sizes = [8, 128], strides = [1, 1]} : vector<8x256xf32> to vector<8x128xf32>
    %26 = vector.extract_strided_slice %24 {offsets = [0, 128], sizes = [8, 128], strides = [1, 1]} : vector<8x256xf32> to vector<8x128xf32>
    %c16_i32 = arith.constant 16 : i32
    %27 = tpu.dynamic_rotate %26 by %c16_i32 dim 1 : vector<8x128xf32>, i32 -> vector<8x128xf32>
    %28 = tpu.iota {dimensions = array<i32: 1>} : vector<8x128xi32>
    %c16_i32_18 = arith.constant 16 : i32
    %29 = vector.broadcast %c16_i32_18 : i32 to vector<8x128xi32>
    %30 = arith.cmpi sge, %28, %29 : vector<8x128xi32>
    %cst_19 = arith.constant 0.000000e+00 : f32
    %31 = vector.broadcast %cst_19 : f32 to vector<8x128xf32>
    %32 = arith.select %30, %27, %31 : vector<8x128xi1>, vector<8x128xf32>
    %33 = arith.maximumf %25, %26 : vector<8x128xf32>
    %34 = arith.maximumf %33, %32 : vector<8x128xf32>
    %c0_20 = arith.constant 0 : index
    %c0_21 = arith.constant 0 : index
    %c0_22 = arith.constant 0 : index
    %35 = vector.load %arg4[%c0_20, %c0_21, %c0_22] : memref<4x384x128xbf16, #tpu.memory_space<vmem>>, vector<1x384x128xbf16>
    %36 = vector.shape_cast %35 : vector<1x384x128xbf16> to vector<384x128xbf16>
    %c0_23 = arith.constant 0 : index
    %c0_24 = arith.constant 0 : index
    %c0_25 = arith.constant 0 : index
    %37 = vector.load %arg5[%c0_23, %c0_24, %c0_25] : memref<4x1x128xf32, #tpu.memory_space<vmem>>, vector<1x1x128xf32>
    %38 = vector.shape_cast %37 : vector<1x1x128xf32> to vector<1x128xf32>
    %39 = vector.extract_strided_slice %34 {offsets = [0, 0], sizes = [7, 128], strides = [1, 1]} : vector<8x128xf32> to vector<7x128xf32>
    %40 = arith.truncf %39 : vector<7x128xf32> to vector<7x128xbf16>
    %c1 = arith.constant 1 : index
    %c0_26 = arith.constant 0 : index
    %41 = vector.load %arg12[%c1, %c0_26] : memref<8x384xbf16, #tpu.memory_space<vmem>>, vector<7x128xbf16>
    tpu.vector_store %arg12[%c1, %c0_26], %40 {strides = array<i32>} : memref<8x384xbf16, #tpu.memory_space<vmem>>, vector<7x128xbf16>,
    %42 = arith.truncf %34 : vector<8x128xf32> to vector<8x128xbf16>
    %c0_27 = arith.constant 0 : index
    %c128 = arith.constant 128 : index
    %43 = vector.load %arg12[%c0_27, %c128] : memref<8x384xbf16, #tpu.memory_space<vmem>>, vector<8x128xbf16>
    tpu.vector_store %arg12[%c0_27, %c128], %42 {strides = array<i32>} : memref<8x384xbf16, #tpu.memory_space<vmem>>, vector<8x128xbf16>,
    %44 = vector.extract_strided_slice %34 {offsets = [1, 0], sizes = [7, 128], strides = [1, 1]} : vector<8x128xf32> to vector<7x128xf32>
    %45 = arith.truncf %44 : vector<7x128xf32> to vector<7x128xbf16>
    %c0_28 = arith.constant 0 : index
    %c256 = arith.constant 256 : index
    %46 = vector.load %arg12[%c0_28, %c256] : memref<8x384xbf16, #tpu.memory_space<vmem>>, vector<7x128xbf16>
    tpu.vector_store %arg12[%c0_28, %c256], %45 {strides = array<i32>} : memref<8x384xbf16, #tpu.memory_space<vmem>>, vector<7x128xbf16>,
    %c0_29 = arith.constant 0 : index
    %c0_30 = arith.constant 0 : index
    %47 = vector.load %arg12[%c0_29, %c0_30] : memref<8x384xbf16, #tpu.memory_space<vmem>>, vector<8x384xbf16>
    %cst_31 = arith.constant dense<0.000000e+00> : vector<8x128xf32>
    %48 = tpu.matmul %47, %36, %cst_31 {dimension_numbers = #tpu.dot_dimension_numbers<[1], [0], [0], [1], [0, 0, 1, 1], [], []>} : vector<8x384xbf16>, vector<384x128xbf16>, vector<8x128xf32> -> vector<8x128xf32>
    %49 = vector.broadcast %38 : vector<1x128xf32> to vector<8x128xf32>
    %50 = arith.addf %48, %49 : vector<8x128xf32>
    %cst_32 = arith.constant 0.000000e+00 : f32
    %51 = vector.broadcast %cst_32 : f32 to vector<8x128xf32>
    %52 = arith.maximumf %50, %51 : vector<8x128xf32>
    %c1_33 = arith.constant 1 : index
    %c0_34 = arith.constant 0 : index
    %c0_35 = arith.constant 0 : index
    %53 = vector.load %arg4[%c1_33, %c0_34, %c0_35] : memref<4x384x128xbf16, #tpu.memory_space<vmem>>, vector<1x384x128xbf16>
    %54 = vector.shape_cast %53 : vector<1x384x128xbf16> to vector<384x128xbf16>
    %c1_36 = arith.constant 1 : index
    %c0_37 = arith.constant 0 : index
    %c0_38 = arith.constant 0 : index
    %55 = vector.load %arg5[%c1_36, %c0_37, %c0_38] : memref<4x1x128xf32, #tpu.memory_space<vmem>>, vector<1x1x128xf32>
    %56 = vector.shape_cast %55 : vector<1x1x128xf32> to vector<1x128xf32>
    %57 = vector.extract_strided_slice %52 {offsets = [0, 0], sizes = [7, 128], strides = [1, 1]} : vector<8x128xf32> to vector<7x128xf32>
    %58 = arith.truncf %57 : vector<7x128xf32> to vector<7x128xbf16>
    %c1_39 = arith.constant 1 : index
    %c0_40 = arith.constant 0 : index
    %59 = vector.load %arg12[%c1_39, %c0_40] : memref<8x384xbf16, #tpu.memory_space<vmem>>, vector<7x128xbf16>
    tpu.vector_store %arg12[%c1_39, %c0_40], %58 {strides = array<i32>} : memref<8x384xbf16, #tpu.memory_space<vmem>>, vector<7x128xbf16>,
    %60 = arith.truncf %52 : vector<8x128xf32> to vector<8x128xbf16>
    %c0_41 = arith.constant 0 : index
    %c128_42 = arith.constant 128 : index
    %61 = vector.load %arg12[%c0_41, %c128_42] : memref<8x384xbf16, #tpu.memory_space<vmem>>, vector<8x128xbf16>
    tpu.vector_store %arg12[%c0_41, %c128_42], %60 {strides = array<i32>} : memref<8x384xbf16, #tpu.memory_space<vmem>>, vector<8x128xbf16>,
    %62 = vector.extract_strided_slice %52 {offsets = [1, 0], sizes = [7, 128], strides = [1, 1]} : vector<8x128xf32> to vector<7x128xf32>
    %63 = arith.truncf %62 : vector<7x128xf32> to vector<7x128xbf16>
    %c0_43 = arith.constant 0 : index
    %c256_44 = arith.constant 256 : index
    %64 = vector.load %arg12[%c0_43, %c256_44] : memref<8x384xbf16, #tpu.memory_space<vmem>>, vector<7x128xbf16>
    tpu.vector_store %arg12[%c0_43, %c256_44], %63 {strides = array<i32>} : memref<8x384xbf16, #tpu.memory_space<vmem>>, vector<7x128xbf16>,
    %c0_45 = arith.constant 0 : index
    %c0_46 = arith.constant 0 : index
    %65 = vector.load %arg12[%c0_45, %c0_46] : memref<8x384xbf16, #tpu.memory_space<vmem>>, vector<8x384xbf16>
    %cst_47 = arith.constant dense<0.000000e+00> : vector<8x128xf32>
    %66 = tpu.matmul %65, %54, %cst_47 {dimension_numbers = #tpu.dot_dimension_numbers<[1], [0], [0], [1], [0, 0, 1, 1], [], []>} : vector<8x384xbf16>, vector<384x128xbf16>, vector<8x128xf32> -> vector<8x128xf32>
    %67 = vector.broadcast %56 : vector<1x128xf32> to vector<8x128xf32>
    %68 = arith.addf %66, %67 : vector<8x128xf32>
    %69 = arith.addf %68, %34 : vector<8x128xf32>
    %cst_48 = arith.constant 0.000000e+00 : f32
    %70 = vector.broadcast %cst_48 : f32 to vector<8x128xf32>
    %71 = arith.maximumf %69, %70 : vector<8x128xf32>
    %c2 = arith.constant 2 : index
    %c0_49 = arith.constant 0 : index
    %c0_50 = arith.constant 0 : index
    %72 = vector.load %arg4[%c2, %c0_49, %c0_50] : memref<4x384x128xbf16, #tpu.memory_space<vmem>>, vector<1x384x128xbf16>
    %73 = vector.shape_cast %72 : vector<1x384x128xbf16> to vector<384x128xbf16>
    %c2_51 = arith.constant 2 : index
    %c0_52 = arith.constant 0 : index
    %c0_53 = arith.constant 0 : index
    %74 = vector.load %arg5[%c2_51, %c0_52, %c0_53] : memref<4x1x128xf32, #tpu.memory_space<vmem>>, vector<1x1x128xf32>
    %75 = vector.shape_cast %74 : vector<1x1x128xf32> to vector<1x128xf32>
    %76 = vector.extract_strided_slice %71 {offsets = [0, 0], sizes = [7, 128], strides = [1, 1]} : vector<8x128xf32> to vector<7x128xf32>
    %77 = arith.truncf %76 : vector<7x128xf32> to vector<7x128xbf16>
    %c1_54 = arith.constant 1 : index
    %c0_55 = arith.constant 0 : index
    %78 = vector.load %arg12[%c1_54, %c0_55] : memref<8x384xbf16, #tpu.memory_space<vmem>>, vector<7x128xbf16>
    tpu.vector_store %arg12[%c1_54, %c0_55], %77 {strides = array<i32>} : memref<8x384xbf16, #tpu.memory_space<vmem>>, vector<7x128xbf16>,
    %79 = arith.truncf %71 : vector<8x128xf32> to vector<8x128xbf16>
    %c0_56 = arith.constant 0 : index
    %c128_57 = arith.constant 128 : index
    %80 = vector.load %arg12[%c0_56, %c128_57] : memref<8x384xbf16, #tpu.memory_space<vmem>>, vector<8x128xbf16>
    tpu.vector_store %arg12[%c0_56, %c128_57], %79 {strides = array<i32>} : memref<8x384xbf16, #tpu.memory_space<vmem>>, vector<8x128xbf16>,
    %81 = vector.extract_strided_slice %71 {offsets = [1, 0], sizes = [7, 128], strides = [1, 1]} : vector<8x128xf32> to vector<7x128xf32>
    %82 = arith.truncf %81 : vector<7x128xf32> to vector<7x128xbf16>
    %c0_58 = arith.constant 0 : index
    %c256_59 = arith.constant 256 : index
    %83 = vector.load %arg12[%c0_58, %c256_59] : memref<8x384xbf16, #tpu.memory_space<vmem>>, vector<7x128xbf16>
    tpu.vector_store %arg12[%c0_58, %c256_59], %82 {strides = array<i32>} : memref<8x384xbf16, #tpu.memory_space<vmem>>, vector<7x128xbf16>,
    %c0_60 = arith.constant 0 : index
    %c0_61 = arith.constant 0 : index
    %84 = vector.load %arg12[%c0_60, %c0_61] : memref<8x384xbf16, #tpu.memory_space<vmem>>, vector<8x384xbf16>
    %cst_62 = arith.constant dense<0.000000e+00> : vector<8x128xf32>
    %85 = tpu.matmul %84, %73, %cst_62 {dimension_numbers = #tpu.dot_dimension_numbers<[1], [0], [0], [1], [0, 0, 1, 1], [], []>} : vector<8x384xbf16>, vector<384x128xbf16>, vector<8x128xf32> -> vector<8x128xf32>
    %86 = vector.broadcast %75 : vector<1x128xf32> to vector<8x128xf32>
    %87 = arith.addf %85, %86 : vector<8x128xf32>
    %cst_63 = arith.constant 0.000000e+00 : f32
    %88 = vector.broadcast %cst_63 : f32 to vector<8x128xf32>
    %89 = arith.maximumf %87, %88 : vector<8x128xf32>
    %c3 = arith.constant 3 : index
    %c0_64 = arith.constant 0 : index
    %c0_65 = arith.constant 0 : index
    %90 = vector.load %arg4[%c3, %c0_64, %c0_65] : memref<4x384x128xbf16, #tpu.memory_space<vmem>>, vector<1x384x128xbf16>
    %91 = vector.shape_cast %90 : vector<1x384x128xbf16> to vector<384x128xbf16>
    %c3_66 = arith.constant 3 : index
    %c0_67 = arith.constant 0 : index
    %c0_68 = arith.constant 0 : index
    %92 = vector.load %arg5[%c3_66, %c0_67, %c0_68] : memref<4x1x128xf32, #tpu.memory_space<vmem>>, vector<1x1x128xf32>
    %93 = vector.shape_cast %92 : vector<1x1x128xf32> to vector<1x128xf32>
    %94 = vector.extract_strided_slice %89 {offsets = [0, 0], sizes = [7, 128], strides = [1, 1]} : vector<8x128xf32> to vector<7x128xf32>
    %95 = arith.truncf %94 : vector<7x128xf32> to vector<7x128xbf16>
    %c1_69 = arith.constant 1 : index
    %c0_70 = arith.constant 0 : index
    %96 = vector.load %arg12[%c1_69, %c0_70] : memref<8x384xbf16, #tpu.memory_space<vmem>>, vector<7x128xbf16>
    tpu.vector_store %arg12[%c1_69, %c0_70], %95 {strides = array<i32>} : memref<8x384xbf16, #tpu.memory_space<vmem>>, vector<7x128xbf16>,
    %97 = arith.truncf %89 : vector<8x128xf32> to vector<8x128xbf16>
    %c0_71 = arith.constant 0 : index
    %c128_72 = arith.constant 128 : index
    %98 = vector.load %arg12[%c0_71, %c128_72] : memref<8x384xbf16, #tpu.memory_space<vmem>>, vector<8x128xbf16>
    tpu.vector_store %arg12[%c0_71, %c128_72], %97 {strides = array<i32>} : memref<8x384xbf16, #tpu.memory_space<vmem>>, vector<8x128xbf16>,
    %99 = vector.extract_strided_slice %89 {offsets = [1, 0], sizes = [7, 128], strides = [1, 1]} : vector<8x128xf32> to vector<7x128xf32>
    %100 = arith.truncf %99 : vector<7x128xf32> to vector<7x128xbf16>
    %c0_73 = arith.constant 0 : index
    %c256_74 = arith.constant 256 : index
    %101 = vector.load %arg12[%c0_73, %c256_74] : memref<8x384xbf16, #tpu.memory_space<vmem>>, vector<7x128xbf16>
    tpu.vector_store %arg12[%c0_73, %c256_74], %100 {strides = array<i32>} : memref<8x384xbf16, #tpu.memory_space<vmem>>, vector<7x128xbf16>,
    %c0_75 = arith.constant 0 : index
    %c0_76 = arith.constant 0 : index
    %102 = vector.load %arg12[%c0_75, %c0_76] : memref<8x384xbf16, #tpu.memory_space<vmem>>, vector<8x384xbf16>
    %cst_77 = arith.constant dense<0.000000e+00> : vector<8x128xf32>
    %103 = tpu.matmul %102, %91, %cst_77 {dimension_numbers = #tpu.dot_dimension_numbers<[1], [0], [0], [1], [0, 0, 1, 1], [], []>} : vector<8x384xbf16>, vector<384x128xbf16>, vector<8x128xf32> -> vector<8x128xf32>
    %104 = vector.broadcast %93 : vector<1x128xf32> to vector<8x128xf32>
    %105 = arith.addf %103, %104 : vector<8x128xf32>
    %106 = arith.addf %105, %71 : vector<8x128xf32>
    %cst_78 = arith.constant 0.000000e+00 : f32
    %107 = vector.broadcast %cst_78 : f32 to vector<8x128xf32>
    %108 = arith.maximumf %106, %107 : vector<8x128xf32>
    %109 = vector.extract_strided_slice %108 {offsets = [1, 0], sizes = [1, 128], strides = [1, 1]} : vector<8x128xf32> to vector<1x128xf32>
    %110 = arith.truncf %109 : vector<1x128xf32> to vector<1x128xbf16>
    %c1_79 = arith.constant 1 : index
    %c0_80 = arith.constant 0 : index
    %111 = vector.load %arg13[%c1_79, %c0_80] : memref<4x384xbf16, #tpu.memory_space<vmem>>, vector<1x128xbf16>
    tpu.vector_store %arg13[%c1_79, %c0_80], %110 {strides = array<i32>} : memref<4x384xbf16, #tpu.memory_space<vmem>>, vector<1x128xbf16>,
    %112 = vector.extract_strided_slice %108 {offsets = [3, 0], sizes = [1, 128], strides = [1, 1]} : vector<8x128xf32> to vector<1x128xf32>
    %113 = arith.truncf %112 : vector<1x128xf32> to vector<1x128xbf16>
    %c2_81 = arith.constant 2 : index
    %c0_82 = arith.constant 0 : index
    %114 = vector.load %arg13[%c2_81, %c0_82] : memref<4x384xbf16, #tpu.memory_space<vmem>>, vector<1x128xbf16>
    tpu.vector_store %arg13[%c2_81, %c0_82], %113 {strides = array<i32>} : memref<4x384xbf16, #tpu.memory_space<vmem>>, vector<1x128xbf16>,
    %115 = vector.extract_strided_slice %108 {offsets = [5, 0], sizes = [1, 128], strides = [1, 1]} : vector<8x128xf32> to vector<1x128xf32>
    %116 = arith.truncf %115 : vector<1x128xf32> to vector<1x128xbf16>
    %c3_83 = arith.constant 3 : index
    %c0_84 = arith.constant 0 : index
    %117 = vector.load %arg13[%c3_83, %c0_84] : memref<4x384xbf16, #tpu.memory_space<vmem>>, vector<1x128xbf16>
    tpu.vector_store %arg13[%c3_83, %c0_84], %116 {strides = array<i32>} : memref<4x384xbf16, #tpu.memory_space<vmem>>, vector<1x128xbf16>,
    %118 = vector.extract_strided_slice %108 {offsets = [0, 0], sizes = [1, 128], strides = [1, 1]} : vector<8x128xf32> to vector<1x128xf32>
    %119 = arith.truncf %118 : vector<1x128xf32> to vector<1x128xbf16>
    %c0_85 = arith.constant 0 : index
    %c128_86 = arith.constant 128 : index
    %120 = vector.load %arg13[%c0_85, %c128_86] : memref<4x384xbf16, #tpu.memory_space<vmem>>, vector<1x128xbf16>
    tpu.vector_store %arg13[%c0_85, %c128_86], %119 {strides = array<i32>} : memref<4x384xbf16, #tpu.memory_space<vmem>>, vector<1x128xbf16>,
    %121 = vector.extract_strided_slice %108 {offsets = [2, 0], sizes = [1, 128], strides = [1, 1]} : vector<8x128xf32> to vector<1x128xf32>
    %122 = arith.truncf %121 : vector<1x128xf32> to vector<1x128xbf16>
    %c1_87 = arith.constant 1 : index
    %c128_88 = arith.constant 128 : index
    %123 = vector.load %arg13[%c1_87, %c128_88] : memref<4x384xbf16, #tpu.memory_space<vmem>>, vector<1x128xbf16>
    tpu.vector_store %arg13[%c1_87, %c128_88], %122 {strides = array<i32>} : memref<4x384xbf16, #tpu.memory_space<vmem>>, vector<1x128xbf16>,
    %124 = vector.extract_strided_slice %108 {offsets = [4, 0], sizes = [1, 128], strides = [1, 1]} : vector<8x128xf32> to vector<1x128xf32>
    %125 = arith.truncf %124 : vector<1x128xf32> to vector<1x128xbf16>
    %c2_89 = arith.constant 2 : index
    %c128_90 = arith.constant 128 : index
    %126 = vector.load %arg13[%c2_89, %c128_90] : memref<4x384xbf16, #tpu.memory_space<vmem>>, vector<1x128xbf16>
    tpu.vector_store %arg13[%c2_89, %c128_90], %125 {strides = array<i32>} : memref<4x384xbf16, #tpu.memory_space<vmem>>, vector<1x128xbf16>,
    %127 = vector.extract_strided_slice %108 {offsets = [6, 0], sizes = [1, 128], strides = [1, 1]} : vector<8x128xf32> to vector<1x128xf32>
    %128 = arith.truncf %127 : vector<1x128xf32> to vector<1x128xbf16>
    %c3_91 = arith.constant 3 : index
    %c128_92 = arith.constant 128 : index
    %129 = vector.load %arg13[%c3_91, %c128_92] : memref<4x384xbf16, #tpu.memory_space<vmem>>, vector<1x128xbf16>
    tpu.vector_store %arg13[%c3_91, %c128_92], %128 {strides = array<i32>} : memref<4x384xbf16, #tpu.memory_space<vmem>>, vector<1x128xbf16>,
    %130 = vector.extract_strided_slice %108 {offsets = [1, 0], sizes = [1, 128], strides = [1, 1]} : vector<8x128xf32> to vector<1x128xf32>
    %131 = arith.truncf %130 : vector<1x128xf32> to vector<1x128xbf16>
    %c0_93 = arith.constant 0 : index
    %c256_94 = arith.constant 256 : index
    %132 = vector.load %arg13[%c0_93, %c256_94] : memref<4x384xbf16, #tpu.memory_space<vmem>>, vector<1x128xbf16>
    tpu.vector_store %arg13[%c0_93, %c256_94], %131 {strides = array<i32>} : memref<4x384xbf16, #tpu.memory_space<vmem>>, vector<1x128xbf16>,
    %133 = vector.extract_strided_slice %108 {offsets = [3, 0], sizes = [1, 128], strides = [1, 1]} : vector<8x128xf32> to vector<1x128xf32>
    %134 = arith.truncf %133 : vector<1x128xf32> to vector<1x128xbf16>
    %c1_95 = arith.constant 1 : index
    %c256_96 = arith.constant 256 : index
    %135 = vector.load %arg13[%c1_95, %c256_96] : memref<4x384xbf16, #tpu.memory_space<vmem>>, vector<1x128xbf16>
    tpu.vector_store %arg13[%c1_95, %c256_96], %134 {strides = array<i32>} : memref<4x384xbf16, #tpu.memory_space<vmem>>, vector<1x128xbf16>,
    %136 = vector.extract_strided_slice %108 {offsets = [5, 0], sizes = [1, 128], strides = [1, 1]} : vector<8x128xf32> to vector<1x128xf32>
    %137 = arith.truncf %136 : vector<1x128xf32> to vector<1x128xbf16>
    %c2_97 = arith.constant 2 : index
    %c256_98 = arith.constant 256 : index
    %138 = vector.load %arg13[%c2_97, %c256_98] : memref<4x384xbf16, #tpu.memory_space<vmem>>, vector<1x128xbf16>
    tpu.vector_store %arg13[%c2_97, %c256_98], %137 {strides = array<i32>} : memref<4x384xbf16, #tpu.memory_space<vmem>>, vector<1x128xbf16>,
    %139 = vector.extract_strided_slice %108 {offsets = [7, 0], sizes = [1, 128], strides = [1, 1]} : vector<8x128xf32> to vector<1x128xf32>
    %140 = arith.truncf %139 : vector<1x128xf32> to vector<1x128xbf16>
    %c3_99 = arith.constant 3 : index
    %c256_100 = arith.constant 256 : index
    %141 = vector.load %arg13[%c3_99, %c256_100] : memref<4x384xbf16, #tpu.memory_space<vmem>>, vector<1x128xbf16>
    tpu.vector_store %arg13[%c3_99, %c256_100], %140 {strides = array<i32>} : memref<4x384xbf16, #tpu.memory_space<vmem>>, vector<1x128xbf16>,
    %c0_101 = arith.constant 0 : index
    %c0_102 = arith.constant 0 : index
    %142 = vector.load %arg13[%c0_101, %c0_102] : memref<4x384xbf16, #tpu.memory_space<vmem>>, vector<4x384xbf16>
    %c0_103 = arith.constant 0 : index
    %c0_104 = arith.constant 0 : index
    %143 = vector.load %arg6[%c0_103, %c0_104] : memref<384x256xbf16, #tpu.memory_space<vmem>>, vector<384x256xbf16>
    %cst_105 = arith.constant dense<0.000000e+00> : vector<4x256xf32>
    %144 = tpu.matmul %142, %143, %cst_105 {dimension_numbers = #tpu.dot_dimension_numbers<[1], [0], [0], [1], [0, 0, 1, 1], [], []>} : vector<4x384xbf16>, vector<384x256xbf16>, vector<4x256xf32> -> vector<4x256xf32>
    %145 = vector.extract_strided_slice %144 {offsets = [0, 0], sizes = [4, 128], strides = [1, 1]} : vector<4x256xf32> to vector<4x128xf32>
    %c0_106 = arith.constant 0 : index
    %c0_107 = arith.constant 0 : index
    %146 = vector.load %arg7[%c0_106, %c0_107] : memref<1x128xf32, #tpu.memory_space<vmem>>, vector<1x128xf32>
    %147 = vector.broadcast %146 : vector<1x128xf32> to vector<4x128xf32>
    %148 = arith.addf %145, %147 : vector<4x128xf32>
    %cst_108 = arith.constant 0.000000e+00 : f32
    %149 = vector.broadcast %cst_108 : f32 to vector<4x128xf32>
    %150 = arith.maximumf %148, %149 : vector<4x128xf32>
    %151 = vector.extract_strided_slice %144 {offsets = [0, 128], sizes = [4, 128], strides = [1, 1]} : vector<4x256xf32> to vector<4x128xf32>
    %c0_109 = arith.constant 0 : index
    %c0_110 = arith.constant 0 : index
    %152 = vector.load %arg8[%c0_109, %c0_110] : memref<1x128xf32, #tpu.memory_space<vmem>>, vector<1x128xf32>
    %153 = vector.broadcast %152 : vector<1x128xf32> to vector<4x128xf32>
    %154 = arith.addf %151, %153 : vector<4x128xf32>
    %c0_111 = arith.constant 0 : index
    %c0_112 = arith.constant 0 : index
    %c0_113 = arith.constant 0 : index
    %155 = vector.load %arg9[%c0_111, %c0_112, %c0_113] : memref<3x384x128xbf16, #tpu.memory_space<vmem>>, vector<1x384x128xbf16>
    %156 = vector.shape_cast %155 : vector<1x384x128xbf16> to vector<384x128xbf16>
    %c0_114 = arith.constant 0 : index
    %c0_115 = arith.constant 0 : index
    %c0_116 = arith.constant 0 : index
    %157 = vector.load %arg10[%c0_114, %c0_115, %c0_116] : memref<3x1x128xf32, #tpu.memory_space<vmem>>, vector<1x1x128xf32>
    %158 = vector.shape_cast %157 : vector<1x1x128xf32> to vector<1x128xf32>
    %159 = vector.extract_strided_slice %150 {offsets = [0, 0], sizes = [3, 128], strides = [1, 1]} : vector<4x128xf32> to vector<3x128xf32>
    %160 = arith.truncf %159 : vector<3x128xf32> to vector<3x128xbf16>
    %c1_117 = arith.constant 1 : index
    %c0_118 = arith.constant 0 : index
    %161 = vector.load %arg14[%c1_117, %c0_118] : memref<4x384xbf16, #tpu.memory_space<vmem>>, vector<3x128xbf16>
    tpu.vector_store %arg14[%c1_117, %c0_118], %160 {strides = array<i32>} : memref<4x384xbf16, #tpu.memory_space<vmem>>, vector<3x128xbf16>,
    %162 = arith.truncf %150 : vector<4x128xf32> to vector<4x128xbf16>
    %c0_119 = arith.constant 0 : index
    %c128_120 = arith.constant 128 : index
    %163 = vector.load %arg14[%c0_119, %c128_120] : memref<4x384xbf16, #tpu.memory_space<vmem>>, vector<4x128xbf16>
    tpu.vector_store %arg14[%c0_119, %c128_120], %162 {strides = array<i32>} : memref<4x384xbf16, #tpu.memory_space<vmem>>, vector<4x128xbf16>,
    %164 = vector.extract_strided_slice %150 {offsets = [1, 0], sizes = [3, 128], strides = [1, 1]} : vector<4x128xf32> to vector<3x128xf32>
    %165 = arith.truncf %164 : vector<3x128xf32> to vector<3x128xbf16>
    %c0_121 = arith.constant 0 : index
    %c256_122 = arith.constant 256 : index
    %166 = vector.load %arg14[%c0_121, %c256_122] : memref<4x384xbf16, #tpu.memory_space<vmem>>, vector<3x128xbf16>
    tpu.vector_store %arg14[%c0_121, %c256_122], %165 {strides = array<i32>} : memref<4x384xbf16, #tpu.memory_space<vmem>>, vector<3x128xbf16>,
    %c0_123 = arith.constant 0 : index
    %c0_124 = arith.constant 0 : index
    %167 = vector.load %arg14[%c0_123, %c0_124] : memref<4x384xbf16, #tpu.memory_space<vmem>>, vector<4x384xbf16>
    %cst_125 = arith.constant dense<0.000000e+00> : vector<4x128xf32>
    %168 = tpu.matmul %167, %156, %cst_125 {dimension_numbers = #tpu.dot_dimension_numbers<[1], [0], [0], [1], [0, 0, 1, 1], [], []>} : vector<4x384xbf16>, vector<384x128xbf16>, vector<4x128xf32> -> vector<4x128xf32>
    %169 = vector.broadcast %158 : vector<1x128xf32> to vector<4x128xf32>
    %170 = arith.addf %168, %169 : vector<4x128xf32>
    %171 = arith.addf %170, %154 : vector<4x128xf32>
    %cst_126 = arith.constant 0.000000e+00 : f32
    %172 = vector.broadcast %cst_126 : f32 to vector<4x128xf32>
    %173 = arith.maximumf %171, %172 : vector<4x128xf32>
    %c1_127 = arith.constant 1 : index
    %c0_128 = arith.constant 0 : index
    %c0_129 = arith.constant 0 : index
    %174 = vector.load %arg9[%c1_127, %c0_128, %c0_129] : memref<3x384x128xbf16, #tpu.memory_space<vmem>>, vector<1x384x128xbf16>
    %175 = vector.shape_cast %174 : vector<1x384x128xbf16> to vector<384x128xbf16>
    %c1_130 = arith.constant 1 : index
    %c0_131 = arith.constant 0 : index
    %c0_132 = arith.constant 0 : index
    %176 = vector.load %arg10[%c1_130, %c0_131, %c0_132] : memref<3x1x128xf32, #tpu.memory_space<vmem>>, vector<1x1x128xf32>
    %177 = vector.shape_cast %176 : vector<1x1x128xf32> to vector<1x128xf32>
    %178 = vector.extract_strided_slice %173 {offsets = [0, 0], sizes = [3, 128], strides = [1, 1]} : vector<4x128xf32> to vector<3x128xf32>
    %179 = arith.truncf %178 : vector<3x128xf32> to vector<3x128xbf16>
    %c1_133 = arith.constant 1 : index
    %c0_134 = arith.constant 0 : index
    %180 = vector.load %arg14[%c1_133, %c0_134] : memref<4x384xbf16, #tpu.memory_space<vmem>>, vector<3x128xbf16>
    tpu.vector_store %arg14[%c1_133, %c0_134], %179 {strides = array<i32>} : memref<4x384xbf16, #tpu.memory_space<vmem>>, vector<3x128xbf16>,
    %181 = arith.truncf %173 : vector<4x128xf32> to vector<4x128xbf16>
    %c0_135 = arith.constant 0 : index
    %c128_136 = arith.constant 128 : index
    %182 = vector.load %arg14[%c0_135, %c128_136] : memref<4x384xbf16, #tpu.memory_space<vmem>>, vector<4x128xbf16>
    tpu.vector_store %arg14[%c0_135, %c128_136], %181 {strides = array<i32>} : memref<4x384xbf16, #tpu.memory_space<vmem>>, vector<4x128xbf16>,
    %183 = vector.extract_strided_slice %173 {offsets = [1, 0], sizes = [3, 128], strides = [1, 1]} : vector<4x128xf32> to vector<3x128xf32>
    %184 = arith.truncf %183 : vector<3x128xf32> to vector<3x128xbf16>
    %c0_137 = arith.constant 0 : index
    %c256_138 = arith.constant 256 : index
    %185 = vector.load %arg14[%c0_137, %c256_138] : memref<4x384xbf16, #tpu.memory_space<vmem>>, vector<3x128xbf16>
    tpu.vector_store %arg14[%c0_137, %c256_138], %184 {strides = array<i32>} : memref<4x384xbf16, #tpu.memory_space<vmem>>, vector<3x128xbf16>,
    %c0_139 = arith.constant 0 : index
    %c0_140 = arith.constant 0 : index
    %186 = vector.load %arg14[%c0_139, %c0_140] : memref<4x384xbf16, #tpu.memory_space<vmem>>, vector<4x384xbf16>
    %cst_141 = arith.constant dense<0.000000e+00> : vector<4x128xf32>
    %187 = tpu.matmul %186, %175, %cst_141 {dimension_numbers = #tpu.dot_dimension_numbers<[1], [0], [0], [1], [0, 0, 1, 1], [], []>} : vector<4x384xbf16>, vector<384x128xbf16>, vector<4x128xf32> -> vector<4x128xf32>
    %188 = vector.broadcast %177 : vector<1x128xf32> to vector<4x128xf32>
    %189 = arith.addf %187, %188 : vector<4x128xf32>
    %cst_142 = arith.constant 0.000000e+00 : f32
    %190 = vector.broadcast %cst_142 : f32 to vector<4x128xf32>
    %191 = arith.maximumf %189, %190 : vector<4x128xf32>
    %c2_143 = arith.constant 2 : index
    %c0_144 = arith.constant 0 : index
    %c0_145 = arith.constant 0 : index
    %192 = vector.load %arg9[%c2_143, %c0_144, %c0_145] : memref<3x384x128xbf16, #tpu.memory_space<vmem>>, vector<1x384x128xbf16>
    %193 = vector.shape_cast %192 : vector<1x384x128xbf16> to vector<384x128xbf16>
    %c2_146 = arith.constant 2 : index
    %c0_147 = arith.constant 0 : index
    %c0_148 = arith.constant 0 : index
    %194 = vector.load %arg10[%c2_146, %c0_147, %c0_148] : memref<3x1x128xf32, #tpu.memory_space<vmem>>, vector<1x1x128xf32>
    %195 = vector.shape_cast %194 : vector<1x1x128xf32> to vector<1x128xf32>
    %196 = vector.extract_strided_slice %191 {offsets = [0, 0], sizes = [3, 128], strides = [1, 1]} : vector<4x128xf32> to vector<3x128xf32>
    %197 = arith.truncf %196 : vector<3x128xf32> to vector<3x128xbf16>
    %c1_149 = arith.constant 1 : index
    %c0_150 = arith.constant 0 : index
    %198 = vector.load %arg14[%c1_149, %c0_150] : memref<4x384xbf16, #tpu.memory_space<vmem>>, vector<3x128xbf16>
    tpu.vector_store %arg14[%c1_149, %c0_150], %197 {strides = array<i32>} : memref<4x384xbf16, #tpu.memory_space<vmem>>, vector<3x128xbf16>,
    %199 = arith.truncf %191 : vector<4x128xf32> to vector<4x128xbf16>
    %c0_151 = arith.constant 0 : index
    %c128_152 = arith.constant 128 : index
    %200 = vector.load %arg14[%c0_151, %c128_152] : memref<4x384xbf16, #tpu.memory_space<vmem>>, vector<4x128xbf16>
    tpu.vector_store %arg14[%c0_151, %c128_152], %199 {strides = array<i32>} : memref<4x384xbf16, #tpu.memory_space<vmem>>, vector<4x128xbf16>,
    %201 = vector.extract_strided_slice %191 {offsets = [1, 0], sizes = [3, 128], strides = [1, 1]} : vector<4x128xf32> to vector<3x128xf32>
    %202 = arith.truncf %201 : vector<3x128xf32> to vector<3x128xbf16>
    %c0_153 = arith.constant 0 : index
    %c256_154 = arith.constant 256 : index
    %203 = vector.load %arg14[%c0_153, %c256_154] : memref<4x384xbf16, #tpu.memory_space<vmem>>, vector<3x128xbf16>
    tpu.vector_store %arg14[%c0_153, %c256_154], %202 {strides = array<i32>} : memref<4x384xbf16, #tpu.memory_space<vmem>>, vector<3x128xbf16>,
    %c0_155 = arith.constant 0 : index
    %c0_156 = arith.constant 0 : index
    %204 = vector.load %arg14[%c0_155, %c0_156] : memref<4x384xbf16, #tpu.memory_space<vmem>>, vector<4x384xbf16>
    %cst_157 = arith.constant dense<0.000000e+00> : vector<4x128xf32>
    %205 = tpu.matmul %204, %193, %cst_157 {dimension_numbers = #tpu.dot_dimension_numbers<[1], [0], [0], [1], [0, 0, 1, 1], [], []>} : vector<4x384xbf16>, vector<384x128xbf16>, vector<4x128xf32> -> vector<4x128xf32>
    %206 = vector.broadcast %195 : vector<1x128xf32> to vector<4x128xf32>
    %207 = arith.addf %205, %206 : vector<4x128xf32>
    %208 = arith.addf %207, %173 : vector<4x128xf32>
    %cst_158 = arith.constant 0.000000e+00 : f32
    %209 = vector.broadcast %cst_158 : f32 to vector<4x128xf32>
    %210 = arith.maximumf %208, %209 : vector<4x128xf32>
    %c0_159 = arith.constant 0 : index
    %c0_160 = arith.constant 0 : index
    %c0_161 = arith.constant 0 : index
    %211 = vector.load %arg11[%c0_159, %c0_160, %c0_161] : memref<1x4x128xf32, #tpu.memory_space<vmem>>, vector<1x4x128xf32>
    %212 = vector.shape_cast %211 : vector<1x4x128xf32> to vector<4x128xf32>
    %213 = vector.shape_cast %210 : vector<4x128xf32> to vector<1x4x128xf32>
    tpu.vector_store %arg11[%c0_159, %c0_160, %c0_161], %213 {strides = array<i32>} : memref<1x4x128xf32, #tpu.memory_space<vmem>>, vector<1x4x128xf32>,
    return
  }
  func.func @transform_0(%arg0: i32) -> (i32, i32, i32) {
    %c0_i32 = arith.constant 0 : i32
    %c0_i32_0 = arith.constant 0 : i32
    %c0_i32_1 = arith.constant 0 : i32
    return %arg0, %c0_i32, %c0_i32_0 : i32, i32, i32
  }
  func.func @transform_1(%arg0: i32) -> (i32, i32) {
    %c0_i32 = arith.constant 0 : i32
    %c0_i32_0 = arith.constant 0 : i32
    %c0_i32_1 = arith.constant 0 : i32
    return %c0_i32, %c0_i32_0 : i32, i32
  }
  func.func @transform_2(%arg0: i32) -> (i32, i32) {
    %c0_i32 = arith.constant 0 : i32
    %c0_i32_0 = arith.constant 0 : i32
    %c0_i32_1 = arith.constant 0 : i32
    return %c0_i32, %c0_i32_0 : i32, i32
  }
  func.func @transform_3(%arg0: i32) -> (i32, i32, i32) {
    %c0_i32 = arith.constant 0 : i32
    %c0_i32_0 = arith.constant 0 : i32
    %c0_i32_1 = arith.constant 0 : i32
    %c0_i32_2 = arith.constant 0 : i32
    return %c0_i32, %c0_i32_0, %c0_i32_1 : i32, i32, i32
  }
  func.func @transform_4(%arg0: i32) -> (i32, i32, i32) {
    %c0_i32 = arith.constant 0 : i32
    %c0_i32_0 = arith.constant 0 : i32
    %c0_i32_1 = arith.constant 0 : i32
    %c0_i32_2 = arith.constant 0 : i32
    return %c0_i32, %c0_i32_0, %c0_i32_1 : i32, i32, i32
  }
  func.func @transform_5(%arg0: i32) -> (i32, i32) {
    %c0_i32 = arith.constant 0 : i32
    %c0_i32_0 = arith.constant 0 : i32
    %c0_i32_1 = arith.constant 0 : i32
    return %c0_i32, %c0_i32_0 : i32, i32
  }
  func.func @transform_6(%arg0: i32) -> (i32, i32) {
    %c0_i32 = arith.constant 0 : i32
    %c0_i32_0 = arith.constant 0 : i32
    %c0_i32_1 = arith.constant 0 : i32
    return %c0_i32, %c0_i32_0 : i32, i32
  }
  func.func @transform_7(%arg0: i32) -> (i32, i32) {
    %c0_i32 = arith.constant 0 : i32
    %c0_i32_0 = arith.constant 0 : i32
    %c0_i32_1 = arith.constant 0 : i32
    return %c0_i32, %c0_i32_0 : i32, i32
  }
  func.func @transform_8(%arg0: i32) -> (i32, i32, i32) {
    %c0_i32 = arith.constant 0 : i32
    %c0_i32_0 = arith.constant 0 : i32
    %c0_i32_1 = arith.constant 0 : i32
    %c0_i32_2 = arith.constant 0 : i32
    return %c0_i32, %c0_i32_0, %c0_i32_1 : i32, i32, i32
  }
  func.func @transform_9(%arg0: i32) -> (i32, i32, i32) {
    %c0_i32 = arith.constant 0 : i32
    %c0_i32_0 = arith.constant 0 : i32
    %c0_i32_1 = arith.constant 0 : i32
    %c0_i32_2 = arith.constant 0 : i32
    return %c0_i32, %c0_i32_0, %c0_i32_1 : i32, i32, i32
  }
  func.func @transform_10(%arg0: i32) -> (i32, i32, i32) {
    %c0_i32 = arith.constant 0 : i32
    %c0_i32_0 = arith.constant 0 : i32
    %c0_i32_1 = arith.constant 0 : i32
    return %arg0, %c0_i32, %c0_i32_0 : i32, i32, i32
  }
}

</mosaic_0001>

<llo_original>
// kernel: resnet_forward.1
$region0: #{resnet_forward.1}
  #allocation0 [shape = 'u32[]', space=smem, size = 0x4, offset = 0x4, fixed_abs, tag = 'smem constant byte address 0x4 - core index']
  #allocation1 [shape = 'u32[144,128]{1,0:T(1,128)}', space=vmem, size = 0x12000, scoped, tag = 'internal scratch']
  #allocation2 [shape = 'bf16[8,384]{1,0:T(8,128)(2,1)}', space=vmem, size = 0x1800, scoped, tag = 'scratch operand']
  #allocation3 [shape = 'bf16[4,384]{1,0:T(4,128)(2,1)}', space=vmem, size = 0xc00, scoped, tag = 'scratch operand']
  #allocation4 [shape = 'bf16[4,384]{1,0:T(4,128)(2,1)}', space=vmem, size = 0xc00, scoped, tag = 'scratch operand']
  %s0 = inlined_call_operand.vmem [shape: bf16[2,16,672], index: 0, kind: input, shape index: {}]
  %s1 = inlined_call_operand.vmem [shape: bf16[672,256], index: 1, kind: input, shape index: {}]
  %s2 = inlined_call_operand.vmem [shape: f32[1,256], index: 2, kind: input, shape index: {}]
  %s3 = inlined_call_operand.vmem [shape: bf16[4,384,128], index: 3, kind: input, shape index: {}]
  %s4 = inlined_call_operand.vmem [shape: f32[4,1,128], index: 4, kind: input, shape index: {}]
  %s5 = inlined_call_operand.vmem [shape: bf16[384,256], index: 5, kind: input, shape index: {}]
  %s6 = inlined_call_operand.vmem [shape: f32[1,128], index: 6, kind: input, shape index: {}]
  %s7 = inlined_call_operand.vmem [shape: f32[1,128], index: 7, kind: input, shape index: {}]
  %s8 = inlined_call_operand.vmem [shape: bf16[3,384,128], index: 8, kind: input, shape index: {}]
  %s9 = inlined_call_operand.vmem [shape: f32[3,1,128], index: 9, kind: input, shape index: {}]
  %s10 = inlined_call_operand.vmem [shape: f32[2,4,128], index: 10, kind: output, shape index: {}]
  %s11 = sld [smem:[#allocation0]]
  $region73: #{resnet_forward.1} parent=0
    _
  %s13 = ssub.s32 1, %s11
  %s14 = scalar_select 0, %s13, %s11
  loop: start=0, step=1, limit=4
  $region2: #{resnet_forward.1} parent=0 // loop_pre_header
    _
  $region3: #{resnet_forward.1} parent=0 // loop_header
    %s16 = sphi 0, %s20
    %p17 = scmp.ge.s32.totalorder %s16, 4
    %s26 = sphi 0, %s28
    %s29 = sphi 0, %s26
    %s30 = sphi 0, %s29
    %s46 = sphi 0, %s30
    %s50 = sphi 0, %s50
    %s52 = sphi 0, %s50
    %s53 = sphi 0, %s52
    %s67 = sphi 0, %s53
    %s71 = sphi 0, %s71
    %s73 = sphi 0, %s71
    %s74 = sphi 0, %s73
    %s88 = sphi 0, %s74
    %s92 = sphi 0, %s92
    %s94 = sphi 0, %s92
    %s95 = sphi 0, %s94
    %s109 = sphi 0, %s95
    %s113 = sphi 0, %s113
    %s115 = sphi 0, %s113
    %s116 = sphi 0, %s115
    %s130 = sphi 0, %s116
    %s134 = sphi 0, %s134
    %s136 = sphi 0, %s134
    %s137 = sphi 0, %s136
    %s151 = sphi 0, %s137
    %s155 = sphi 0, %s155
    %s157 = sphi 0, %s155
    %s158 = sphi 0, %s157
    %s172 = sphi 0, %s158
    %s176 = sphi 0, %s176
    %s178 = sphi 0, %s176
    %s179 = sphi 0, %s178
    %s193 = sphi 0, %s179
    %s197 = sphi 0, %s197
    %s199 = sphi 0, %s197
    %s200 = sphi 0, %s199
    %s214 = sphi 0, %s200
    %s218 = sphi 0, %s218
    %s220 = sphi 0, %s218
    %s221 = sphi 0, %s220
    %s235 = sphi 0, %s221
    %s241 = sphi 0, %s243
    %s244 = sphi 0, %s241
    %s245 = sphi 0, %s244
    %s261 = sphi 0, %s245
  $region4: #{resnet_forward.1} parent=0 // loop_header_branch
    %19 = sbr.rel (%p17) target = $region8
  $region5: #{resnet_forward.1} parent=0 // loop_body
    %s21 = ssub.s32 %s16, 1
    %s22 = ssub.s32 %s16, 2
    %s23 = sadd.s32 %s16, 1
    %s24 = ssub.s32 %s16, %s23
    %p25 = scmp.eq.s32.totalorder %s24, 0
    %s27 = sadd.s32 %s26, 1
    %s28 = scalar_select %p25, %s26, %s27
    %p31 = pneg %p25
    %p32 = scmp.eq.s32.totalorder %s16, 1
    %p33 = por %p31, %p32
    %p34 = scmp.ne.s32.totalorder %s26, %s29
    %p35 = scmp.eq.s32.totalorder %s16, 0
    %p36 = por %p34, %p35
    %p37 = scmp.ne.s32.totalorder %s26, %s29
    %p38 = scmp.eq.s32.totalorder %s21, 1
    %p39 = por %p37, %p38
    %p40 = scmp.ne.s32.totalorder %s29, %s30
    %p41 = scmp.eq.s32.totalorder %s21, 0
    %p42 = por %p40, %p41
    %p43 = scmp.ne.s32.totalorder %s29, %s30
    %p44 = scmp.eq.s32.totalorder %s22, 1
    %p45 = por %p43, %p44
    %p47 = scmp.ne.s32.totalorder %s30, %s46
    %p48 = scmp.eq.s32.totalorder %s22, 0
    %p49 = por %p47, %p48
    %s51 = sadd.s32 %s50, 1
    %p54 = scmp.eq.s32.totalorder %s16, 1
    %p55 = scmp.ne.s32.totalorder %s50, %s52
    %p56 = scmp.eq.s32.totalorder %s16, 0
    %p57 = por %p55, %p56
    %p58 = scmp.ne.s32.totalorder %s50, %s52
    %p59 = scmp.eq.s32.totalorder %s21, 1
    %p60 = por %p58, %p59
    %p61 = scmp.ne.s32.totalorder %s52, %s53
    %p62 = scmp.eq.s32.totalorder %s21, 0
    %p63 = por %p61, %p62
    %p64 = scmp.ne.s32.totalorder %s52, %s53
    %p65 = scmp.eq.s32.totalorder %s22, 1
    %p66 = por %p64, %p65
    %p68 = scmp.ne.s32.totalorder %s53, %s67
    %p69 = scmp.eq.s32.totalorder %s22, 0
    %p70 = por %p68, %p69
    %s72 = sadd.s32 %s71, 1
    %p75 = scmp.eq.s32.totalorder %s16, 1
    %p76 = scmp.ne.s32.totalorder %s71, %s73
    %p77 = scmp.eq.s32.totalorder %s16, 0
    %p78 = por %p76, %p77
    %p79 = scmp.ne.s32.totalorder %s71, %s73
    %p80 = scmp.eq.s32.totalorder %s21, 1
    %p81 = por %p79, %p80
    %p82 = scmp.ne.s32.totalorder %s73, %s74
    %p83 = scmp.eq.s32.totalorder %s21, 0
    %p84 = por %p82, %p83
    %p85 = scmp.ne.s32.totalorder %s73, %s74
    %p86 = scmp.eq.s32.totalorder %s22, 1
    %p87 = por %p85, %p86
    %p89 = scmp.ne.s32.totalorder %s74, %s88
    %p90 = scmp.eq.s32.totalorder %s22, 0
    %p91 = por %p89, %p90
    %s93 = sadd.s32 %s92, 1
    %p96 = scmp.eq.s32.totalorder %s16, 1
    %p97 = scmp.ne.s32.totalorder %s92, %s94
    %p98 = scmp.eq.s32.totalorder %s16, 0
    %p99 = por %p97, %p98
    %p100 = scmp.ne.s32.totalorder %s92, %s94
    %p101 = scmp.eq.s32.totalorder %s21, 1
    %p102 = por %p100, %p101
    %p103 = scmp.ne.s32.totalorder %s94, %s95
    %p104 = scmp.eq.s32.totalorder %s21, 0
    %p105 = por %p103, %p104
    %p106 = scmp.ne.s32.totalorder %s94, %s95
    %p107 = scmp.eq.s32.totalorder %s22, 1
    %p108 = por %p106, %p107
    %p110 = scmp.ne.s32.totalorder %s95, %s109
    %p111 = scmp.eq.s32.totalorder %s22, 0
    %p112 = por %p110, %p111
    %s114 = sadd.s32 %s113, 1
    %p117 = scmp.eq.s32.totalorder %s16, 1
    %p118 = scmp.ne.s32.totalorder %s113, %s115
    %p119 = scmp.eq.s32.totalorder %s16, 0
    %p120 = por %p118, %p119
    %p121 = scmp.ne.s32.totalorder %s113, %s115
    %p122 = scmp.eq.s32.totalorder %s21, 1
    %p123 = por %p121, %p122
    %p124 = scmp.ne.s32.totalorder %s115, %s116
    %p125 = scmp.eq.s32.totalorder %s21, 0
    %p126 = por %p124, %p125
    %p127 = scmp.ne.s32.totalorder %s115, %s116
    %p128 = scmp.eq.s32.totalorder %s22, 1
    %p129 = por %p127, %p128
    %p131 = scmp.ne.s32.totalorder %s116, %s130
    %p132 = scmp.eq.s32.totalorder %s22, 0
    %p133 = por %p131, %p132
    %s135 = sadd.s32 %s134, 1
    %p138 = scmp.eq.s32.totalorder %s16, 1
    %p139 = scmp.ne.s32.totalorder %s134, %s136
    %p140 = scmp.eq.s32.totalorder %s16, 0
    %p141 = por %p139, %p140
    %p142 = scmp.ne.s32.totalorder %s134, %s136
    %p143 = scmp.eq.s32.totalorder %s21, 1
    %p144 = por %p142, %p143
    %p145 = scmp.ne.s32.totalorder %s136, %s137
    %p146 = scmp.eq.s32.totalorder %s21, 0
    %p147 = por %p145, %p146
    %p148 = scmp.ne.s32.totalorder %s136, %s137
    %p149 = scmp.eq.s32.totalorder %s22, 1
    %p150 = por %p148, %p149
    %p152 = scmp.ne.s32.totalorder %s137, %s151
    %p153 = scmp.eq.s32.totalorder %s22, 0
    %p154 = por %p152, %p153
    %s156 = sadd.s32 %s155, 1
    %p159 = scmp.eq.s32.totalorder %s16, 1
    %p160 = scmp.ne.s32.totalorder %s155, %s157
    %p161 = scmp.eq.s32.totalorder %s16, 0
    %p162 = por %p160, %p161
    %p163 = scmp.ne.s32.totalorder %s155, %s157
    %p164 = scmp.eq.s32.totalorder %s21, 1
    %p165 = por %p163, %p164
    %p166 = scmp.ne.s32.totalorder %s157, %s158
    %p167 = scmp.eq.s32.totalorder %s21, 0
    %p168 = por %p166, %p167
    %p169 = scmp.ne.s32.totalorder %s157, %s158
    %p170 = scmp.eq.s32.totalorder %s22, 1
    %p171 = por %p169, %p170
    %p173 = scmp.ne.s32.totalorder %s158, %s172
    %p174 = scmp.eq.s32.totalorder %s22, 0
    %p175 = por %p173, %p174
    %s177 = sadd.s32 %s176, 1
    %p180 = scmp.eq.s32.totalorder %s16, 1
    %p181 = scmp.ne.s32.totalorder %s176, %s178
    %p182 = scmp.eq.s32.totalorder %s16, 0
    %p183 = por %p181, %p182
    %p184 = scmp.ne.s32.totalorder %s176, %s178
    %p185 = scmp.eq.s32.totalorder %s21, 1
    %p186 = por %p184, %p185
    %p187 = scmp.ne.s32.totalorder %s178, %s179
    %p188 = scmp.eq.s32.totalorder %s21, 0
    %p189 = por %p187, %p188
    %p190 = scmp.ne.s32.totalorder %s178, %s179
    %p191 = scmp.eq.s32.totalorder %s22, 1
    %p192 = por %p190, %p191
    %p194 = scmp.ne.s32.totalorder %s179, %s193
    %p195 = scmp.eq.s32.totalorder %s22, 0
    %p196 = por %p194, %p195
    %s198 = sadd.s32 %s197, 1
    %p201 = scmp.eq.s32.totalorder %s16, 1
    %p202 = scmp.ne.s32.totalorder %s197, %s199
    %p203 = scmp.eq.s32.totalorder %s16, 0
    %p204 = por %p202, %p203
    %p205 = scmp.ne.s32.totalorder %s197, %s199
    %p206 = scmp.eq.s32.totalorder %s21, 1
    %p207 = por %p205, %p206
    %p208 = scmp.ne.s32.totalorder %s199, %s200
    %p209 = scmp.eq.s32.totalorder %s21, 0
    %p210 = por %p208, %p209
    %p211 = scmp.ne.s32.totalorder %s199, %s200
    %p212 = scmp.eq.s32.totalorder %s22, 1
    %p213 = por %p211, %p212
    %p215 = scmp.ne.s32.totalorder %s200, %s214
    %p216 = scmp.eq.s32.totalorder %s22, 0
    %p217 = por %p215, %p216
    %s219 = sadd.s32 %s218, 1
    %p222 = scmp.eq.s32.totalorder %s16, 1
    %p223 = scmp.ne.s32.totalorder %s218, %s220
    %p224 = scmp.eq.s32.totalorder %s16, 0
    %p225 = por %p223, %p224
    %p226 = scmp.ne.s32.totalorder %s218, %s220
    %p227 = scmp.eq.s32.totalorder %s21, 1
    %p228 = por %p226, %p227
    %p229 = scmp.ne.s32.totalorder %s220, %s221
    %p230 = scmp.eq.s32.totalorder %s21, 0
    %p231 = por %p229, %p230
    %p232 = scmp.ne.s32.totalorder %s220, %s221
    %p233 = scmp.eq.s32.totalorder %s22, 1
    %p234 = por %p232, %p233
    %p236 = scmp.ne.s32.totalorder %s221, %s235
    %p237 = scmp.eq.s32.totalorder %s22, 0
    %p238 = por %p236, %p237
    %s239 = ssub.s32 %s16, %s23
    %p240 = scmp.eq.s32.totalorder %s239, 0
    %s242 = sadd.s32 %s241, 1
    %s243 = scalar_select %p240, %s241, %s242
    %p246 = pneg %p240
    %p247 = scmp.eq.s32.totalorder %s16, 1
    %p248 = por %p246, %p247
    %p249 = scmp.ne.s32.totalorder %s241, %s244
    %p250 = scmp.eq.s32.totalorder %s16, 0
    %p251 = por %p249, %p250
    %p252 = scmp.ne.s32.totalorder %s241, %s244
    %p253 = scmp.eq.s32.totalorder %s21, 1
    %p254 = por %p252, %p253
    %p255 = scmp.ne.s32.totalorder %s244, %s245
    %p256 = scmp.eq.s32.totalorder %s21, 0
    %p257 = por %p255, %p256
    %p258 = scmp.ne.s32.totalorder %s244, %s245
    %p259 = scmp.eq.s32.totalorder %s22, 1
    %p260 = por %p258, %p259
    %p262 = scmp.ne.s32.totalorder %s245, %s261
    %p263 = scmp.eq.s32.totalorder %s22, 0
    %p264 = por %p262, %p263
    %p265 = scmp.le.s32.totalorder 1, %s16
    %p266 = scmp.lt.s32.totalorder %s16, 3
    %p267 = pnand %p265, %p266
    %p268 = pneg %p267
    // Predicated region
    $region9: #{resnet_forward.1} parent=5 // pred_check
      _
    $region10: #{resnet_forward.1} parent=5 // pred_check_branch
      %270 = sbr.rel (%p267) target = $region12
    $region11: #{resnet_forward.1} parent=5 // pred_region
      %s271 = ssub.s32 %s16, 1
      // Predicated region
      $region13: #{resnet_forward.1} parent=11 // pred_check
        %p272 = pneg %p63
      $region14: #{resnet_forward.1} parent=11 // pred_check_branch
        %274 = sbr.rel (%p272) target = $region16
      $region15: #{resnet_forward.1} parent=11 // pred_region
        _
      $region16: #{resnet_forward.1} parent=11 // pred_fallthru
        _
      // Predicated region
      $region17: #{resnet_forward.1} parent=11 // pred_check
        %p275 = pneg %p84
      $region18: #{resnet_forward.1} parent=11 // pred_check_branch
        %277 = sbr.rel (%p275) target = $region20
      $region19: #{resnet_forward.1} parent=11 // pred_region
        _
      $region20: #{resnet_forward.1} parent=11 // pred_fallthru
        _
      // Predicated region
      $region21: #{resnet_forward.1} parent=11 // pred_check
        %p278 = pneg %p105
      $region22: #{resnet_forward.1} parent=11 // pred_check_branch
        %280 = sbr.rel (%p278) target = $region24
      $region23: #{resnet_forward.1} parent=11 // pred_region
        _
      $region24: #{resnet_forward.1} parent=11 // pred_fallthru
        _
      // Predicated region
      $region25: #{resnet_forward.1} parent=11 // pred_check
        %p281 = pneg %p126
      $region26: #{resnet_forward.1} parent=11 // pred_check_branch
        %283 = sbr.rel (%p281) target = $region28
      $region27: #{resnet_forward.1} parent=11 // pred_region
        _
      $region28: #{resnet_forward.1} parent=11 // pred_fallthru
        _
      // Predicated region
      $region29: #{resnet_forward.1} parent=11 // pred_check
        %p284 = pneg %p147
      $region30: #{resnet_forward.1} parent=11 // pred_check_branch
        %286 = sbr.rel (%p284) target = $region32
      $region31: #{resnet_forward.1} parent=11 // pred_region
        _
      $region32: #{resnet_forward.1} parent=11 // pred_fallthru
        _
      // Predicated region
      $region33: #{resnet_forward.1} parent=11 // pred_check
        %p287 = pneg %p168
      $region34: #{resnet_forward.1} parent=11 // pred_check_branch
        %289 = sbr.rel (%p287) target = $region36
      $region35: #{resnet_forward.1} parent=11 // pred_region
        _
      $region36: #{resnet_forward.1} parent=11 // pred_fallthru
        _
      // Predicated region
      $region37: #{resnet_forward.1} parent=11 // pred_check
        %p290 = pneg %p189
      $region38: #{resnet_forward.1} parent=11 // pred_check_branch
        %292 = sbr.rel (%p290) target = $region40
      $region39: #{resnet_forward.1} parent=11 // pred_region
        _
      $region40: #{resnet_forward.1} parent=11 // pred_fallthru
        _
      // Predicated region
      $region41: #{resnet_forward.1} parent=11 // pred_check
        %p293 = pneg %p210
      $region42: #{resnet_forward.1} parent=11 // pred_check_branch
        %295 = sbr.rel (%p293) target = $region44
      $region43: #{resnet_forward.1} parent=11 // pred_region
        _
      $region44: #{resnet_forward.1} parent=11 // pred_fallthru
        _
      // Predicated region
      $region45: #{resnet_forward.1} parent=11 // pred_check
        %p296 = pneg %p231
      $region46: #{resnet_forward.1} parent=11 // pred_check_branch
        %298 = sbr.rel (%p296) target = $region48
      $region47: #{resnet_forward.1} parent=11 // pred_region
        _
      $region48: #{resnet_forward.1} parent=11 // pred_fallthru
        _
    $region12: #{resnet_forward.1} parent=5 // pred_fallthru
      _
    %p299 = scmp.lt.s32.totalorder %s16, 2
    // Predicated region
    $region49: #{resnet_forward.1} parent=5 // pred_check
      %p300 = pneg %p299
    $region50: #{resnet_forward.1} parent=5 // pred_check_branch
      %302 = sbr.rel (%p300) target = $region52
    $region51: #{resnet_forward.1} parent=5 // pred_region
      // Predicated region
      $region53: #{resnet_forward.1} parent=51 // pred_check
        %p303 = pneg %p36
      $region54: #{resnet_forward.1} parent=51 // pred_check_branch
        %305 = sbr.rel (%p303) target = $region56
      $region55: #{resnet_forward.1} parent=51 // pred_region
        %p306 = scmp.lt.s32.totalorder %s16, 1
        %s307 = scalar_select %p306, %s16, 1
        %s308 = smul.addr %s307, 12
        %s309 = smul.addr %s308, 4
        %s310 = scalar_lea.vmem %s0, %s309
      $region56: #{resnet_forward.1} parent=51 // pred_fallthru
        _
    $region52: #{resnet_forward.1} parent=5 // pred_fallthru
      _
    %p311 = scmp.le.s32.totalorder 1, %s16
    %p312 = scmp.lt.s32.totalorder %s16, 3
    %p313 = pnand %p311, %p312
    %p314 = pneg %p313
    // Predicated region
    $region57: #{resnet_forward.1} parent=5 // pred_check
      _
    $region58: #{resnet_forward.1} parent=5 // pred_check_branch
      %316 = sbr.rel (%p313) target = $region60
    $region59: #{resnet_forward.1} parent=5 // pred_region
      %s317 = ssub.s32 %s16, 1
      %p318 = scmp.lt.s32.totalorder %s21, 1
      %s319 = scalar_select %p318, %s21, 1
      %s320 = smul.addr %s319, 12
      %s321 = smul.addr %s320, 4
      %s322 = scalar_lea.vmem %s0, %s321
      %p323 = pneg %p42
      %p324 = pneg %p39
      %p325 = pneg %p63
      %p326 = pneg %p60
      %p327 = pneg %p84
      %p328 = pneg %p81
      %p329 = pneg %p105
      %p330 = pneg %p102
      %p331 = pneg %p126
      %p332 = pneg %p123
      %p333 = pneg %p147
      %p334 = pneg %p144
      %p335 = pneg %p168
      %p336 = pneg %p165
      %p337 = pneg %p189
      %p338 = pneg %p186
      %p339 = pneg %p210
      %p340 = pneg %p207
      %p341 = pneg %p231
      %p342 = pneg %p228
      %p343 = pneg %p257
      %p344 = pneg %p254
      %p345 = scmp.lt.s32.totalorder %s21, 1
      %s346 = scalar_select %p345, %s21, 1
      %s347 = smul.addr %s346, 4
      %s348 = scalar_lea.vmem %s10, %s347
      %p349 = scmp.lt.s32.totalorder %s21, 1
      %s350 = scalar_select %p349, %s21, 1
      %s351 = smul.addr %s350, 12
      %s352 = smul.addr %s351, 4
      %s353 = scalar_lea.vmem %s0, %s352
      %p354 = scmp.lt.s32.totalorder %s21, 1
      %s355 = scalar_select %p354, %s21, 1
      %s356 = smul.addr %s355, 4
      %s357 = scalar_lea.vmem %s10, %s356
      %359 = vst [vmem:[#allocation2] sm:$0xff] 0
      %360 = vst [vmem:[#allocation2 + $0x8] sm:$0xf] 0
      %361 = vst [vmem:[#allocation3] sm:$0x3f] 0
      %362 = vst [vmem:[#allocation4] sm:$0x3f] 0
      %v363 = vld [vmem:[%s353] sm:$0xff]
      %v364 = vld [vmem:[%s353 + $0x8] sm:$0xff]
      %v365 = vld [vmem:[%s353 + $0x10] sm:$0xff]
      %v366 = vld [vmem:[%s353 + $0x18] sm:$0xff]
      %v367 = vld [vmem:[%s353 + $0x20] sm:$0xff]
      %v368 = vld [vmem:[%s353 + $0x28] sm:$0xff]
      %v369 = vld [vmem:[%s1] sm:$0xff]
      %v370 = vld [vmem:[%s1 + $0x8] sm:$0xff]
      %v371 = vld [vmem:[%s1 + $0x10] sm:$0xff]
      %v372 = vld [vmem:[%s1 + $0x18] sm:$0xff]
      %v373 = vld [vmem:[%s1 + $0x20] sm:$0xff]
      %v374 = vld [vmem:[%s1 + $0x28] sm:$0xff]
      %v375 = vld [vmem:[%s1 + $0x30] sm:$0xff]
      %v376 = vld [vmem:[%s1 + $0x38] sm:$0xff]
      %v377 = vld [vmem:[%s1 + $0x40] sm:$0xff]
      %v378 = vld [vmem:[%s1 + $0x48] sm:$0xff]
      %v379 = vld [vmem:[%s1 + $0x50] sm:$0xff]
      %v380 = vld [vmem:[%s1 + $0x58] sm:$0xff]
      %v381 = vld [vmem:[%s1 + $0x60] sm:$0xff]
      %v382 = vld [vmem:[%s1 + $0x68] sm:$0xff]
      %v383 = vld [vmem:[%s1 + $0x70] sm:$0xff]
      %v384 = vld [vmem:[%s1 + $0x78] sm:$0xff]
      %v385 = vld [vmem:[%s1 + $0x80] sm:$0xff]
      %v386 = vld [vmem:[%s1 + $0x88] sm:$0xff]
      %v387 = vld [vmem:[%s1 + $0x90] sm:$0xff]
      %v388 = vld [vmem:[%s1 + $0x98] sm:$0xff]
      %v389 = vld [vmem:[%s1 + $0xa0] sm:$0xff]
      %v390 = vld [vmem:[%s1 + $0xa8] sm:$0xff]
      %v391 = vld [vmem:[%s1 + $0xb0] sm:$0xff]
      %v392 = vld [vmem:[%s1 + $0xb8] sm:$0xff]
      %v393 = vld [vmem:[%s1 + $0xc0] sm:$0xff]
      %v394 = vld [vmem:[%s1 + $0xc8] sm:$0xff]
      %v395 = vld [vmem:[%s1 + $0xd0] sm:$0xff]
      %v396 = vld [vmem:[%s1 + $0xd8] sm:$0xff]
      %v397 = vld [vmem:[%s1 + $0xe0] sm:$0xff]
      %v398 = vld [vmem:[%s1 + $0xe8] sm:$0xff]
      %v399 = vld [vmem:[%s1 + $0xf0] sm:$0xff]
      %v400 = vld [vmem:[%s1 + $0xf8] sm:$0xff]
      %v401 = vld [vmem:[%s1 + $0x100] sm:$0xff]
      %v402 = vld [vmem:[%s1 + $0x108] sm:$0xff]
      %v403 = vld [vmem:[%s1 + $0x110] sm:$0xff]
      %v404 = vld [vmem:[%s1 + $0x118] sm:$0xff]
      %v405 = vld [vmem:[%s1 + $0x120] sm:$0xff]
      %v406 = vld [vmem:[%s1 + $0x128] sm:$0xff]
      %v407 = vld [vmem:[%s1 + $0x130] sm:$0xff]
      %v408 = vld [vmem:[%s1 + $0x138] sm:$0xff]
      %v409 = vld [vmem:[%s1 + $0x140] sm:$0xff]
      %v410 = vld [vmem:[%s1 + $0x148] sm:$0xff]
      %v411 = vld [vmem:[%s1 + $0x150] sm:$0xff]
      %v412 = vld [vmem:[%s1 + $0x158] sm:$0xff]
      %v413 = vld [vmem:[%s1 + $0x160] sm:$0xff]
      %v414 = vld [vmem:[%s1 + $0x168] sm:$0xff]
      %v415 = vld [vmem:[%s1 + $0x170] sm:$0xff]
      %v416 = vld [vmem:[%s1 + $0x178] sm:$0xff]
      %v417 = vld [vmem:[%s1 + $0x180] sm:$0xff]
      %v418 = vld [vmem:[%s1 + $0x188] sm:$0xff]
      %v419 = vld [vmem:[%s1 + $0x190] sm:$0xff]
      %v420 = vld [vmem:[%s1 + $0x198] sm:$0xff]
      %v421 = vld [vmem:[%s1 + $0x1a0] sm:$0xff]
      %v422 = vld [vmem:[%s1 + $0x1a8] sm:$0xff]
      %v423 = vld [vmem:[%s1 + $0x1b0] sm:$0xff]
      %v424 = vld [vmem:[%s1 + $0x1b8] sm:$0xff]
      %v425 = vld [vmem:[%s1 + $0x1c0] sm:$0xff]
      %v426 = vld [vmem:[%s1 + $0x1c8] sm:$0xff]
      %v427 = vld [vmem:[%s1 + $0x1d0] sm:$0xff]
      %v428 = vld [vmem:[%s1 + $0x1d8] sm:$0xff]
      %v429 = vld [vmem:[%s1 + $0x1e0] sm:$0xff]
      %v430 = vld [vmem:[%s1 + $0x1e8] sm:$0xff]
      %v431 = vld [vmem:[%s1 + $0x1f0] sm:$0xff]
      %v432 = vld [vmem:[%s1 + $0x1f8] sm:$0xff]
      %v433 = vld [vmem:[%s1 + $0x200] sm:$0xff]
      %v434 = vld [vmem:[%s1 + $0x208] sm:$0xff]
      %v435 = vld [vmem:[%s1 + $0x210] sm:$0xff]
      %v436 = vld [vmem:[%s1 + $0x218] sm:$0xff]
      %v437 = vld [vmem:[%s1 + $0x220] sm:$0xff]
      %v438 = vld [vmem:[%s1 + $0x228] sm:$0xff]
      %v439 = vld [vmem:[%s1 + $0x230] sm:$0xff]
      %v440 = vld [vmem:[%s1 + $0x238] sm:$0xff]
      %v441 = vld [vmem:[%s1 + $0x240] sm:$0xff]
      %v442 = vld [vmem:[%s1 + $0x248] sm:$0xff]
      %v443 = vld [vmem:[%s1 + $0x250] sm:$0xff]
      %v444 = vld [vmem:[%s1 + $0x258] sm:$0xff]
      %v445 = vld [vmem:[%s1 + $0x260] sm:$0xff]
      %v446 = vld [vmem:[%s1 + $0x268] sm:$0xff]
      %v447 = vld [vmem:[%s1 + $0x270] sm:$0xff]
      %v448 = vld [vmem:[%s1 + $0x278] sm:$0xff]
      %v449 = vld [vmem:[%s1 + $0x280] sm:$0xff]
      %v450 = vld [vmem:[%s1 + $0x288] sm:$0xff]
      %v451 = vld [vmem:[%s1 + $0x290] sm:$0xff]
      %v452 = vld [vmem:[%s1 + $0x298] sm:$0xff]
      %v453 = vld [vmem:[%s2] sm:$0x3]
      %v455 = vlaneseq
      %v456 = vshrl.u32 %v455, 7
      %v457 = vsub.s32 0, %v456
      %v458 = vrot.slane %v453, %v457
      %v459 = vlaneseq
      %v460 = vshrl.u32 %v459, 7
      %v461 = vsub.s32 1, %v460
      %v462 = vrot.slane %v453, %v461
      %v471 = vunpack.c.l.b16 %v363
      %v472 = vunpack.c.h.b16 %v363
      %v473 = vunpack.c.l.b16 %v364
      %v474 = vunpack.c.h.b16 %v364
      %v475 = vunpack.c.l.b16 %v365
      %v476 = vunpack.c.h.b16 %v365
      %v477 = vunpack.c.l.b16 %v366
      %v478 = vunpack.c.h.b16 %v366
      %v479 = vunpack.c.l.b16 %v367
      %v480 = vunpack.c.h.b16 %v367
      %v481 = vunpack.c.l.b16 %v368
      %v482 = vunpack.c.h.b16 %v368
      %v483 = vpack.c.b16 %v477, %v471
      %v484 = vpack.c.b16 %v478, %v472
      %v485 = vpack.c.b16 %v479, %v473
      %v486 = vpack.c.b16 %v480, %v474
      %v487 = vpack.c.b16 %v481, %v475
      %v488 = vpack.c.b16 %v482, %v476
      %v578 = vunpack.c.l.b16 %v369
      %v579 = vunpack.c.h.b16 %v369
      %v580 = vunpack.c.l.b16 %v370
      %v581 = vunpack.c.h.b16 %v370
      %v582 = vunpack.c.l.b16 %v371
      %v583 = vunpack.c.h.b16 %v371
      %v584 = vunpack.c.l.b16 %v372
      %v585 = vunpack.c.h.b16 %v372
      %v586 = vunpack.c.l.b16 %v373
      %v587 = vunpack.c.h.b16 %v373
      %v588 = vunpack.c.l.b16 %v374
      %v589 = vunpack.c.h.b16 %v374
      %v590 = vunpack.c.l.b16 %v375
      %v591 = vunpack.c.h.b16 %v375
      %v592 = vunpack.c.l.b16 %v376
      %v593 = vunpack.c.h.b16 %v376
      %v594 = vunpack.c.l.b16 %v377
      %v595 = vunpack.c.h.b16 %v377
      %v596 = vunpack.c.l.b16 %v378
      %v597 = vunpack.c.h.b16 %v378
      %v598 = vunpack.c.l.b16 %v379
      %v599 = vunpack.c.h.b16 %v379
      %v600 = vunpack.c.l.b16 %v380
      %v601 = vunpack.c.h.b16 %v380
      %v602 = vunpack.c.l.b16 %v381
      %v603 = vunpack.c.h.b16 %v381
      %v604 = vunpack.c.l.b16 %v382
      %v605 = vunpack.c.h.b16 %v382
      %v606 = vunpack.c.l.b16 %v383
      %v607 = vunpack.c.h.b16 %v383
      %v608 = vunpack.c.l.b16 %v384
      %v609 = vunpack.c.h.b16 %v384
      %v610 = vunpack.c.l.b16 %v385
      %v611 = vunpack.c.h.b16 %v385
      %v612 = vunpack.c.l.b16 %v386
      %v613 = vunpack.c.h.b16 %v386
      %v614 = vunpack.c.l.b16 %v387
      %v615 = vunpack.c.h.b16 %v387
      %v616 = vunpack.c.l.b16 %v388
      %v617 = vunpack.c.h.b16 %v388
      %v618 = vunpack.c.l.b16 %v389
      %v619 = vunpack.c.h.b16 %v389
      %v620 = vunpack.c.l.b16 %v390
      %v621 = vunpack.c.h.b16 %v390
      %v622 = vunpack.c.l.b16 %v391
      %v623 = vunpack.c.h.b16 %v391
      %v624 = vunpack.c.l.b16 %v392
      %v625 = vunpack.c.h.b16 %v392
      %v626 = vunpack.c.l.b16 %v393
      %v627 = vunpack.c.h.b16 %v393
      %v628 = vunpack.c.l.b16 %v394
      %v629 = vunpack.c.h.b16 %v394
      %v630 = vunpack.c.l.b16 %v395
      %v631 = vunpack.c.h.b16 %v395
      %v632 = vunpack.c.l.b16 %v396
      %v633 = vunpack.c.h.b16 %v396
      %v634 = vunpack.c.l.b16 %v397
      %v635 = vunpack.c.h.b16 %v397
      %v636 = vunpack.c.l.b16 %v398
      %v637 = vunpack.c.h.b16 %v398
      %v638 = vunpack.c.l.b16 %v399
      %v639 = vunpack.c.h.b16 %v399
      %v640 = vunpack.c.l.b16 %v400
      %v641 = vunpack.c.h.b16 %v400
      %v642 = vunpack.c.l.b16 %v401
      %v643 = vunpack.c.h.b16 %v401
      %v644 = vunpack.c.l.b16 %v402
      %v645 = vunpack.c.h.b16 %v402
      %v646 = vunpack.c.l.b16 %v403
      %v647 = vunpack.c.h.b16 %v403
      %v648 = vunpack.c.l.b16 %v404
      %v649 = vunpack.c.h.b16 %v404
      %v650 = vunpack.c.l.b16 %v405
      %v651 = vunpack.c.h.b16 %v405
      %v652 = vunpack.c.l.b16 %v406
      %v653 = vunpack.c.h.b16 %v406
      %v654 = vunpack.c.l.b16 %v407
      %v655 = vunpack.c.h.b16 %v407
      %v656 = vunpack.c.l.b16 %v408
      %v657 = vunpack.c.h.b16 %v408
      %v658 = vunpack.c.l.b16 %v409
      %v659 = vunpack.c.h.b16 %v409
      %v660 = vunpack.c.l.b16 %v410
      %v661 = vunpack.c.h.b16 %v410
      %v662 = vunpack.c.l.b16 %v411
      %v663 = vunpack.c.h.b16 %v411
      %v664 = vunpack.c.l.b16 %v412
      %v665 = vunpack.c.h.b16 %v412
      %v666 = vunpack.c.l.b16 %v413
      %v667 = vunpack.c.h.b16 %v413
      %v668 = vunpack.c.l.b16 %v414
      %v669 = vunpack.c.h.b16 %v414
      %v670 = vunpack.c.l.b16 %v415
      %v671 = vunpack.c.h.b16 %v415
      %v672 = vunpack.c.l.b16 %v416
      %v673 = vunpack.c.h.b16 %v416
      %v674 = vunpack.c.l.b16 %v417
      %v675 = vunpack.c.h.b16 %v417
      %v676 = vunpack.c.l.b16 %v418
      %v677 = vunpack.c.h.b16 %v418
      %v678 = vunpack.c.l.b16 %v419
      %v679 = vunpack.c.h.b16 %v419
      %v680 = vunpack.c.l.b16 %v420
      %v681 = vunpack.c.h.b16 %v420
      %v682 = vunpack.c.l.b16 %v421
      %v683 = vunpack.c.h.b16 %v421
      %v684 = vunpack.c.l.b16 %v422
      %v685 = vunpack.c.h.b16 %v422
      %v686 = vunpack.c.l.b16 %v423
      %v687 = vunpack.c.h.b16 %v423
      %v688 = vunpack.c.l.b16 %v424
      %v689 = vunpack.c.h.b16 %v424
      %v690 = vunpack.c.l.b16 %v425
      %v691 = vunpack.c.h.b16 %v425
      %v692 = vunpack.c.l.b16 %v426
      %v693 = vunpack.c.h.b16 %v426
      %v694 = vunpack.c.l.b16 %v427
      %v695 = vunpack.c.h.b16 %v427
      %v696 = vunpack.c.l.b16 %v428
      %v697 = vunpack.c.h.b16 %v428
      %v698 = vunpack.c.l.b16 %v429
      %v699 = vunpack.c.h.b16 %v429
      %v700 = vunpack.c.l.b16 %v430
      %v701 = vunpack.c.h.b16 %v430
      %v702 = vunpack.c.l.b16 %v431
      %v703 = vunpack.c.h.b16 %v431
      %v704 = vunpack.c.l.b16 %v432
      %v705 = vunpack.c.h.b16 %v432
      %v706 = vunpack.c.l.b16 %v433
      %v707 = vunpack.c.h.b16 %v433
      %v708 = vunpack.c.l.b16 %v434
      %v709 = vunpack.c.h.b16 %v434
      %v710 = vunpack.c.l.b16 %v435
      %v711 = vunpack.c.h.b16 %v435
      %v712 = vunpack.c.l.b16 %v436
      %v713 = vunpack.c.h.b16 %v436
      %v714 = vunpack.c.l.b16 %v437
      %v715 = vunpack.c.h.b16 %v437
      %v716 = vunpack.c.l.b16 %v438
      %v717 = vunpack.c.h.b16 %v438
      %v718 = vunpack.c.l.b16 %v439
      %v719 = vunpack.c.h.b16 %v439
      %v720 = vunpack.c.l.b16 %v440
      %v721 = vunpack.c.h.b16 %v440
      %v722 = vunpack.c.l.b16 %v441
      %v723 = vunpack.c.h.b16 %v441
      %v724 = vunpack.c.l.b16 %v442
      %v725 = vunpack.c.h.b16 %v442
      %v726 = vunpack.c.l.b16 %v443
      %v727 = vunpack.c.h.b16 %v443
      %v728 = vunpack.c.l.b16 %v444
      %v729 = vunpack.c.h.b16 %v444
      %v730 = vunpack.c.l.b16 %v445
      %v731 = vunpack.c.h.b16 %v445
      %v732 = vunpack.c.l.b16 %v446
      %v733 = vunpack.c.h.b16 %v446
      %v734 = vunpack.c.l.b16 %v447
      %v735 = vunpack.c.h.b16 %v447
      %v736 = vunpack.c.l.b16 %v448
      %v737 = vunpack.c.h.b16 %v448
      %v738 = vunpack.c.l.b16 %v449
      %v739 = vunpack.c.h.b16 %v449
      %v740 = vunpack.c.l.b16 %v450
      %v741 = vunpack.c.h.b16 %v450
      %v742 = vunpack.c.l.b16 %v451
      %v743 = vunpack.c.h.b16 %v451
      %v744 = vunpack.c.l.b16 %v452
      %v745 = vunpack.c.h.b16 %v452
      %v746 = vpack.c.b16 %v580, %v578
      %v747 = vpack.c.b16 %v581, %v579
      %v748 = vpack.c.b16 %v584, %v582
      %v749 = vpack.c.b16 %v585, %v583
      %v750 = vpack.c.b16 %v588, %v586
      %v751 = vpack.c.b16 %v589, %v587
      %v752 = vpack.c.b16 %v592, %v590
      %v753 = vpack.c.b16 %v593, %v591
      %v754 = vpack.c.b16 %v596, %v594
      %v755 = vpack.c.b16 %v597, %v595
      %v756 = vpack.c.b16 %v600, %v598
      %v757 = vpack.c.b16 %v601, %v599
      %v758 = vpack.c.b16 %v604, %v602
      %v759 = vpack.c.b16 %v605, %v603
      %v760 = vpack.c.b16 %v608, %v606
      %v761 = vpack.c.b16 %v609, %v607
      %v762 = vpack.c.b16 %v612, %v610
      %v763 = vpack.c.b16 %v613, %v611
      %v764 = vpack.c.b16 %v616, %v614
      %v765 = vpack.c.b16 %v617, %v615
      %v766 = vpack.c.b16 %v620, %v618
      %v767 = vpack.c.b16 %v621, %v619
      %v768 = vpack.c.b16 %v624, %v622
      %v769 = vpack.c.b16 %v625, %v623
      %v770 = vpack.c.b16 %v628, %v626
      %v771 = vpack.c.b16 %v629, %v627
      %v772 = vpack.c.b16 %v632, %v630
      %v773 = vpack.c.b16 %v633, %v631
      %v774 = vpack.c.b16 %v636, %v634
      %v775 = vpack.c.b16 %v637, %v635
      %v776 = vpack.c.b16 %v640, %v638
      %v777 = vpack.c.b16 %v641, %v639
      %v778 = vpack.c.b16 %v644, %v642
      %v779 = vpack.c.b16 %v645, %v643
      %v780 = vpack.c.b16 %v648, %v646
      %v781 = vpack.c.b16 %v649, %v647
      %v782 = vpack.c.b16 %v652, %v650
      %v783 = vpack.c.b16 %v653, %v651
      %v784 = vpack.c.b16 %v656, %v654
      %v785 = vpack.c.b16 %v657, %v655
      %v786 = vpack.c.b16 %v660, %v658
      %v787 = vpack.c.b16 %v661, %v659
      %v788 = vpack.c.b16 %v664, %v662
      %v789 = vpack.c.b16 %v665, %v663
      %v790 = vpack.c.b16 %v668, %v666
      %v791 = vpack.c.b16 %v669, %v667
      %v792 = vpack.c.b16 %v672, %v670
      %v793 = vpack.c.b16 %v673, %v671
      %v794 = vpack.c.b16 %v676, %v674
      %v795 = vpack.c.b16 %v677, %v675
      %v796 = vpack.c.b16 %v680, %v678
      %v797 = vpack.c.b16 %v681, %v679
      %v798 = vpack.c.b16 %v684, %v682
      %v799 = vpack.c.b16 %v685, %v683
      %v800 = vpack.c.b16 %v688, %v686
      %v801 = vpack.c.b16 %v689, %v687
      %v802 = vpack.c.b16 %v692, %v690
      %v803 = vpack.c.b16 %v693, %v691
      %v804 = vpack.c.b16 %v696, %v694
      %v805 = vpack.c.b16 %v697, %v695
      %v806 = vpack.c.b16 %v700, %v698
      %v807 = vpack.c.b16 %v701, %v699
      %v808 = vpack.c.b16 %v704, %v702
      %v809 = vpack.c.b16 %v705, %v703
      %v810 = vpack.c.b16 %v708, %v706
      %v811 = vpack.c.b16 %v709, %v707
      %v812 = vpack.c.b16 %v712, %v710
      %v813 = vpack.c.b16 %v713, %v711
      %v814 = vpack.c.b16 %v716, %v714
      %v815 = vpack.c.b16 %v717, %v715
      %v816 = vpack.c.b16 %v720, %v718
      %v817 = vpack.c.b16 %v721, %v719
      %v818 = vpack.c.b16 %v724, %v722
      %v819 = vpack.c.b16 %v725, %v723
      %v820 = vpack.c.b16 %v728, %v726
      %v821 = vpack.c.b16 %v729, %v727
      %v822 = vpack.c.b16 %v732, %v730
      %v823 = vpack.c.b16 %v733, %v731
      %v824 = vpack.c.b16 %v736, %v734
      %v825 = vpack.c.b16 %v737, %v735
      %v826 = vpack.c.b16 %v740, %v738
      %v827 = vpack.c.b16 %v741, %v739
      %v828 = vpack.c.b16 %v744, %v742
      %v829 = vpack.c.b16 %v745, %v743
      %vm914 = vcmask 261120
      %v916 = vsel %vm914, %v488, 0
      %918 = vmatprep.subr.bf16.mxu0 %v747
      %919 = vmatpush1.bf16.msra.mxu0 %v746
      %920 = vmatprep.subr.bf16.mxu0 %v749
      %921 = vmatpush1.bf16.msra.mxu0 %v748
      %922 = vmatprep.subr.bf16.mxu0 %v751
      %923 = vmatpush1.bf16.msra.mxu0 %v750
      %924 = vmatprep.subr.bf16.mxu0 %v753
      %925 = vmatpush1.bf16.msra.mxu0 %v752
      %926 = vmatprep.subr.bf16.mxu0 %v755
      %927 = vmatpush1.bf16.msra.mxu0 %v754
      %928 = vmatprep.subr.bf16.mxu0 %v757
      %929 = vmatpush1.bf16.msra.mxu0 %v756
      %930 = vmatprep.subr.bf16.mxu0 %v759
      %931 = vmatpush1.bf16.msra.mxu0 %v758
      %932 = vmatprep.subr.bf16.mxu0 %v761
      %933 = vmatpush1.bf16.msra.mxu0 %v760
      %934 = vmatprep.subr.bf16.mxu0 %v763
      %935 = vmatpush1.bf16.msra.mxu0 %v762
      %936 = vmatprep.subr.bf16.mxu0 %v765
      %937 = vmatpush1.bf16.msra.mxu0 %v764
      %938 = vmatprep.subr.bf16.mxu0 %v767
      %939 = vmatpush1.bf16.msra.mxu0 %v766
      %940 = vmatprep.subr.bf16.mxu0 %v769
      %941 = vmatpush1.bf16.msra.mxu0 %v768
      %942 = vmatprep.subr.bf16.mxu0 %v771
      %943 = vmatpush1.bf16.msra.mxu0 %v770
      %944 = vmatprep.subr.bf16.mxu0 %v773
      %945 = vmatpush1.bf16.msra.mxu0 %v772
      %946 = vmatprep.subr.bf16.mxu0 %v775
      %947 = vmatpush1.bf16.msra.mxu0 %v774
      %948 = vmatprep.subr.bf16.mxu0 %v777
      %949 = vmatpush1.bf16.msra.mxu0 %v776
      %950 = vmatprep.mubr.bf16.mxu0 %v484
      %951 = vmatmul.mubr.bf16.gmra.mrb[0].mxu0 %v483
      %v952 = vpop.f32.mrb[0].mxu0
      %v953 = vadd.f32 %v458, %v952
      %v954 = vpop.f32.mrb[0].mxu0
      %v955 = vadd.f32 %v462, %v954
      %v956 = vpop.f32.mrb[0].mxu0
      %v957 = vadd.f32 %v458, %v956
      %v958 = vpop.f32.mrb[0].mxu0
      %v959 = vadd.f32 %v462, %v958
      %960 = vdwg.mxu0
      %961 = vmatprep.subr.bf16.mxu0 %v779
      %962 = vmatpush1.bf16.msra.mxu0 %v778
      %963 = vmatprep.subr.bf16.mxu0 %v781
      %964 = vmatpush1.bf16.msra.mxu0 %v780
      %965 = vmatprep.subr.bf16.mxu0 %v783
      %966 = vmatpush1.bf16.msra.mxu0 %v782
      %967 = vmatprep.subr.bf16.mxu0 %v785
      %968 = vmatpush1.bf16.msra.mxu0 %v784
      %969 = vmatprep.subr.bf16.mxu0 %v787
      %970 = vmatpush1.bf16.msra.mxu0 %v786
      %971 = vmatprep.subr.bf16.mxu0 %v789
      %972 = vmatpush1.bf16.msra.mxu0 %v788
      %973 = vmatprep.subr.bf16.mxu0 %v791
      %974 = vmatpush1.bf16.msra.mxu0 %v790
      %975 = vmatprep.subr.bf16.mxu0 %v793
      %976 = vmatpush1.bf16.msra.mxu0 %v792
      %977 = vmatprep.subr.bf16.mxu0 %v795
      %978 = vmatpush1.bf16.msra.mxu0 %v794
      %979 = vmatprep.subr.bf16.mxu0 %v797
      %980 = vmatpush1.bf16.msra.mxu0 %v796
      %981 = vmatprep.subr.bf16.mxu0 %v799
      %982 = vmatpush1.bf16.msra.mxu0 %v798
      %983 = vmatprep.subr.bf16.mxu0 %v801
      %984 = vmatpush1.bf16.msra.mxu0 %v800
      %985 = vmatprep.subr.bf16.mxu0 %v803
      %986 = vmatpush1.bf16.msra.mxu0 %v802
      %987 = vmatprep.subr.bf16.mxu0 %v805
      %988 = vmatpush1.bf16.msra.mxu0 %v804
      %989 = vmatprep.subr.bf16.mxu0 %v807
      %990 = vmatpush1.bf16.msra.mxu0 %v806
      %991 = vmatprep.subr.bf16.mxu0 %v809
      %992 = vmatpush1.bf16.msra.mxu0 %v808
      %993 = vmatprep.mubr.bf16.mxu0 %v486
      %994 = vmatmul.mubr.bf16.gmra.mrb[0].mxu0 %v485
      %v995 = vpop.f32.mrb[0].mxu0
      %v996 = vadd.f32 %v953, %v995
      %v997 = vpop.f32.mrb[0].mxu0
      %v998 = vadd.f32 %v955, %v997
      %v999 = vpop.f32.mrb[0].mxu0
      %v1000 = vadd.f32 %v957, %v999
      %v1001 = vpop.f32.mrb[0].mxu0
      %v1002 = vadd.f32 %v959, %v1001
      %1003 = vdwg.mxu0
      %1004 = vmatprep.subr.bf16.mxu0 %v811
      %1005 = vmatpush1.bf16.msra.mxu0 %v810
      %1006 = vmatprep.subr.bf16.mxu0 %v813
      %1007 = vmatpush1.bf16.msra.mxu0 %v812
      %1008 = vmatprep.subr.bf16.mxu0 %v815
      %1009 = vmatpush1.bf16.msra.mxu0 %v814
      %1010 = vmatprep.subr.bf16.mxu0 %v817
      %1011 = vmatpush1.bf16.msra.mxu0 %v816
      %1012 = vmatprep.subr.bf16.mxu0 %v819
      %1013 = vmatpush1.bf16.msra.mxu0 %v818
      %1014 = vmatprep.subr.bf16.mxu0 %v821
      %1015 = vmatpush1.bf16.msra.mxu0 %v820
      %1016 = vmatprep.subr.bf16.mxu0 %v823
      %1017 = vmatpush1.bf16.msra.mxu0 %v822
      %1018 = vmatprep.subr.bf16.mxu0 %v825
      %1019 = vmatpush1.bf16.msra.mxu0 %v824
      %1020 = vmatprep.subr.bf16.mxu0 %v827
      %1021 = vmatpush1.bf16.msra.mxu0 %v826
      %1022 = vmatprep.subr.bf16.mxu0 %v829
      %1023 = vmatpush1.bf16.msra.mxu0 %v828
      %1024 = vmatprep.subr.bf16.mxu0 0
      %1025 = vmatpush1.bf16.msra.mxu0 0
      %1026 = vmatprep.subr.bf16.mxu0 0
      %1027 = vmatpush1.bf16.msra.mxu0 0
      %1028 = vmatprep.subr.bf16.mxu0 0
      %1029 = vmatpush1.bf16.msra.mxu0 0
      %1030 = vmatprep.subr.bf16.mxu0 0
      %1031 = vmatpush1.bf16.msra.mxu0 0
      %1032 = vmatprep.subr.bf16.mxu0 0
      %1033 = vmatpush1.bf16.msra.mxu0 0
      %1034 = vmatprep.subr.bf16.mxu0 0
      %1035 = vmatpush1.bf16.msra.mxu0 0
      %1036 = vmatprep.mubr.bf16.mxu0 %v916
      %1037 = vmatmul.mubr.bf16.gmra.mrb[0].mxu0 %v487
      %v1038 = vpop.f32.mrb[0].mxu0
      %v1039 = vadd.f32 %v996, %v1038
      %v1040 = vpop.f32.mrb[0].mxu0
      %v1041 = vadd.f32 %v998, %v1040
      %v1042 = vpop.f32.mrb[0].mxu0
      %v1043 = vadd.f32 %v1000, %v1042
      %v1044 = vpop.f32.mrb[0].mxu0
      %v1045 = vadd.f32 %v1002, %v1044
      %1046 = vdwg.mxu0
      %v1047 = vmax.f32 %v1039, 0.0
      %v1048 = vmax.f32 %v1041, 0.0
      %v1049 = vmax.f32 %v1043, 0.0
      %v1050 = vmax.f32 %v1045, 0.0
      %v1051 = vrot.slane %v1049, 7
      %v1052 = vrot.slane %v1050, 7
      %v1053 = vlaneseq
      %v1054 = vshrl.u32 %v1053, 7
      %vm1055 = vcmp.ge.s32.totalorder %v1054, 1
      %v1056 = vsel %vm1055, %v1051, 0.0
      %v1057 = vsel %vm1055, %v1052, 0.0
      %v1058 = vmax.f32 %v1047, %v1049
      %v1059 = vmax.f32 %v1048, %v1050
      %v1060 = vmax.f32 %v1058, %v1056
      %v1061 = vmax.f32 %v1059, %v1057
      %1062 = vrot.lane.b32.xlu0 %v1061, 16
      %v1063 = vpop.permute.xlu0 %1062
      %v1064 = vlaneseq
      %v1065 = vand.u32 %v1064, 127
      %vm1066 = vcmp.ge.s32.totalorder %v1065, 16
      %v1067 = vsel %vm1066, %v1063, 0.0
      %v1068 = vmax.f32 %v1060, %v1061
      %v1069 = vmax.f32 %v1068, %v1067
      %v1070 = vld [vmem:[%s3] sm:$0xf]
      %v1071 = vld [vmem:[%s3 + $0x4] sm:$0xf]
      %v1072 = vld [vmem:[%s3 + $0x8] sm:$0xf]
      %v1073 = vld [vmem:[%s3 + $0xc] sm:$0xf]
      %v1074 = vld [vmem:[%s3 + $0x10] sm:$0xf]
      %v1075 = vld [vmem:[%s3 + $0x14] sm:$0xf]
      %v1076 = vld [vmem:[%s3 + $0x18] sm:$0xf]
      %v1077 = vld [vmem:[%s3 + $0x1c] sm:$0xf]
      %v1078 = vld [vmem:[%s3 + $0x20] sm:$0xf]
      %v1079 = vld [vmem:[%s3 + $0x24] sm:$0xf]
      %v1080 = vld [vmem:[%s3 + $0x28] sm:$0xf]
      %v1081 = vld [vmem:[%s3 + $0x2c] sm:$0xf]
      %v1082 = vld [vmem:[%s3 + $0x30] sm:$0xf]
      %v1083 = vld [vmem:[%s3 + $0x34] sm:$0xf]
      %v1084 = vld [vmem:[%s3 + $0x38] sm:$0xf]
      %v1085 = vld [vmem:[%s3 + $0x3c] sm:$0xf]
      %v1086 = vld [vmem:[%s3 + $0x40] sm:$0xf]
      %v1087 = vld [vmem:[%s3 + $0x44] sm:$0xf]
      %v1088 = vld [vmem:[%s3 + $0x48] sm:$0xf]
      %v1089 = vld [vmem:[%s3 + $0x4c] sm:$0xf]
      %v1090 = vld [vmem:[%s3 + $0x50] sm:$0xf]
      %v1091 = vld [vmem:[%s3 + $0x54] sm:$0xf]
      %v1092 = vld [vmem:[%s3 + $0x58] sm:$0xf]
      %v1093 = vld [vmem:[%s3 + $0x5c] sm:$0xf]
      %v1094 = vld [vmem:[%s3 + $0x60] sm:$0xf]
      %v1095 = vld [vmem:[%s3 + $0x64] sm:$0xf]
      %v1096 = vld [vmem:[%s3 + $0x68] sm:$0xf]
      %v1097 = vld [vmem:[%s3 + $0x6c] sm:$0xf]
      %v1098 = vld [vmem:[%s3 + $0x70] sm:$0xf]
      %v1099 = vld [vmem:[%s3 + $0x74] sm:$0xf]
      %v1100 = vld [vmem:[%s3 + $0x78] sm:$0xf]
      %v1101 = vld [vmem:[%s3 + $0x7c] sm:$0xf]
      %v1102 = vld [vmem:[%s3 + $0x80] sm:$0xf]
      %v1103 = vld [vmem:[%s3 + $0x84] sm:$0xf]
      %v1104 = vld [vmem:[%s3 + $0x88] sm:$0xf]
      %v1105 = vld [vmem:[%s3 + $0x8c] sm:$0xf]
      %v1106 = vld [vmem:[%s3 + $0x90] sm:$0xf]
      %v1107 = vld [vmem:[%s3 + $0x94] sm:$0xf]
      %v1108 = vld [vmem:[%s3 + $0x98] sm:$0xf]
      %v1109 = vld [vmem:[%s3 + $0x9c] sm:$0xf]
      %v1110 = vld [vmem:[%s3 + $0xa0] sm:$0xf]
      %v1111 = vld [vmem:[%s3 + $0xa4] sm:$0xf]
      %v1112 = vld [vmem:[%s3 + $0xa8] sm:$0xf]
      %v1113 = vld [vmem:[%s3 + $0xac] sm:$0xf]
      %v1114 = vld [vmem:[%s3 + $0xb0] sm:$0xf]
      %v1115 = vld [vmem:[%s3 + $0xb4] sm:$0xf]
      %v1116 = vld [vmem:[%s3 + $0xb8] sm:$0xf]
      %v1117 = vld [vmem:[%s3 + $0xbc] sm:$0xf]
      %v1118 = vld [vmem:[%s4] sm:$0x1]
      %v1119 = vpack.c.bf16 %v1069, %v1069
      %v1121 = vunpack.c.l.b16 %v1119
      %v1122 = vpack.c.b16 %v1121, %v1121
      %v1124 = vshrl.u32 %v1122, 16
      %v1126 = vrot.slane %v1124, 7
      %v1127 = vshll.u32 %v1122, 16
      %v1129 = vor.u32 %v1126, %v1127
      %vm1131 = vcmask 1043456
      %vm1132 = vsmask.f32 7938
      %vm1133 = vmand %vm1131, %vm1132
      %v1134 = vld [vmem:[#allocation2] sm:$0xf]
      %v1135 = vsel %vm1133, %v1129, %v1134
      %1136 = vst [vmem:[#allocation2] sm:$0xf] %v1135
      %1137 = vst [vmem:[#allocation2 + $0x4] sm:$0xf] %v1119
      %v1138 = vrot.slane %v1124, 4
      %v1139 = vrot.slane %v1127, 5
      %v1140 = vor.u32 %v1138, %v1139
      %v1141 = vrot.slane %v1140, 4
      %vm1143 = vsmask.f32 3328
      %vm1144 = vmand %vm1131, %vm1143
      %v1145 = vld [vmem:[#allocation2 + $0x8] sm:$0xf]
      %v1146 = vsel %vm1144, %v1141, %v1145
      %1147 = vst [vmem:[#allocation2 + $0x8] sm:$0xf] %v1146
      %v1148 = vld [vmem:[#allocation2] sm:$0xff]
      %v1149 = vld [vmem:[#allocation2 + $0x8] sm:$0xf]
      %v1151 = vlaneseq
      %v1152 = vshrl.u32 %v1151, 7
      %v1153 = vsub.s32 0, %v1152
      %v1154 = vrot.slane %v1118, %v1153
      %v1158 = vunpack.c.l.b16 %v1148
      %v1159 = vunpack.c.h.b16 %v1148
      %v1160 = vunpack.c.l.b16 %v1149
      %v1161 = vpack.c.b16 %v1158, %v1158
      %v1162 = vpack.c.b16 %v1159, %v1159
      %v1163 = vpack.c.b16 %v1160, %v1160
      %v1215 = vunpack.c.l.b16 %v1070
      %v1216 = vunpack.c.l.b16 %v1071
      %v1217 = vunpack.c.l.b16 %v1072
      %v1218 = vunpack.c.l.b16 %v1073
      %v1219 = vunpack.c.l.b16 %v1074
      %v1220 = vunpack.c.l.b16 %v1075
      %v1221 = vunpack.c.l.b16 %v1076
      %v1222 = vunpack.c.l.b16 %v1077
      %v1223 = vunpack.c.l.b16 %v1078
      %v1224 = vunpack.c.l.b16 %v1079
      %v1225 = vunpack.c.l.b16 %v1080
      %v1226 = vunpack.c.l.b16 %v1081
      %v1227 = vunpack.c.l.b16 %v1082
      %v1228 = vunpack.c.l.b16 %v1083
      %v1229 = vunpack.c.l.b16 %v1084
      %v1230 = vunpack.c.l.b16 %v1085
      %v1231 = vunpack.c.l.b16 %v1086
      %v1232 = vunpack.c.l.b16 %v1087
      %v1233 = vunpack.c.l.b16 %v1088
      %v1234 = vunpack.c.l.b16 %v1089
      %v1235 = vunpack.c.l.b16 %v1090
      %v1236 = vunpack.c.l.b16 %v1091
      %v1237 = vunpack.c.l.b16 %v1092
      %v1238 = vunpack.c.l.b16 %v1093
      %v1239 = vunpack.c.l.b16 %v1094
      %v1240 = vunpack.c.l.b16 %v1095
      %v1241 = vunpack.c.l.b16 %v1096
      %v1242 = vunpack.c.l.b16 %v1097
      %v1243 = vunpack.c.l.b16 %v1098
      %v1244 = vunpack.c.l.b16 %v1099
      %v1245 = vunpack.c.l.b16 %v1100
      %v1246 = vunpack.c.l.b16 %v1101
      %v1247 = vunpack.c.l.b16 %v1102
      %v1248 = vunpack.c.l.b16 %v1103
      %v1249 = vunpack.c.l.b16 %v1104
      %v1250 = vunpack.c.l.b16 %v1105
      %v1251 = vunpack.c.l.b16 %v1106
      %v1252 = vunpack.c.l.b16 %v1107
      %v1253 = vunpack.c.l.b16 %v1108
      %v1254 = vunpack.c.l.b16 %v1109
      %v1255 = vunpack.c.l.b16 %v1110
      %v1256 = vunpack.c.l.b16 %v1111
      %v1257 = vunpack.c.l.b16 %v1112
      %v1258 = vunpack.c.l.b16 %v1113
      %v1259 = vunpack.c.l.b16 %v1114
      %v1260 = vunpack.c.l.b16 %v1115
      %v1261 = vunpack.c.l.b16 %v1116
      %v1262 = vunpack.c.l.b16 %v1117
      %v1263 = vpack.c.b16 %v1216, %v1215
      %v1264 = vpack.c.b16 %v1218, %v1217
      %v1265 = vpack.c.b16 %v1220, %v1219
      %v1266 = vpack.c.b16 %v1222, %v1221
      %v1267 = vpack.c.b16 %v1224, %v1223
      %v1268 = vpack.c.b16 %v1226, %v1225
      %v1269 = vpack.c.b16 %v1228, %v1227
      %v1270 = vpack.c.b16 %v1230, %v1229
      %v1271 = vpack.c.b16 %v1232, %v1231
      %v1272 = vpack.c.b16 %v1234, %v1233
      %v1273 = vpack.c.b16 %v1236, %v1235
      %v1274 = vpack.c.b16 %v1238, %v1237
      %v1275 = vpack.c.b16 %v1240, %v1239
      %v1276 = vpack.c.b16 %v1242, %v1241
      %v1277 = vpack.c.b16 %v1244, %v1243
      %v1278 = vpack.c.b16 %v1246, %v1245
      %v1279 = vpack.c.b16 %v1248, %v1247
      %v1280 = vpack.c.b16 %v1250, %v1249
      %v1281 = vpack.c.b16 %v1252, %v1251
      %v1282 = vpack.c.b16 %v1254, %v1253
      %v1283 = vpack.c.b16 %v1256, %v1255
      %v1284 = vpack.c.b16 %v1258, %v1257
      %v1285 = vpack.c.b16 %v1260, %v1259
      %v1286 = vpack.c.b16 %v1262, %v1261
      %1311 = vmatprep.subr.bf16.mxu0 0
      %1312 = vmatpush1.bf16.msra.mxu0 %v1263
      %1313 = vmatprep.subr.bf16.mxu0 0
      %1314 = vmatpush1.bf16.msra.mxu0 %v1264
      %1315 = vmatprep.subr.bf16.mxu0 0
      %1316 = vmatpush1.bf16.msra.mxu0 %v1265
      %1317 = vmatprep.subr.bf16.mxu0 0
      %1318 = vmatpush1.bf16.msra.mxu0 %v1266
      %1319 = vmatprep.subr.bf16.mxu0 0
      %1320 = vmatpush1.bf16.msra.mxu0 %v1267
      %1321 = vmatprep.subr.bf16.mxu0 0
      %1322 = vmatpush1.bf16.msra.mxu0 %v1268
      %1323 = vmatprep.subr.bf16.mxu0 0
      %1324 = vmatpush1.bf16.msra.mxu0 %v1269
      %1325 = vmatprep.subr.bf16.mxu0 0
      %1326 = vmatpush1.bf16.msra.mxu0 %v1270
      %1327 = vmatprep.subr.bf16.mxu0 0
      %1328 = vmatpush1.bf16.msra.mxu0 %v1271
      %1329 = vmatprep.subr.bf16.mxu0 0
      %1330 = vmatpush1.bf16.msra.mxu0 %v1272
      %1331 = vmatprep.subr.bf16.mxu0 0
      %1332 = vmatpush1.bf16.msra.mxu0 %v1273
      %1333 = vmatprep.subr.bf16.mxu0 0
      %1334 = vmatpush1.bf16.msra.mxu0 %v1274
      %1335 = vmatprep.subr.bf16.mxu0 0
      %1336 = vmatpush1.bf16.msra.mxu0 %v1275
      %1337 = vmatprep.subr.bf16.mxu0 0
      %1338 = vmatpush1.bf16.msra.mxu0 %v1276
      %1339 = vmatprep.subr.bf16.mxu0 0
      %1340 = vmatpush1.bf16.msra.mxu0 %v1277
      %1341 = vmatprep.subr.bf16.mxu0 0
      %1342 = vmatpush1.bf16.msra.mxu0 %v1278
      %1343 = vmatprep.mubr.bf16.mxu0 %v1162
      %1344 = vmatmul.mubr.bf16.gmra.mrb[0].mxu0 %v1161
      %v1345 = vpop.f32.mrb[0].mxu0
      %v1346 = vadd.f32 %v1154, %v1345
      %v1347 = vpop.f32.mrb[0].mxu0
      %v1348 = vpop.f32.mrb[0].mxu0
      %v1349 = vpop.f32.mrb[0].mxu0
      %1350 = vdwg.mxu0
      %1351 = vmatprep.subr.bf16.mxu0 0
      %1352 = vmatpush1.bf16.msra.mxu0 %v1279
      %1353 = vmatprep.subr.bf16.mxu0 0
      %1354 = vmatpush1.bf16.msra.mxu0 %v1280
      %1355 = vmatprep.subr.bf16.mxu0 0
      %1356 = vmatpush1.bf16.msra.mxu0 %v1281
      %1357 = vmatprep.subr.bf16.mxu0 0
      %1358 = vmatpush1.bf16.msra.mxu0 %v1282
      %1359 = vmatprep.subr.bf16.mxu0 0
      %1360 = vmatpush1.bf16.msra.mxu0 %v1283
      %1361 = vmatprep.subr.bf16.mxu0 0
      %1362 = vmatpush1.bf16.msra.mxu0 %v1284
      %1363 = vmatprep.subr.bf16.mxu0 0
      %1364 = vmatpush1.bf16.msra.mxu0 %v1285
      %1365 = vmatprep.subr.bf16.mxu0 0
      %1366 = vmatpush1.bf16.msra.mxu0 %v1286
      %1367 = vmatprep.subr.bf16.mxu0 0
      %1368 = vmatpush1.bf16.msra.mxu0 0
      %1369 = vmatprep.subr.bf16.mxu0 0
      %1370 = vmatpush1.bf16.msra.mxu0 0
      %1371 = vmatprep.subr.bf16.mxu0 0
      %1372 = vmatpush1.bf16.msra.mxu0 0
      %1373 = vmatprep.subr.bf16.mxu0 0
      %1374 = vmatpush1.bf16.msra.mxu0 0
      %1375 = vmatprep.subr.bf16.mxu0 0
      %1376 = vmatpush1.bf16.msra.mxu0 0
      %1377 = vmatprep.subr.bf16.mxu0 0
      %1378 = vmatpush1.bf16.msra.mxu0 0
      %1379 = vmatprep.subr.bf16.mxu0 0
      %1380 = vmatpush1.bf16.msra.mxu0 0
      %1381 = vmatprep.subr.bf16.mxu0 0
      %1382 = vmatpush1.bf16.msra.mxu0 0
      %1383 = vmatprep.mubr.bf16.mxu0 0
      %1384 = vmatmul.mubr.bf16.gmra.mrb[0].mxu0 %v1163
      %v1385 = vpop.f32.mrb[0].mxu0
      %v1386 = vadd.f32 %v1346, %v1385
      %v1387 = vpop.f32.mrb[0].mxu0
      %v1388 = vpop.f32.mrb[0].mxu0
      %v1389 = vpop.f32.mrb[0].mxu0
      %1390 = vdwg.mxu0
      %v1391 = vmax.f32 %v1386, 0.0
      %s1392 = scalar_lea.vmem %s3, 192
      %v1393 = vld [vmem:[%s1392] sm:$0xf]
      %v1394 = vld [vmem:[%s1392 + $0x4] sm:$0xf]
      %v1395 = vld [vmem:[%s1392 + $0x8] sm:$0xf]
      %v1396 = vld [vmem:[%s1392 + $0xc] sm:$0xf]
      %v1397 = vld [vmem:[%s1392 + $0x10] sm:$0xf]
      %v1398 = vld [vmem:[%s1392 + $0x14] sm:$0xf]
      %v1399 = vld [vmem:[%s1392 + $0x18] sm:$0xf]
      %v1400 = vld [vmem:[%s1392 + $0x1c] sm:$0xf]
      %v1401 = vld [vmem:[%s1392 + $0x20] sm:$0xf]
      %v1402 = vld [vmem:[%s1392 + $0x24] sm:$0xf]
      %v1403 = vld [vmem:[%s1392 + $0x28] sm:$0xf]
      %v1404 = vld [vmem:[%s1392 + $0x2c] sm:$0xf]
      %v1405 = vld [vmem:[%s1392 + $0x30] sm:$0xf]
      %v1406 = vld [vmem:[%s1392 + $0x34] sm:$0xf]
      %v1407 = vld [vmem:[%s1392 + $0x38] sm:$0xf]
      %v1408 = vld [vmem:[%s1392 + $0x3c] sm:$0xf]
      %v1409 = vld [vmem:[%s1392 + $0x40] sm:$0xf]
      %v1410 = vld [vmem:[%s1392 + $0x44] sm:$0xf]
      %v1411 = vld [vmem:[%s1392 + $0x48] sm:$0xf]
      %v1412 = vld [vmem:[%s1392 + $0x4c] sm:$0xf]
      %v1413 = vld [vmem:[%s1392 + $0x50] sm:$0xf]
      %v1414 = vld [vmem:[%s1392 + $0x54] sm:$0xf]
      %v1415 = vld [vmem:[%s1392 + $0x58] sm:$0xf]
      %v1416 = vld [vmem:[%s1392 + $0x5c] sm:$0xf]
      %v1417 = vld [vmem:[%s1392 + $0x60] sm:$0xf]
      %v1418 = vld [vmem:[%s1392 + $0x64] sm:$0xf]
      %v1419 = vld [vmem:[%s1392 + $0x68] sm:$0xf]
      %v1420 = vld [vmem:[%s1392 + $0x6c] sm:$0xf]
      %v1421 = vld [vmem:[%s1392 + $0x70] sm:$0xf]
      %v1422 = vld [vmem:[%s1392 + $0x74] sm:$0xf]
      %v1423 = vld [vmem:[%s1392 + $0x78] sm:$0xf]
      %v1424 = vld [vmem:[%s1392 + $0x7c] sm:$0xf]
      %v1425 = vld [vmem:[%s1392 + $0x80] sm:$0xf]
      %v1426 = vld [vmem:[%s1392 + $0x84] sm:$0xf]
      %v1427 = vld [vmem:[%s1392 + $0x88] sm:$0xf]
      %v1428 = vld [vmem:[%s1392 + $0x8c] sm:$0xf]
      %v1429 = vld [vmem:[%s1392 + $0x90] sm:$0xf]
      %v1430 = vld [vmem:[%s1392 + $0x94] sm:$0xf]
      %v1431 = vld [vmem:[%s1392 + $0x98] sm:$0xf]
      %v1432 = vld [vmem:[%s1392 + $0x9c] sm:$0xf]
      %v1433 = vld [vmem:[%s1392 + $0xa0] sm:$0xf]
      %v1434 = vld [vmem:[%s1392 + $0xa4] sm:$0xf]
      %v1435 = vld [vmem:[%s1392 + $0xa8] sm:$0xf]
      %v1436 = vld [vmem:[%s1392 + $0xac] sm:$0xf]
      %v1437 = vld [vmem:[%s1392 + $0xb0] sm:$0xf]
      %v1438 = vld [vmem:[%s1392 + $0xb4] sm:$0xf]
      %v1439 = vld [vmem:[%s1392 + $0xb8] sm:$0xf]
      %v1440 = vld [vmem:[%s1392 + $0xbc] sm:$0xf]
      %s1441 = scalar_lea.vmem %s4, 1
      %v1442 = vld [vmem:[%s1441] sm:$0x1]
      %v1443 = vpack.c.bf16 %v1391, %v1391
      %v1445 = vunpack.c.l.b16 %v1443
      %v1446 = vpack.c.b16 %v1445, %v1445
      %v1448 = vshrl.u32 %v1446, 16
      %v1450 = vrot.slane %v1448, 7
      %v1451 = vshll.u32 %v1446, 16
      %v1453 = vor.u32 %v1450, %v1451
      %v1455 = vld [vmem:[#allocation2] sm:$0xf]
      %v1456 = vsel %vm1133, %v1453, %v1455
      %1457 = vst [vmem:[#allocation2] sm:$0xf] %v1456
      %1458 = vst [vmem:[#allocation2 + $0x4] sm:$0xf] %v1443
      %v1459 = vrot.slane %v1448, 4
      %v1460 = vrot.slane %v1451, 5
      %v1461 = vor.u32 %v1459, %v1460
      %v1462 = vrot.slane %v1461, 4
      %v1464 = vld [vmem:[#allocation2 + $0x8] sm:$0xf]
      %v1465 = vsel %vm1144, %v1462, %v1464
      %1466 = vst [vmem:[#allocation2 + $0x8] sm:$0xf] %v1465
      %v1467 = vld [vmem:[#allocation2] sm:$0xff]
      %v1468 = vld [vmem:[#allocation2 + $0x8] sm:$0xf]
      %v1470 = vlaneseq
      %v1471 = vshrl.u32 %v1470, 7
      %v1472 = vsub.s32 0, %v1471
      %v1473 = vrot.slane %v1442, %v1472
      %v1477 = vunpack.c.l.b16 %v1467
      %v1478 = vunpack.c.h.b16 %v1467
      %v1479 = vunpack.c.l.b16 %v1468
      %v1480 = vpack.c.b16 %v1477, %v1477
      %v1481 = vpack.c.b16 %v1478, %v1478
      %v1482 = vpack.c.b16 %v1479, %v1479
      %v1534 = vunpack.c.l.b16 %v1393
      %v1535 = vunpack.c.l.b16 %v1394
      %v1536 = vunpack.c.l.b16 %v1395
      %v1537 = vunpack.c.l.b16 %v1396
      %v1538 = vunpack.c.l.b16 %v1397
      %v1539 = vunpack.c.l.b16 %v1398
      %v1540 = vunpack.c.l.b16 %v1399
      %v1541 = vunpack.c.l.b16 %v1400
      %v1542 = vunpack.c.l.b16 %v1401
      %v1543 = vunpack.c.l.b16 %v1402
      %v1544 = vunpack.c.l.b16 %v1403
      %v1545 = vunpack.c.l.b16 %v1404
      %v1546 = vunpack.c.l.b16 %v1405
      %v1547 = vunpack.c.l.b16 %v1406
      %v1548 = vunpack.c.l.b16 %v1407
      %v1549 = vunpack.c.l.b16 %v1408
      %v1550 = vunpack.c.l.b16 %v1409
      %v1551 = vunpack.c.l.b16 %v1410
      %v1552 = vunpack.c.l.b16 %v1411
      %v1553 = vunpack.c.l.b16 %v1412
      %v1554 = vunpack.c.l.b16 %v1413
      %v1555 = vunpack.c.l.b16 %v1414
      %v1556 = vunpack.c.l.b16 %v1415
      %v1557 = vunpack.c.l.b16 %v1416
      %v1558 = vunpack.c.l.b16 %v1417
      %v1559 = vunpack.c.l.b16 %v1418
      %v1560 = vunpack.c.l.b16 %v1419
      %v1561 = vunpack.c.l.b16 %v1420
      %v1562 = vunpack.c.l.b16 %v1421
      %v1563 = vunpack.c.l.b16 %v1422
      %v1564 = vunpack.c.l.b16 %v1423
      %v1565 = vunpack.c.l.b16 %v1424
      %v1566 = vunpack.c.l.b16 %v1425
      %v1567 = vunpack.c.l.b16 %v1426
      %v1568 = vunpack.c.l.b16 %v1427
      %v1569 = vunpack.c.l.b16 %v1428
      %v1570 = vunpack.c.l.b16 %v1429
      %v1571 = vunpack.c.l.b16 %v1430
      %v1572 = vunpack.c.l.b16 %v1431
      %v1573 = vunpack.c.l.b16 %v1432
      %v1574 = vunpack.c.l.b16 %v1433
      %v1575 = vunpack.c.l.b16 %v1434
      %v1576 = vunpack.c.l.b16 %v1435
      %v1577 = vunpack.c.l.b16 %v1436
      %v1578 = vunpack.c.l.b16 %v1437
      %v1579 = vunpack.c.l.b16 %v1438
      %v1580 = vunpack.c.l.b16 %v1439
      %v1581 = vunpack.c.l.b16 %v1440
      %v1582 = vpack.c.b16 %v1535, %v1534
      %v1583 = vpack.c.b16 %v1537, %v1536
      %v1584 = vpack.c.b16 %v1539, %v1538
      %v1585 = vpack.c.b16 %v1541, %v1540
      %v1586 = vpack.c.b16 %v1543, %v1542
      %v1587 = vpack.c.b16 %v1545, %v1544
      %v1588 = vpack.c.b16 %v1547, %v1546
      %v1589 = vpack.c.b16 %v1549, %v1548
      %v1590 = vpack.c.b16 %v1551, %v1550
      %v1591 = vpack.c.b16 %v1553, %v1552
      %v1592 = vpack.c.b16 %v1555, %v1554
      %v1593 = vpack.c.b16 %v1557, %v1556
      %v1594 = vpack.c.b16 %v1559, %v1558
      %v1595 = vpack.c.b16 %v1561, %v1560
      %v1596 = vpack.c.b16 %v1563, %v1562
      %v1597 = vpack.c.b16 %v1565, %v1564
      %v1598 = vpack.c.b16 %v1567, %v1566
      %v1599 = vpack.c.b16 %v1569, %v1568
      %v1600 = vpack.c.b16 %v1571, %v1570
      %v1601 = vpack.c.b16 %v1573, %v1572
      %v1602 = vpack.c.b16 %v1575, %v1574
      %v1603 = vpack.c.b16 %v1577, %v1576
      %v1604 = vpack.c.b16 %v1579, %v1578
      %v1605 = vpack.c.b16 %v1581, %v1580
      %1630 = vmatprep.subr.bf16.mxu0 0
      %1631 = vmatpush1.bf16.msra.mxu0 %v1582
      %1632 = vmatprep.subr.bf16.mxu0 0
      %1633 = vmatpush1.bf16.msra.mxu0 %v1583
      %1634 = vmatprep.subr.bf16.mxu0 0
      %1635 = vmatpush1.bf16.msra.mxu0 %v1584
      %1636 = vmatprep.subr.bf16.mxu0 0
      %1637 = vmatpush1.bf16.msra.mxu0 %v1585
      %1638 = vmatprep.subr.bf16.mxu0 0
      %1639 = vmatpush1.bf16.msra.mxu0 %v1586
      %1640 = vmatprep.subr.bf16.mxu0 0
      %1641 = vmatpush1.bf16.msra.mxu0 %v1587
      %1642 = vmatprep.subr.bf16.mxu0 0
      %1643 = vmatpush1.bf16.msra.mxu0 %v1588
      %1644 = vmatprep.subr.bf16.mxu0 0
      %1645 = vmatpush1.bf16.msra.mxu0 %v1589
      %1646 = vmatprep.subr.bf16.mxu0 0
      %1647 = vmatpush1.bf16.msra.mxu0 %v1590
      %1648 = vmatprep.subr.bf16.mxu0 0
      %1649 = vmatpush1.bf16.msra.mxu0 %v1591
      %1650 = vmatprep.subr.bf16.mxu0 0
      %1651 = vmatpush1.bf16.msra.mxu0 %v1592
      %1652 = vmatprep.subr.bf16.mxu0 0
      %1653 = vmatpush1.bf16.msra.mxu0 %v1593
      %1654 = vmatprep.subr.bf16.mxu0 0
      %1655 = vmatpush1.bf16.msra.mxu0 %v1594
      %1656 = vmatprep.subr.bf16.mxu0 0
      %1657 = vmatpush1.bf16.msra.mxu0 %v1595
      %1658 = vmatprep.subr.bf16.mxu0 0
      %1659 = vmatpush1.bf16.msra.mxu0 %v1596
      %1660 = vmatprep.subr.bf16.mxu0 0
      %1661 = vmatpush1.bf16.msra.mxu0 %v1597
      %1662 = vmatprep.mubr.bf16.mxu0 %v1481
      %1663 = vmatmul.mubr.bf16.gmra.mrb[0].mxu0 %v1480
      %v1664 = vpop.f32.mrb[0].mxu0
      %v1665 = vadd.f32 %v1473, %v1664
      %v1666 = vpop.f32.mrb[0].mxu0
      %v1667 = vpop.f32.mrb[0].mxu0
      %v1668 = vpop.f32.mrb[0].mxu0
      %1669 = vdwg.mxu0
      %1670 = vmatprep.subr.bf16.mxu0 0
      %1671 = vmatpush1.bf16.msra.mxu0 %v1598
      %1672 = vmatprep.subr.bf16.mxu0 0
      %1673 = vmatpush1.bf16.msra.mxu0 %v1599
      %1674 = vmatprep.subr.bf16.mxu0 0
      %1675 = vmatpush1.bf16.msra.mxu0 %v1600
      %1676 = vmatprep.subr.bf16.mxu0 0
      %1677 = vmatpush1.bf16.msra.mxu0 %v1601
      %1678 = vmatprep.subr.bf16.mxu0 0
      %1679 = vmatpush1.bf16.msra.mxu0 %v1602
      %1680 = vmatprep.subr.bf16.mxu0 0
      %1681 = vmatpush1.bf16.msra.mxu0 %v1603
      %1682 = vmatprep.subr.bf16.mxu0 0
      %1683 = vmatpush1.bf16.msra.mxu0 %v1604
      %1684 = vmatprep.subr.bf16.mxu0 0
      %1685 = vmatpush1.bf16.msra.mxu0 %v1605
      %1686 = vmatprep.subr.bf16.mxu0 0
      %1687 = vmatpush1.bf16.msra.mxu0 0
      %1688 = vmatprep.subr.bf16.mxu0 0
      %1689 = vmatpush1.bf16.msra.mxu0 0
      %1690 = vmatprep.subr.bf16.mxu0 0
      %1691 = vmatpush1.bf16.msra.mxu0 0
      %1692 = vmatprep.subr.bf16.mxu0 0
      %1693 = vmatpush1.bf16.msra.mxu0 0
      %1694 = vmatprep.subr.bf16.mxu0 0
      %1695 = vmatpush1.bf16.msra.mxu0 0
      %1696 = vmatprep.subr.bf16.mxu0 0
      %1697 = vmatpush1.bf16.msra.mxu0 0
      %1698 = vmatprep.subr.bf16.mxu0 0
      %1699 = vmatpush1.bf16.msra.mxu0 0
      %1700 = vmatprep.subr.bf16.mxu0 0
      %1701 = vmatpush1.bf16.msra.mxu0 0
      %1702 = vmatprep.mubr.bf16.mxu0 0
      %1703 = vmatmul.mubr.bf16.gmra.mrb[0].mxu0 %v1482
      %v1704 = vpop.f32.mrb[0].mxu0
      %v1705 = vadd.f32 %v1665, %v1704
      %v1706 = vpop.f32.mrb[0].mxu0
      %v1707 = vpop.f32.mrb[0].mxu0
      %v1708 = vpop.f32.mrb[0].mxu0
      %1709 = vdwg.mxu0
      %v1710 = vadd.f32 %v1705, %v1069
      %v1711 = vmax.f32 %v1710, 0.0
      %s1712 = scalar_lea.vmem %s3, 384
      %v1713 = vld [vmem:[%s1712] sm:$0xf]
      %v1714 = vld [vmem:[%s1712 + $0x4] sm:$0xf]
      %v1715 = vld [vmem:[%s1712 + $0x8] sm:$0xf]
      %v1716 = vld [vmem:[%s1712 + $0xc] sm:$0xf]
      %v1717 = vld [vmem:[%s1712 + $0x10] sm:$0xf]
      %v1718 = vld [vmem:[%s1712 + $0x14] sm:$0xf]
      %v1719 = vld [vmem:[%s1712 + $0x18] sm:$0xf]
      %v1720 = vld [vmem:[%s1712 + $0x1c] sm:$0xf]
      %v1721 = vld [vmem:[%s1712 + $0x20] sm:$0xf]
      %v1722 = vld [vmem:[%s1712 + $0x24] sm:$0xf]
      %v1723 = vld [vmem:[%s1712 + $0x28] sm:$0xf]
      %v1724 = vld [vmem:[%s1712 + $0x2c] sm:$0xf]
      %v1725 = vld [vmem:[%s1712 + $0x30] sm:$0xf]
      %v1726 = vld [vmem:[%s1712 + $0x34] sm:$0xf]
      %v1727 = vld [vmem:[%s1712 + $0x38] sm:$0xf]
      %v1728 = vld [vmem:[%s1712 + $0x3c] sm:$0xf]
      %v1729 = vld [vmem:[%s1712 + $0x40] sm:$0xf]
      %v1730 = vld [vmem:[%s1712 + $0x44] sm:$0xf]
      %v1731 = vld [vmem:[%s1712 + $0x48] sm:$0xf]
      %v1732 = vld [vmem:[%s1712 + $0x4c] sm:$0xf]
      %v1733 = vld [vmem:[%s1712 + $0x50] sm:$0xf]
      %v1734 = vld [vmem:[%s1712 + $0x54] sm:$0xf]
      %v1735 = vld [vmem:[%s1712 + $0x58] sm:$0xf]
      %v1736 = vld [vmem:[%s1712 + $0x5c] sm:$0xf]
      %v1737 = vld [vmem:[%s1712 + $0x60] sm:$0xf]
      %v1738 = vld [vmem:[%s1712 + $0x64] sm:$0xf]
      %v1739 = vld [vmem:[%s1712 + $0x68] sm:$0xf]
      %v1740 = vld [vmem:[%s1712 + $0x6c] sm:$0xf]
      %v1741 = vld [vmem:[%s1712 + $0x70] sm:$0xf]
      %v1742 = vld [vmem:[%s1712 + $0x74] sm:$0xf]
      %v1743 = vld [vmem:[%s1712 + $0x78] sm:$0xf]
      %v1744 = vld [vmem:[%s1712 + $0x7c] sm:$0xf]
      %v1745 = vld [vmem:[%s1712 + $0x80] sm:$0xf]
      %v1746 = vld [vmem:[%s1712 + $0x84] sm:$0xf]
      %v1747 = vld [vmem:[%s1712 + $0x88] sm:$0xf]
      %v1748 = vld [vmem:[%s1712 + $0x8c] sm:$0xf]
      %v1749 = vld [vmem:[%s1712 + $0x90] sm:$0xf]
      %v1750 = vld [vmem:[%s1712 + $0x94] sm:$0xf]
      %v1751 = vld [vmem:[%s1712 + $0x98] sm:$0xf]
      %v1752 = vld [vmem:[%s1712 + $0x9c] sm:$0xf]
      %v1753 = vld [vmem:[%s1712 + $0xa0] sm:$0xf]
      %v1754 = vld [vmem:[%s1712 + $0xa4] sm:$0xf]
      %v1755 = vld [vmem:[%s1712 + $0xa8] sm:$0xf]
      %v1756 = vld [vmem:[%s1712 + $0xac] sm:$0xf]
      %v1757 = vld [vmem:[%s1712 + $0xb0] sm:$0xf]
      %v1758 = vld [vmem:[%s1712 + $0xb4] sm:$0xf]
      %v1759 = vld [vmem:[%s1712 + $0xb8] sm:$0xf]
      %v1760 = vld [vmem:[%s1712 + $0xbc] sm:$0xf]
      %s1761 = scalar_lea.vmem %s4, 2
      %v1762 = vld [vmem:[%s1761] sm:$0x1]
      %v1763 = vpack.c.bf16 %v1711, %v1711
      %v1765 = vunpack.c.l.b16 %v1763
      %v1766 = vpack.c.b16 %v1765, %v1765
      %v1768 = vshrl.u32 %v1766, 16
      %v1770 = vrot.slane %v1768, 7
      %v1771 = vshll.u32 %v1766, 16
      %v1773 = vor.u32 %v1770, %v1771
      %v1775 = vld [vmem:[#allocation2] sm:$0xf]
      %v1776 = vsel %vm1133, %v1773, %v1775
      %1777 = vst [vmem:[#allocation2] sm:$0xf] %v1776
      %1778 = vst [vmem:[#allocation2 + $0x4] sm:$0xf] %v1763
      %v1779 = vrot.slane %v1768, 4
      %v1780 = vrot.slane %v1771, 5
      %v1781 = vor.u32 %v1779, %v1780
      %v1782 = vrot.slane %v1781, 4
      %v1784 = vld [vmem:[#allocation2 + $0x8] sm:$0xf]
      %v1785 = vsel %vm1144, %v1782, %v1784
      %1786 = vst [vmem:[#allocation2 + $0x8] sm:$0xf] %v1785
      %v1787 = vld [vmem:[#allocation2] sm:$0xff]
      %v1788 = vld [vmem:[#allocation2 + $0x8] sm:$0xf]
      %v1790 = vlaneseq
      %v1791 = vshrl.u32 %v1790, 7
      %v1792 = vsub.s32 0, %v1791
      %v1793 = vrot.slane %v1762, %v1792
      %v1797 = vunpack.c.l.b16 %v1787
      %v1798 = vunpack.c.h.b16 %v1787
      %v1799 = vunpack.c.l.b16 %v1788
      %v1800 = vpack.c.b16 %v1797, %v1797
      %v1801 = vpack.c.b16 %v1798, %v1798
      %v1802 = vpack.c.b16 %v1799, %v1799
      %v1854 = vunpack.c.l.b16 %v1713
      %v1855 = vunpack.c.l.b16 %v1714
      %v1856 = vunpack.c.l.b16 %v1715
      %v1857 = vunpack.c.l.b16 %v1716
      %v1858 = vunpack.c.l.b16 %v1717
      %v1859 = vunpack.c.l.b16 %v1718
      %v1860 = vunpack.c.l.b16 %v1719
      %v1861 = vunpack.c.l.b16 %v1720
      %v1862 = vunpack.c.l.b16 %v1721
      %v1863 = vunpack.c.l.b16 %v1722
      %v1864 = vunpack.c.l.b16 %v1723
      %v1865 = vunpack.c.l.b16 %v1724
      %v1866 = vunpack.c.l.b16 %v1725
      %v1867 = vunpack.c.l.b16 %v1726
      %v1868 = vunpack.c.l.b16 %v1727
      %v1869 = vunpack.c.l.b16 %v1728
      %v1870 = vunpack.c.l.b16 %v1729
      %v1871 = vunpack.c.l.b16 %v1730
      %v1872 = vunpack.c.l.b16 %v1731
      %v1873 = vunpack.c.l.b16 %v1732
      %v1874 = vunpack.c.l.b16 %v1733
      %v1875 = vunpack.c.l.b16 %v1734
      %v1876 = vunpack.c.l.b16 %v1735
      %v1877 = vunpack.c.l.b16 %v1736
      %v1878 = vunpack.c.l.b16 %v1737
      %v1879 = vunpack.c.l.b16 %v1738
      %v1880 = vunpack.c.l.b16 %v1739
      %v1881 = vunpack.c.l.b16 %v1740
      %v1882 = vunpack.c.l.b16 %v1741
      %v1883 = vunpack.c.l.b16 %v1742
      %v1884 = vunpack.c.l.b16 %v1743
      %v1885 = vunpack.c.l.b16 %v1744
      %v1886 = vunpack.c.l.b16 %v1745
      %v1887 = vunpack.c.l.b16 %v1746
      %v1888 = vunpack.c.l.b16 %v1747
      %v1889 = vunpack.c.l.b16 %v1748
      %v1890 = vunpack.c.l.b16 %v1749
      %v1891 = vunpack.c.l.b16 %v1750
      %v1892 = vunpack.c.l.b16 %v1751
      %v1893 = vunpack.c.l.b16 %v1752
      %v1894 = vunpack.c.l.b16 %v1753
      %v1895 = vunpack.c.l.b16 %v1754
      %v1896 = vunpack.c.l.b16 %v1755
      %v1897 = vunpack.c.l.b16 %v1756
      %v1898 = vunpack.c.l.b16 %v1757
      %v1899 = vunpack.c.l.b16 %v1758
      %v1900 = vunpack.c.l.b16 %v1759
      %v1901 = vunpack.c.l.b16 %v1760
      %v1902 = vpack.c.b16 %v1855, %v1854
      %v1903 = vpack.c.b16 %v1857, %v1856
      %v1904 = vpack.c.b16 %v1859, %v1858
      %v1905 = vpack.c.b16 %v1861, %v1860
      %v1906 = vpack.c.b16 %v1863, %v1862
      %v1907 = vpack.c.b16 %v1865, %v1864
      %v1908 = vpack.c.b16 %v1867, %v1866
      %v1909 = vpack.c.b16 %v1869, %v1868
      %v1910 = vpack.c.b16 %v1871, %v1870
      %v1911 = vpack.c.b16 %v1873, %v1872
      %v1912 = vpack.c.b16 %v1875, %v1874
      %v1913 = vpack.c.b16 %v1877, %v1876
      %v1914 = vpack.c.b16 %v1879, %v1878
      %v1915 = vpack.c.b16 %v1881, %v1880
      %v1916 = vpack.c.b16 %v1883, %v1882
      %v1917 = vpack.c.b16 %v1885, %v1884
      %v1918 = vpack.c.b16 %v1887, %v1886
      %v1919 = vpack.c.b16 %v1889, %v1888
      %v1920 = vpack.c.b16 %v1891, %v1890
      %v1921 = vpack.c.b16 %v1893, %v1892
      %v1922 = vpack.c.b16 %v1895, %v1894
      %v1923 = vpack.c.b16 %v1897, %v1896
      %v1924 = vpack.c.b16 %v1899, %v1898
      %v1925 = vpack.c.b16 %v1901, %v1900
      %1950 = vmatprep.subr.bf16.mxu0 0
      %1951 = vmatpush1.bf16.msra.mxu0 %v1902
      %1952 = vmatprep.subr.bf16.mxu0 0
      %1953 = vmatpush1.bf16.msra.mxu0 %v1903
      %1954 = vmatprep.subr.bf16.mxu0 0
      %1955 = vmatpush1.bf16.msra.mxu0 %v1904
      %1956 = vmatprep.subr.bf16.mxu0 0
      %1957 = vmatpush1.bf16.msra.mxu0 %v1905
      %1958 = vmatprep.subr.bf16.mxu0 0
      %1959 = vmatpush1.bf16.msra.mxu0 %v1906
      %1960 = vmatprep.subr.bf16.mxu0 0
      %1961 = vmatpush1.bf16.msra.mxu0 %v1907
      %1962 = vmatprep.subr.bf16.mxu0 0
      %1963 = vmatpush1.bf16.msra.mxu0 %v1908
      %1964 = vmatprep.subr.bf16.mxu0 0
      %1965 = vmatpush1.bf16.msra.mxu0 %v1909
      %1966 = vmatprep.subr.bf16.mxu0 0
      %1967 = vmatpush1.bf16.msra.mxu0 %v1910
      %1968 = vmatprep.subr.bf16.mxu0 0
      %1969 = vmatpush1.bf16.msra.mxu0 %v1911
      %1970 = vmatprep.subr.bf16.mxu0 0
      %1971 = vmatpush1.bf16.msra.mxu0 %v1912
      %1972 = vmatprep.subr.bf16.mxu0 0
      %1973 = vmatpush1.bf16.msra.mxu0 %v1913
      %1974 = vmatprep.subr.bf16.mxu0 0
      %1975 = vmatpush1.bf16.msra.mxu0 %v1914
      %1976 = vmatprep.subr.bf16.mxu0 0
      %1977 = vmatpush1.bf16.msra.mxu0 %v1915
      %1978 = vmatprep.subr.bf16.mxu0 0
      %1979 = vmatpush1.bf16.msra.mxu0 %v1916
      %1980 = vmatprep.subr.bf16.mxu0 0
      %1981 = vmatpush1.bf16.msra.mxu0 %v1917
      %1982 = vmatprep.mubr.bf16.mxu0 %v1801
      %1983 = vmatmul.mubr.bf16.gmra.mrb[0].mxu0 %v1800
      %v1984 = vpop.f32.mrb[0].mxu0
      %v1985 = vadd.f32 %v1793, %v1984
      %v1986 = vpop.f32.mrb[0].mxu0
      %v1987 = vpop.f32.mrb[0].mxu0
      %v1988 = vpop.f32.mrb[0].mxu0
      %1989 = vdwg.mxu0
      %1990 = vmatprep.subr.bf16.mxu0 0
      %1991 = vmatpush1.bf16.msra.mxu0 %v1918
      %1992 = vmatprep.subr.bf16.mxu0 0
      %1993 = vmatpush1.bf16.msra.mxu0 %v1919
      %1994 = vmatprep.subr.bf16.mxu0 0
      %1995 = vmatpush1.bf16.msra.mxu0 %v1920
      %1996 = vmatprep.subr.bf16.mxu0 0
      %1997 = vmatpush1.bf16.msra.mxu0 %v1921
      %1998 = vmatprep.subr.bf16.mxu0 0
      %1999 = vmatpush1.bf16.msra.mxu0 %v1922
      %2000 = vmatprep.subr.bf16.mxu0 0
      %2001 = vmatpush1.bf16.msra.mxu0 %v1923
      %2002 = vmatprep.subr.bf16.mxu0 0
      %2003 = vmatpush1.bf16.msra.mxu0 %v1924
      %2004 = vmatprep.subr.bf16.mxu0 0
      %2005 = vmatpush1.bf16.msra.mxu0 %v1925
      %2006 = vmatprep.subr.bf16.mxu0 0
      %2007 = vmatpush1.bf16.msra.mxu0 0
      %2008 = vmatprep.subr.bf16.mxu0 0
      %2009 = vmatpush1.bf16.msra.mxu0 0
      %2010 = vmatprep.subr.bf16.mxu0 0
      %2011 = vmatpush1.bf16.msra.mxu0 0
      %2012 = vmatprep.subr.bf16.mxu0 0
      %2013 = vmatpush1.bf16.msra.mxu0 0
      %2014 = vmatprep.subr.bf16.mxu0 0
      %2015 = vmatpush1.bf16.msra.mxu0 0
      %2016 = vmatprep.subr.bf16.mxu0 0
      %2017 = vmatpush1.bf16.msra.mxu0 0
      %2018 = vmatprep.subr.bf16.mxu0 0
      %2019 = vmatpush1.bf16.msra.mxu0 0
      %2020 = vmatprep.subr.bf16.mxu0 0
      %2021 = vmatpush1.bf16.msra.mxu0 0
      %2022 = vmatprep.mubr.bf16.mxu0 0
      %2023 = vmatmul.mubr.bf16.gmra.mrb[0].mxu0 %v1802
      %v2024 = vpop.f32.mrb[0].mxu0
      %v2025 = vadd.f32 %v1985, %v2024
      %v2026 = vpop.f32.mrb[0].mxu0
      %v2027 = vpop.f32.mrb[0].mxu0
      %v2028 = vpop.f32.mrb[0].mxu0
      %2029 = vdwg.mxu0
      %v2030 = vmax.f32 %v2025, 0.0
      %s2031 = scalar_lea.vmem %s3, 576
      %v2032 = vld [vmem:[%s2031] sm:$0xf]
      %v2033 = vld [vmem:[%s2031 + $0x4] sm:$0xf]
      %v2034 = vld [vmem:[%s2031 + $0x8] sm:$0xf]
      %v2035 = vld [vmem:[%s2031 + $0xc] sm:$0xf]
      %v2036 = vld [vmem:[%s2031 + $0x10] sm:$0xf]
      %v2037 = vld [vmem:[%s2031 + $0x14] sm:$0xf]
      %v2038 = vld [vmem:[%s2031 + $0x18] sm:$0xf]
      %v2039 = vld [vmem:[%s2031 + $0x1c] sm:$0xf]
      %v2040 = vld [vmem:[%s2031 + $0x20] sm:$0xf]
      %v2041 = vld [vmem:[%s2031 + $0x24] sm:$0xf]
      %v2042 = vld [vmem:[%s2031 + $0x28] sm:$0xf]
      %v2043 = vld [vmem:[%s2031 + $0x2c] sm:$0xf]
      %v2044 = vld [vmem:[%s2031 + $0x30] sm:$0xf]
      %v2045 = vld [vmem:[%s2031 + $0x34] sm:$0xf]
      %v2046 = vld [vmem:[%s2031 + $0x38] sm:$0xf]
      %v2047 = vld [vmem:[%s2031 + $0x3c] sm:$0xf]
      %v2048 = vld [vmem:[%s2031 + $0x40] sm:$0xf]
      %v2049 = vld [vmem:[%s2031 + $0x44] sm:$0xf]
      %v2050 = vld [vmem:[%s2031 + $0x48] sm:$0xf]
      %v2051 = vld [vmem:[%s2031 + $0x4c] sm:$0xf]
      %v2052 = vld [vmem:[%s2031 + $0x50] sm:$0xf]
      %v2053 = vld [vmem:[%s2031 + $0x54] sm:$0xf]
      %v2054 = vld [vmem:[%s2031 + $0x58] sm:$0xf]
      %v2055 = vld [vmem:[%s2031 + $0x5c] sm:$0xf]
      %v2056 = vld [vmem:[%s2031 + $0x60] sm:$0xf]
      %v2057 = vld [vmem:[%s2031 + $0x64] sm:$0xf]
      %v2058 = vld [vmem:[%s2031 + $0x68] sm:$0xf]
      %v2059 = vld [vmem:[%s2031 + $0x6c] sm:$0xf]
      %v2060 = vld [vmem:[%s2031 + $0x70] sm:$0xf]
      %v2061 = vld [vmem:[%s2031 + $0x74] sm:$0xf]
      %v2062 = vld [vmem:[%s2031 + $0x78] sm:$0xf]
      %v2063 = vld [vmem:[%s2031 + $0x7c] sm:$0xf]
      %v2064 = vld [vmem:[%s2031 + $0x80] sm:$0xf]
      %v2065 = vld [vmem:[%s2031 + $0x84] sm:$0xf]
      %v2066 = vld [vmem:[%s2031 + $0x88] sm:$0xf]
      %v2067 = vld [vmem:[%s2031 + $0x8c] sm:$0xf]
      %v2068 = vld [vmem:[%s2031 + $0x90] sm:$0xf]
      %v2069 = vld [vmem:[%s2031 + $0x94] sm:$0xf]
      %v2070 = vld [vmem:[%s2031 + $0x98] sm:$0xf]
      %v2071 = vld [vmem:[%s2031 + $0x9c] sm:$0xf]
      %v2072 = vld [vmem:[%s2031 + $0xa0] sm:$0xf]
      %v2073 = vld [vmem:[%s2031 + $0xa4] sm:$0xf]
      %v2074 = vld [vmem:[%s2031 + $0xa8] sm:$0xf]
      %v2075 = vld [vmem:[%s2031 + $0xac] sm:$0xf]
      %v2076 = vld [vmem:[%s2031 + $0xb0] sm:$0xf]
      %v2077 = vld [vmem:[%s2031 + $0xb4] sm:$0xf]
      %v2078 = vld [vmem:[%s2031 + $0xb8] sm:$0xf]
      %v2079 = vld [vmem:[%s2031 + $0xbc] sm:$0xf]
      %s2080 = scalar_lea.vmem %s4, 3
      %v2081 = vld [vmem:[%s2080] sm:$0x1]
      %v2082 = vpack.c.bf16 %v2030, %v2030
      %v2084 = vunpack.c.l.b16 %v2082
      %v2085 = vpack.c.b16 %v2084, %v2084
      %v2087 = vshrl.u32 %v2085, 16
      %v2089 = vrot.slane %v2087, 7
      %v2090 = vshll.u32 %v2085, 16
      %v2092 = vor.u32 %v2089, %v2090
      %v2094 = vld [vmem:[#allocation2] sm:$0xf]
      %v2095 = vsel %vm1133, %v2092, %v2094
      %2096 = vst [vmem:[#allocation2] sm:$0xf] %v2095
      %2097 = vst [vmem:[#allocation2 + $0x4] sm:$0xf] %v2082
      %v2098 = vrot.slane %v2087, 4
      %v2099 = vrot.slane %v2090, 5
      %v2100 = vor.u32 %v2098, %v2099
      %v2101 = vrot.slane %v2100, 4
      %v2103 = vld [vmem:[#allocation2 + $0x8] sm:$0xf]
      %v2104 = vsel %vm1144, %v2101, %v2103
      %2105 = vst [vmem:[#allocation2 + $0x8] sm:$0xf] %v2104
      %v2106 = vld [vmem:[#allocation2] sm:$0xff]
      %v2107 = vld [vmem:[#allocation2 + $0x8] sm:$0xf]
      %v2109 = vlaneseq
      %v2110 = vshrl.u32 %v2109, 7
      %v2111 = vsub.s32 0, %v2110
      %v2112 = vrot.slane %v2081, %v2111
      %v2116 = vunpack.c.l.b16 %v2106
      %v2117 = vunpack.c.h.b16 %v2106
      %v2118 = vunpack.c.l.b16 %v2107
      %v2119 = vpack.c.b16 %v2116, %v2116
      %v2120 = vpack.c.b16 %v2117, %v2117
      %v2121 = vpack.c.b16 %v2118, %v2118
      %v2173 = vunpack.c.l.b16 %v2032
      %v2174 = vunpack.c.l.b16 %v2033
      %v2175 = vunpack.c.l.b16 %v2034
      %v2176 = vunpack.c.l.b16 %v2035
      %v2177 = vunpack.c.l.b16 %v2036
      %v2178 = vunpack.c.l.b16 %v2037
      %v2179 = vunpack.c.l.b16 %v2038
      %v2180 = vunpack.c.l.b16 %v2039
      %v2181 = vunpack.c.l.b16 %v2040
      %v2182 = vunpack.c.l.b16 %v2041
      %v2183 = vunpack.c.l.b16 %v2042
      %v2184 = vunpack.c.l.b16 %v2043
      %v2185 = vunpack.c.l.b16 %v2044
      %v2186 = vunpack.c.l.b16 %v2045
      %v2187 = vunpack.c.l.b16 %v2046
      %v2188 = vunpack.c.l.b16 %v2047
      %v2189 = vunpack.c.l.b16 %v2048
      %v2190 = vunpack.c.l.b16 %v2049
      %v2191 = vunpack.c.l.b16 %v2050
      %v2192 = vunpack.c.l.b16 %v2051
      %v2193 = vunpack.c.l.b16 %v2052
      %v2194 = vunpack.c.l.b16 %v2053
      %v2195 = vunpack.c.l.b16 %v2054
      %v2196 = vunpack.c.l.b16 %v2055
      %v2197 = vunpack.c.l.b16 %v2056
      %v2198 = vunpack.c.l.b16 %v2057
      %v2199 = vunpack.c.l.b16 %v2058
      %v2200 = vunpack.c.l.b16 %v2059
      %v2201 = vunpack.c.l.b16 %v2060
      %v2202 = vunpack.c.l.b16 %v2061
      %v2203 = vunpack.c.l.b16 %v2062
      %v2204 = vunpack.c.l.b16 %v2063
      %v2205 = vunpack.c.l.b16 %v2064
      %v2206 = vunpack.c.l.b16 %v2065
      %v2207 = vunpack.c.l.b16 %v2066
      %v2208 = vunpack.c.l.b16 %v2067
      %v2209 = vunpack.c.l.b16 %v2068
      %v2210 = vunpack.c.l.b16 %v2069
      %v2211 = vunpack.c.l.b16 %v2070
      %v2212 = vunpack.c.l.b16 %v2071
      %v2213 = vunpack.c.l.b16 %v2072
      %v2214 = vunpack.c.l.b16 %v2073
      %v2215 = vunpack.c.l.b16 %v2074
      %v2216 = vunpack.c.l.b16 %v2075
      %v2217 = vunpack.c.l.b16 %v2076
      %v2218 = vunpack.c.l.b16 %v2077
      %v2219 = vunpack.c.l.b16 %v2078
      %v2220 = vunpack.c.l.b16 %v2079
      %v2221 = vpack.c.b16 %v2174, %v2173
      %v2222 = vpack.c.b16 %v2176, %v2175
      %v2223 = vpack.c.b16 %v2178, %v2177
      %v2224 = vpack.c.b16 %v2180, %v2179
      %v2225 = vpack.c.b16 %v2182, %v2181
      %v2226 = vpack.c.b16 %v2184, %v2183
      %v2227 = vpack.c.b16 %v2186, %v2185
      %v2228 = vpack.c.b16 %v2188, %v2187
      %v2229 = vpack.c.b16 %v2190, %v2189
      %v2230 = vpack.c.b16 %v2192, %v2191
      %v2231 = vpack.c.b16 %v2194, %v2193
      %v2232 = vpack.c.b16 %v2196, %v2195
      %v2233 = vpack.c.b16 %v2198, %v2197
      %v2234 = vpack.c.b16 %v2200, %v2199
      %v2235 = vpack.c.b16 %v2202, %v2201
      %v2236 = vpack.c.b16 %v2204, %v2203
      %v2237 = vpack.c.b16 %v2206, %v2205
      %v2238 = vpack.c.b16 %v2208, %v2207
      %v2239 = vpack.c.b16 %v2210, %v2209
      %v2240 = vpack.c.b16 %v2212, %v2211
      %v2241 = vpack.c.b16 %v2214, %v2213
      %v2242 = vpack.c.b16 %v2216, %v2215
      %v2243 = vpack.c.b16 %v2218, %v2217
      %v2244 = vpack.c.b16 %v2220, %v2219
      %2269 = vmatprep.subr.bf16.mxu0 0
      %2270 = vmatpush1.bf16.msra.mxu0 %v2221
      %2271 = vmatprep.subr.bf16.mxu0 0
      %2272 = vmatpush1.bf16.msra.mxu0 %v2222
      %2273 = vmatprep.subr.bf16.mxu0 0
      %2274 = vmatpush1.bf16.msra.mxu0 %v2223
      %2275 = vmatprep.subr.bf16.mxu0 0
      %2276 = vmatpush1.bf16.msra.mxu0 %v2224
      %2277 = vmatprep.subr.bf16.mxu0 0
      %2278 = vmatpush1.bf16.msra.mxu0 %v2225
      %2279 = vmatprep.subr.bf16.mxu0 0
      %2280 = vmatpush1.bf16.msra.mxu0 %v2226
      %2281 = vmatprep.subr.bf16.mxu0 0
      %2282 = vmatpush1.bf16.msra.mxu0 %v2227
      %2283 = vmatprep.subr.bf16.mxu0 0
      %2284 = vmatpush1.bf16.msra.mxu0 %v2228
      %2285 = vmatprep.subr.bf16.mxu0 0
      %2286 = vmatpush1.bf16.msra.mxu0 %v2229
      %2287 = vmatprep.subr.bf16.mxu0 0
      %2288 = vmatpush1.bf16.msra.mxu0 %v2230
      %2289 = vmatprep.subr.bf16.mxu0 0
      %2290 = vmatpush1.bf16.msra.mxu0 %v2231
      %2291 = vmatprep.subr.bf16.mxu0 0
      %2292 = vmatpush1.bf16.msra.mxu0 %v2232
      %2293 = vmatprep.subr.bf16.mxu0 0
      %2294 = vmatpush1.bf16.msra.mxu0 %v2233
      %2295 = vmatprep.subr.bf16.mxu0 0
      %2296 = vmatpush1.bf16.msra.mxu0 %v2234
      %2297 = vmatprep.subr.bf16.mxu0 0
      %2298 = vmatpush1.bf16.msra.mxu0 %v2235
      %2299 = vmatprep.subr.bf16.mxu0 0
      %2300 = vmatpush1.bf16.msra.mxu0 %v2236
      %2301 = vmatprep.mubr.bf16.mxu0 %v2120
      %2302 = vmatmul.mubr.bf16.gmra.mrb[0].mxu0 %v2119
      %v2303 = vpop.f32.mrb[0].mxu0
      %v2304 = vadd.f32 %v2112, %v2303
      %v2305 = vpop.f32.mrb[0].mxu0
      %v2306 = vpop.f32.mrb[0].mxu0
      %v2307 = vpop.f32.mrb[0].mxu0
      %2308 = vdwg.mxu0
      %2309 = vmatprep.subr.bf16.mxu0 0
      %2310 = vmatpush1.bf16.msra.mxu0 %v2237
      %2311 = vmatprep.subr.bf16.mxu0 0
      %2312 = vmatpush1.bf16.msra.mxu0 %v2238
      %2313 = vmatprep.subr.bf16.mxu0 0
      %2314 = vmatpush1.bf16.msra.mxu0 %v2239
      %2315 = vmatprep.subr.bf16.mxu0 0
      %2316 = vmatpush1.bf16.msra.mxu0 %v2240
      %2317 = vmatprep.subr.bf16.mxu0 0
      %2318 = vmatpush1.bf16.msra.mxu0 %v2241
      %2319 = vmatprep.subr.bf16.mxu0 0
      %2320 = vmatpush1.bf16.msra.mxu0 %v2242
      %2321 = vmatprep.subr.bf16.mxu0 0
      %2322 = vmatpush1.bf16.msra.mxu0 %v2243
      %2323 = vmatprep.subr.bf16.mxu0 0
      %2324 = vmatpush1.bf16.msra.mxu0 %v2244
      %2325 = vmatprep.subr.bf16.mxu0 0
      %2326 = vmatpush1.bf16.msra.mxu0 0
      %2327 = vmatprep.subr.bf16.mxu0 0
      %2328 = vmatpush1.bf16.msra.mxu0 0
      %2329 = vmatprep.subr.bf16.mxu0 0
      %2330 = vmatpush1.bf16.msra.mxu0 0
      %2331 = vmatprep.subr.bf16.mxu0 0
      %2332 = vmatpush1.bf16.msra.mxu0 0
      %2333 = vmatprep.subr.bf16.mxu0 0
      %2334 = vmatpush1.bf16.msra.mxu0 0
      %2335 = vmatprep.subr.bf16.mxu0 0
      %2336 = vmatpush1.bf16.msra.mxu0 0
      %2337 = vmatprep.subr.bf16.mxu0 0
      %2338 = vmatpush1.bf16.msra.mxu0 0
      %2339 = vmatprep.subr.bf16.mxu0 0
      %2340 = vmatpush1.bf16.msra.mxu0 0
      %2341 = vmatprep.mubr.bf16.mxu0 0
      %2342 = vmatmul.mubr.bf16.gmra.mrb[0].mxu0 %v2121
      %v2343 = vpop.f32.mrb[0].mxu0
      %v2344 = vadd.f32 %v2304, %v2343
      %v2345 = vpop.f32.mrb[0].mxu0
      %v2346 = vpop.f32.mrb[0].mxu0
      %v2347 = vpop.f32.mrb[0].mxu0
      %2348 = vdwg.mxu0
      %v2349 = vadd.f32 %v2344, %v1711
      %v2350 = vmax.f32 %v2349, 0.0
      %v2351 = vpack.c.bf16 %v2350, %v2350
      %vm2352 = vcmask 1040384
      %vm2353 = vmand %vm2352, %vm1132
      %v2354 = vld [vmem:[#allocation3] sm:$0x1]
      %v2355 = vsel %vm2353, %v2351, %v2354
      %2356 = vst [vmem:[#allocation3] sm:$0x1] %v2355
      %v2359 = vunpack.c.l.s4 1983009808
      %v2360 = vunpack.c.0.s8 %v2359
      %v2361 = vlaneseq
      %v2362 = vshrl.u32 %v2361, 7
      %v2363 = vsub.s32 %v2360, %v2362
      %v2364 = vrot.slane %v2351, %v2363
      %v2366 = vshrl.u32 %v2364, 16
      %v2368 = vrot.slane %v2366, 6
      %v2369 = vrot.slane %v2368, 2
      %vm2371 = vcmask 1041409
      %vm2372 = vsmask.f32 1280
      %vm2373 = vmand %vm2371, %vm2372
      %v2374 = vld [vmem:[#allocation3] sm:$0x2]
      %v2375 = vsel %vm2373, %v2369, %v2374
      %2376 = vst [vmem:[#allocation3] sm:$0x2] %v2375
      %v2377 = vcombine.high %v2364, %v2364
      %v2378 = vrot.slane %v2377, 7
      %vm2380 = vsmask.f32 7942
      %vm2381 = vmand %vm2371, %vm2380
      %v2382 = vld [vmem:[#allocation3] sm:$0x2]
      %v2383 = vsel %vm2381, %v2378, %v2382
      %2384 = vst [vmem:[#allocation3] sm:$0x2] %v2383
      %vm2385 = vsmask.f32 256
      %vm2386 = vmand %vm2352, %vm2385
      %v2387 = vld [vmem:[#allocation3 + $0x2] sm:$0x1]
      %v2388 = vsel %vm2386, %v2351, %v2387
      %2389 = vst [vmem:[#allocation3 + $0x2] sm:$0x1] %v2388
      %v2390 = vshll.u32 %v2364, 16
      %v2392 = vrot.slane %v2390, 7
      %v2393 = vrot.slane %v2392, 2
      %v2395 = vld [vmem:[#allocation3 + $0x2] sm:$0x1]
      %v2396 = vsel %vm2353, %v2393, %v2395
      %2397 = vst [vmem:[#allocation3 + $0x2] sm:$0x1] %v2396
      %v2398 = vld [vmem:[#allocation3 + $0x2] sm:$0x2]
      %v2399 = vsel %vm2373, %v2378, %v2398
      %2400 = vst [vmem:[#allocation3 + $0x2] sm:$0x2] %v2399
      %v2402 = vshll.u32 %v2377, 16
      %v2405 = vld [vmem:[#allocation3 + $0x2] sm:$0x2]
      %v2406 = vsel %vm2381, %v2402, %v2405
      %2407 = vst [vmem:[#allocation3 + $0x2] sm:$0x2] %v2406
      %v2408 = vld [vmem:[#allocation3 + $0x4] sm:$0x1]
      %v2409 = vsel %vm2386, %v2369, %v2408
      %2410 = vst [vmem:[#allocation3 + $0x4] sm:$0x1] %v2409
      %v2411 = vrot.slane %v2364, 7
      %v2412 = vrot.slane %v2411, 2
      %v2414 = vld [vmem:[#allocation3 + $0x4] sm:$0x1]
      %v2415 = vsel %vm2353, %v2412, %v2414
      %2416 = vst [vmem:[#allocation3 + $0x4] sm:$0x1] %v2415
      %v2417 = vshrl.u32 %v2377, 16
      %v2419 = vrot.slane %v2417, 7
      %v2421 = vld [vmem:[#allocation3 + $0x4] sm:$0x2]
      %v2422 = vsel %vm2373, %v2419, %v2421
      %2423 = vst [vmem:[#allocation3 + $0x4] sm:$0x2] %v2422
      %v2425 = vld [vmem:[#allocation3 + $0x4] sm:$0x2]
      %v2426 = vsel %vm2381, %v2377, %v2425
      %2427 = vst [vmem:[#allocation3 + $0x4] sm:$0x2] %v2426
      %v2428 = vld [vmem:[#allocation3] sm:$0x3f]
      %v2429 = vld [vmem:[%s5] sm:$0xff]
      %v2430 = vld [vmem:[%s5 + $0x8] sm:$0xff]
      %v2431 = vld [vmem:[%s5 + $0x10] sm:$0xff]
      %v2432 = vld [vmem:[%s5 + $0x18] sm:$0xff]
      %v2433 = vld [vmem:[%s5 + $0x20] sm:$0xff]
      %v2434 = vld [vmem:[%s5 + $0x28] sm:$0xff]
      %v2435 = vld [vmem:[%s5 + $0x30] sm:$0xff]
      %v2436 = vld [vmem:[%s5 + $0x38] sm:$0xff]
      %v2437 = vld [vmem:[%s5 + $0x40] sm:$0xff]
      %v2438 = vld [vmem:[%s5 + $0x48] sm:$0xff]
      %v2439 = vld [vmem:[%s5 + $0x50] sm:$0xff]
      %v2440 = vld [vmem:[%s5 + $0x58] sm:$0xff]
      %v2441 = vld [vmem:[%s5 + $0x60] sm:$0xff]
      %v2442 = vld [vmem:[%s5 + $0x68] sm:$0xff]
      %v2443 = vld [vmem:[%s5 + $0x70] sm:$0xff]
      %v2444 = vld [vmem:[%s5 + $0x78] sm:$0xff]
      %v2445 = vld [vmem:[%s5 + $0x80] sm:$0xff]
      %v2446 = vld [vmem:[%s5 + $0x88] sm:$0xff]
      %v2447 = vld [vmem:[%s5 + $0x90] sm:$0xff]
      %v2448 = vld [vmem:[%s5 + $0x98] sm:$0xff]
      %v2449 = vld [vmem:[%s5 + $0xa0] sm:$0xff]
      %v2450 = vld [vmem:[%s5 + $0xa8] sm:$0xff]
      %v2451 = vld [vmem:[%s5 + $0xb0] sm:$0xff]
      %v2452 = vld [vmem:[%s5 + $0xb8] sm:$0xff]
      %v2453 = vld [vmem:[%s5 + $0xc0] sm:$0xff]
      %v2454 = vld [vmem:[%s5 + $0xc8] sm:$0xff]
      %v2455 = vld [vmem:[%s5 + $0xd0] sm:$0xff]
      %v2456 = vld [vmem:[%s5 + $0xd8] sm:$0xff]
      %v2457 = vld [vmem:[%s5 + $0xe0] sm:$0xff]
      %v2458 = vld [vmem:[%s5 + $0xe8] sm:$0xff]
      %v2459 = vld [vmem:[%s5 + $0xf0] sm:$0xff]
      %v2460 = vld [vmem:[%s5 + $0xf8] sm:$0xff]
      %v2461 = vld [vmem:[%s5 + $0x100] sm:$0xff]
      %v2462 = vld [vmem:[%s5 + $0x108] sm:$0xff]
      %v2463 = vld [vmem:[%s5 + $0x110] sm:$0xff]
      %v2464 = vld [vmem:[%s5 + $0x118] sm:$0xff]
      %v2465 = vld [vmem:[%s5 + $0x120] sm:$0xff]
      %v2466 = vld [vmem:[%s5 + $0x128] sm:$0xff]
      %v2467 = vld [vmem:[%s5 + $0x130] sm:$0xff]
      %v2468 = vld [vmem:[%s5 + $0x138] sm:$0xff]
      %v2469 = vld [vmem:[%s5 + $0x140] sm:$0xff]
      %v2470 = vld [vmem:[%s5 + $0x148] sm:$0xff]
      %v2471 = vld [vmem:[%s5 + $0x150] sm:$0xff]
      %v2472 = vld [vmem:[%s5 + $0x158] sm:$0xff]
      %v2473 = vld [vmem:[%s5 + $0x160] sm:$0xff]
      %v2474 = vld [vmem:[%s5 + $0x168] sm:$0xff]
      %v2475 = vld [vmem:[%s5 + $0x170] sm:$0xff]
      %v2476 = vld [vmem:[%s5 + $0x178] sm:$0xff]
      %v2478 = vcombine.high %v2428, %v2428
      %v2480 = vunpack.c.l.s4 1983009808
      %v2481 = vunpack.c.0.s8 %v2480
      %v2482 = vlaneseq
      %v2483 = vshrl.u32 %v2482, 7
      %v2484 = vsub.s32 %v2481, %v2483
      %v2485 = vrot.slane %v2428, %v2484
      %v2487 = vunpack.c.l.s4 1983009808
      %v2488 = vunpack.c.0.s8 %v2487
      %v2489 = vlaneseq
      %v2490 = vshrl.u32 %v2489, 7
      %v2491 = vsub.s32 %v2488, %v2490
      %v2492 = vrot.slane %v2478, %v2491
      %v2493 = vcombine.high %v2485, %v2485
      %v2545 = vunpack.c.l.b16 %v2429
      %v2546 = vunpack.c.h.b16 %v2429
      %v2547 = vunpack.c.l.b16 %v2430
      %v2548 = vunpack.c.h.b16 %v2430
      %v2549 = vunpack.c.l.b16 %v2431
      %v2550 = vunpack.c.h.b16 %v2431
      %v2551 = vunpack.c.l.b16 %v2432
      %v2552 = vunpack.c.h.b16 %v2432
      %v2553 = vunpack.c.l.b16 %v2433
      %v2554 = vunpack.c.h.b16 %v2433
      %v2555 = vunpack.c.l.b16 %v2434
      %v2556 = vunpack.c.h.b16 %v2434
      %v2557 = vunpack.c.l.b16 %v2435
      %v2558 = vunpack.c.h.b16 %v2435
      %v2559 = vunpack.c.l.b16 %v2436
      %v2560 = vunpack.c.h.b16 %v2436
      %v2561 = vunpack.c.l.b16 %v2437
      %v2562 = vunpack.c.h.b16 %v2437
      %v2563 = vunpack.c.l.b16 %v2438
      %v2564 = vunpack.c.h.b16 %v2438
      %v2565 = vunpack.c.l.b16 %v2439
      %v2566 = vunpack.c.h.b16 %v2439
      %v2567 = vunpack.c.l.b16 %v2440
      %v2568 = vunpack.c.h.b16 %v2440
      %v2569 = vunpack.c.l.b16 %v2441
      %v2570 = vunpack.c.h.b16 %v2441
      %v2571 = vunpack.c.l.b16 %v2442
      %v2572 = vunpack.c.h.b16 %v2442
      %v2573 = vunpack.c.l.b16 %v2443
      %v2574 = vunpack.c.h.b16 %v2443
      %v2575 = vunpack.c.l.b16 %v2444
      %v2576 = vunpack.c.h.b16 %v2444
      %v2577 = vunpack.c.l.b16 %v2445
      %v2578 = vunpack.c.h.b16 %v2445
      %v2579 = vunpack.c.l.b16 %v2446
      %v2580 = vunpack.c.h.b16 %v2446
      %v2581 = vunpack.c.l.b16 %v2447
      %v2582 = vunpack.c.h.b16 %v2447
      %v2583 = vunpack.c.l.b16 %v2448
      %v2584 = vunpack.c.h.b16 %v2448
      %v2585 = vunpack.c.l.b16 %v2449
      %v2586 = vunpack.c.h.b16 %v2449
      %v2587 = vunpack.c.l.b16 %v2450
      %v2588 = vunpack.c.h.b16 %v2450
      %v2589 = vunpack.c.l.b16 %v2451
      %v2590 = vunpack.c.h.b16 %v2451
      %v2591 = vunpack.c.l.b16 %v2452
      %v2592 = vunpack.c.h.b16 %v2452
      %v2593 = vunpack.c.l.b16 %v2453
      %v2594 = vunpack.c.h.b16 %v2453
      %v2595 = vunpack.c.l.b16 %v2454
      %v2596 = vunpack.c.h.b16 %v2454
      %v2597 = vunpack.c.l.b16 %v2455
      %v2598 = vunpack.c.h.b16 %v2455
      %v2599 = vunpack.c.l.b16 %v2456
      %v2600 = vunpack.c.h.b16 %v2456
      %v2601 = vunpack.c.l.b16 %v2457
      %v2602 = vunpack.c.h.b16 %v2457
      %v2603 = vunpack.c.l.b16 %v2458
      %v2604 = vunpack.c.h.b16 %v2458
      %v2605 = vunpack.c.l.b16 %v2459
      %v2606 = vunpack.c.h.b16 %v2459
      %v2607 = vunpack.c.l.b16 %v2460
      %v2608 = vunpack.c.h.b16 %v2460
      %v2609 = vunpack.c.l.b16 %v2461
      %v2610 = vunpack.c.h.b16 %v2461
      %v2611 = vunpack.c.l.b16 %v2462
      %v2612 = vunpack.c.h.b16 %v2462
      %v2613 = vunpack.c.l.b16 %v2463
      %v2614 = vunpack.c.h.b16 %v2463
      %v2615 = vunpack.c.l.b16 %v2464
      %v2616 = vunpack.c.h.b16 %v2464
      %v2617 = vunpack.c.l.b16 %v2465
      %v2618 = vunpack.c.h.b16 %v2465
      %v2619 = vunpack.c.l.b16 %v2466
      %v2620 = vunpack.c.h.b16 %v2466
      %v2621 = vunpack.c.l.b16 %v2467
      %v2622 = vunpack.c.h.b16 %v2467
      %v2623 = vunpack.c.l.b16 %v2468
      %v2624 = vunpack.c.h.b16 %v2468
      %v2625 = vunpack.c.l.b16 %v2469
      %v2626 = vunpack.c.h.b16 %v2469
      %v2627 = vunpack.c.l.b16 %v2470
      %v2628 = vunpack.c.h.b16 %v2470
      %v2629 = vunpack.c.l.b16 %v2471
      %v2630 = vunpack.c.h.b16 %v2471
      %v2631 = vunpack.c.l.b16 %v2472
      %v2632 = vunpack.c.h.b16 %v2472
      %v2633 = vunpack.c.l.b16 %v2473
      %v2634 = vunpack.c.h.b16 %v2473
      %v2635 = vunpack.c.l.b16 %v2474
      %v2636 = vunpack.c.h.b16 %v2474
      %v2637 = vunpack.c.l.b16 %v2475
      %v2638 = vunpack.c.h.b16 %v2475
      %v2639 = vunpack.c.l.b16 %v2476
      %v2640 = vunpack.c.h.b16 %v2476
      %v2641 = vpack.c.b16 %v2547, %v2545
      %v2642 = vpack.c.b16 %v2548, %v2546
      %v2643 = vpack.c.b16 %v2551, %v2549
      %v2644 = vpack.c.b16 %v2552, %v2550
      %v2645 = vpack.c.b16 %v2555, %v2553
      %v2646 = vpack.c.b16 %v2556, %v2554
      %v2647 = vpack.c.b16 %v2559, %v2557
      %v2648 = vpack.c.b16 %v2560, %v2558
      %v2649 = vpack.c.b16 %v2563, %v2561
      %v2650 = vpack.c.b16 %v2564, %v2562
      %v2651 = vpack.c.b16 %v2567, %v2565
      %v2652 = vpack.c.b16 %v2568, %v2566
      %v2653 = vpack.c.b16 %v2571, %v2569
      %v2654 = vpack.c.b16 %v2572, %v2570
      %v2655 = vpack.c.b16 %v2575, %v2573
      %v2656 = vpack.c.b16 %v2576, %v2574
      %v2657 = vpack.c.b16 %v2579, %v2577
      %v2658 = vpack.c.b16 %v2580, %v2578
      %v2659 = vpack.c.b16 %v2583, %v2581
      %v2660 = vpack.c.b16 %v2584, %v2582
      %v2661 = vpack.c.b16 %v2587, %v2585
      %v2662 = vpack.c.b16 %v2588, %v2586
      %v2663 = vpack.c.b16 %v2591, %v2589
      %v2664 = vpack.c.b16 %v2592, %v2590
      %v2665 = vpack.c.b16 %v2595, %v2593
      %v2666 = vpack.c.b16 %v2596, %v2594
      %v2667 = vpack.c.b16 %v2599, %v2597
      %v2668 = vpack.c.b16 %v2600, %v2598
      %v2669 = vpack.c.b16 %v2603, %v2601
      %v2670 = vpack.c.b16 %v2604, %v2602
      %v2671 = vpack.c.b16 %v2607, %v2605
      %v2672 = vpack.c.b16 %v2608, %v2606
      %v2673 = vpack.c.b16 %v2611, %v2609
      %v2674 = vpack.c.b16 %v2612, %v2610
      %v2675 = vpack.c.b16 %v2615, %v2613
      %v2676 = vpack.c.b16 %v2616, %v2614
      %v2677 = vpack.c.b16 %v2619, %v2617
      %v2678 = vpack.c.b16 %v2620, %v2618
      %v2679 = vpack.c.b16 %v2623, %v2621
      %v2680 = vpack.c.b16 %v2624, %v2622
      %v2681 = vpack.c.b16 %v2627, %v2625
      %v2682 = vpack.c.b16 %v2628, %v2626
      %v2683 = vpack.c.b16 %v2631, %v2629
      %v2684 = vpack.c.b16 %v2632, %v2630
      %v2685 = vpack.c.b16 %v2635, %v2633
      %v2686 = vpack.c.b16 %v2636, %v2634
      %v2687 = vpack.c.b16 %v2639, %v2637
      %v2688 = vpack.c.b16 %v2640, %v2638
      %2737 = vmatprep.subr.bf16.mxu0 %v2642
      %2738 = vmatpush1.bf16.msra.mxu0 %v2641
      %2739 = vmatprep.subr.bf16.mxu0 %v2644
      %2740 = vmatpush1.bf16.msra.mxu0 %v2643
      %2741 = vmatprep.subr.bf16.mxu0 %v2646
      %2742 = vmatpush1.bf16.msra.mxu0 %v2645
      %2743 = vmatprep.subr.bf16.mxu0 %v2648
      %2744 = vmatpush1.bf16.msra.mxu0 %v2647
      %2745 = vmatprep.subr.bf16.mxu0 %v2650
      %2746 = vmatpush1.bf16.msra.mxu0 %v2649
      %2747 = vmatprep.subr.bf16.mxu0 %v2652
      %2748 = vmatpush1.bf16.msra.mxu0 %v2651
      %2749 = vmatprep.subr.bf16.mxu0 %v2654
      %2750 = vmatpush1.bf16.msra.mxu0 %v2653
      %2751 = vmatprep.subr.bf16.mxu0 %v2656
      %2752 = vmatpush1.bf16.msra.mxu0 %v2655
      %2753 = vmatprep.subr.bf16.mxu0 %v2658
      %2754 = vmatpush1.bf16.msra.mxu0 %v2657
      %2755 = vmatprep.subr.bf16.mxu0 %v2660
      %2756 = vmatpush1.bf16.msra.mxu0 %v2659
      %2757 = vmatprep.subr.bf16.mxu0 %v2662
      %2758 = vmatpush1.bf16.msra.mxu0 %v2661
      %2759 = vmatprep.subr.bf16.mxu0 %v2664
      %2760 = vmatpush1.bf16.msra.mxu0 %v2663
      %2761 = vmatprep.subr.bf16.mxu0 %v2666
      %2762 = vmatpush1.bf16.msra.mxu0 %v2665
      %2763 = vmatprep.subr.bf16.mxu0 %v2668
      %2764 = vmatpush1.bf16.msra.mxu0 %v2667
      %2765 = vmatprep.subr.bf16.mxu0 %v2670
      %2766 = vmatpush1.bf16.msra.mxu0 %v2669
      %2767 = vmatprep.subr.bf16.mxu0 %v2672
      %2768 = vmatpush1.bf16.msra.mxu0 %v2671
      %2769 = vmatprep.mubr.bf16.mxu0 %v2493
      %2770 = vmatmul.mubr.bf16.gmra.mrb[0].mxu0 %v2485
      %v2771 = vpop.f32.mrb[0].mxu0
      %v2772 = vadd.f32 0.0, %v2771
      %v2773 = vpop.f32.mrb[0].mxu0
      %v2774 = vadd.f32 0.0, %v2773
      %v2775 = vpop.f32.mrb[0].mxu0
      %v2776 = vpop.f32.mrb[0].mxu0
      %2777 = vdwg.mxu0
      %2778 = vmatprep.subr.bf16.mxu0 %v2674
      %2779 = vmatpush1.bf16.msra.mxu0 %v2673
      %2780 = vmatprep.subr.bf16.mxu0 %v2676
      %2781 = vmatpush1.bf16.msra.mxu0 %v2675
      %2782 = vmatprep.subr.bf16.mxu0 %v2678
      %2783 = vmatpush1.bf16.msra.mxu0 %v2677
      %2784 = vmatprep.subr.bf16.mxu0 %v2680
      %2785 = vmatpush1.bf16.msra.mxu0 %v2679
      %2786 = vmatprep.subr.bf16.mxu0 %v2682
      %2787 = vmatpush1.bf16.msra.mxu0 %v2681
      %2788 = vmatprep.subr.bf16.mxu0 %v2684
      %2789 = vmatpush1.bf16.msra.mxu0 %v2683
      %2790 = vmatprep.subr.bf16.mxu0 %v2686
      %2791 = vmatpush1.bf16.msra.mxu0 %v2685
      %2792 = vmatprep.subr.bf16.mxu0 %v2688
      %2793 = vmatpush1.bf16.msra.mxu0 %v2687
      %2794 = vmatprep.subr.bf16.mxu0 0
      %2795 = vmatpush1.bf16.msra.mxu0 0
      %2796 = vmatprep.subr.bf16.mxu0 0
      %2797 = vmatpush1.bf16.msra.mxu0 0
      %2798 = vmatprep.subr.bf16.mxu0 0
      %2799 = vmatpush1.bf16.msra.mxu0 0
      %2800 = vmatprep.subr.bf16.mxu0 0
      %2801 = vmatpush1.bf16.msra.mxu0 0
      %2802 = vmatprep.subr.bf16.mxu0 0
      %2803 = vmatpush1.bf16.msra.mxu0 0
      %2804 = vmatprep.subr.bf16.mxu0 0
      %2805 = vmatpush1.bf16.msra.mxu0 0
      %2806 = vmatprep.subr.bf16.mxu0 0
      %2807 = vmatpush1.bf16.msra.mxu0 0
      %2808 = vmatprep.subr.bf16.mxu0 0
      %2809 = vmatpush1.bf16.msra.mxu0 0
      %2810 = vmatprep.mubr.bf16.mxu0 0
      %2811 = vmatmul.mubr.bf16.gmra.mrb[0].mxu0 %v2492
      %v2812 = vpop.f32.mrb[0].mxu0
      %v2813 = vadd.f32 %v2772, %v2812
      %v2814 = vpop.f32.mrb[0].mxu0
      %v2815 = vadd.f32 %v2774, %v2814
      %v2816 = vpop.f32.mrb[0].mxu0
      %v2817 = vpop.f32.mrb[0].mxu0
      %2818 = vdwg.mxu0
      %v2819 = vld [vmem:[%s6] sm:$0x1]
      %v2821 = vlaneseq
      %v2822 = vshrl.u32 %v2821, 7
      %v2823 = vsub.s32 0, %v2822
      %v2824 = vrot.slane %v2819, %v2823
      %v2826 = vadd.f32 %v2813, %v2824
      %v2827 = vmax.f32 %v2826, 0.0
      %v2828 = vld [vmem:[%s7] sm:$0x1]
      %v2830 = vlaneseq
      %v2831 = vshrl.u32 %v2830, 7
      %v2832 = vsub.s32 0, %v2831
      %v2833 = vrot.slane %v2828, %v2832
      %v2835 = vadd.f32 %v2815, %v2833
      %v2836 = vld [vmem:[%s8] sm:$0xf]
      %v2837 = vld [vmem:[%s8 + $0x4] sm:$0xf]
      %v2838 = vld [vmem:[%s8 + $0x8] sm:$0xf]
      %v2839 = vld [vmem:[%s8 + $0xc] sm:$0xf]
      %v2840 = vld [vmem:[%s8 + $0x10] sm:$0xf]
      %v2841 = vld [vmem:[%s8 + $0x14] sm:$0xf]
      %v2842 = vld [vmem:[%s8 + $0x18] sm:$0xf]
      %v2843 = vld [vmem:[%s8 + $0x1c] sm:$0xf]
      %v2844 = vld [vmem:[%s8 + $0x20] sm:$0xf]
      %v2845 = vld [vmem:[%s8 + $0x24] sm:$0xf]
      %v2846 = vld [vmem:[%s8 + $0x28] sm:$0xf]
      %v2847 = vld [vmem:[%s8 + $0x2c] sm:$0xf]
      %v2848 = vld [vmem:[%s8 + $0x30] sm:$0xf]
      %v2849 = vld [vmem:[%s8 + $0x34] sm:$0xf]
      %v2850 = vld [vmem:[%s8 + $0x38] sm:$0xf]
      %v2851 = vld [vmem:[%s8 + $0x3c] sm:$0xf]
      %v2852 = vld [vmem:[%s8 + $0x40] sm:$0xf]
      %v2853 = vld [vmem:[%s8 + $0x44] sm:$0xf]
      %v2854 = vld [vmem:[%s8 + $0x48] sm:$0xf]
      %v2855 = vld [vmem:[%s8 + $0x4c] sm:$0xf]
      %v2856 = vld [vmem:[%s8 + $0x50] sm:$0xf]
      %v2857 = vld [vmem:[%s8 + $0x54] sm:$0xf]
      %v2858 = vld [vmem:[%s8 + $0x58] sm:$0xf]
      %v2859 = vld [vmem:[%s8 + $0x5c] sm:$0xf]
      %v2860 = vld [vmem:[%s8 + $0x60] sm:$0xf]
      %v2861 = vld [vmem:[%s8 + $0x64] sm:$0xf]
      %v2862 = vld [vmem:[%s8 + $0x68] sm:$0xf]
      %v2863 = vld [vmem:[%s8 + $0x6c] sm:$0xf]
      %v2864 = vld [vmem:[%s8 + $0x70] sm:$0xf]
      %v2865 = vld [vmem:[%s8 + $0x74] sm:$0xf]
      %v2866 = vld [vmem:[%s8 + $0x78] sm:$0xf]
      %v2867 = vld [vmem:[%s8 + $0x7c] sm:$0xf]
      %v2868 = vld [vmem:[%s8 + $0x80] sm:$0xf]
      %v2869 = vld [vmem:[%s8 + $0x84] sm:$0xf]
      %v2870 = vld [vmem:[%s8 + $0x88] sm:$0xf]
      %v2871 = vld [vmem:[%s8 + $0x8c] sm:$0xf]
      %v2872 = vld [vmem:[%s8 + $0x90] sm:$0xf]
      %v2873 = vld [vmem:[%s8 + $0x94] sm:$0xf]
      %v2874 = vld [vmem:[%s8 + $0x98] sm:$0xf]
      %v2875 = vld [vmem:[%s8 + $0x9c] sm:$0xf]
      %v2876 = vld [vmem:[%s8 + $0xa0] sm:$0xf]
      %v2877 = vld [vmem:[%s8 + $0xa4] sm:$0xf]
      %v2878 = vld [vmem:[%s8 + $0xa8] sm:$0xf]
      %v2879 = vld [vmem:[%s8 + $0xac] sm:$0xf]
      %v2880 = vld [vmem:[%s8 + $0xb0] sm:$0xf]
      %v2881 = vld [vmem:[%s8 + $0xb4] sm:$0xf]
      %v2882 = vld [vmem:[%s8 + $0xb8] sm:$0xf]
      %v2883 = vld [vmem:[%s8 + $0xbc] sm:$0xf]
      %v2884 = vld [vmem:[%s9] sm:$0x1]
      %v2885 = vpack.c.bf16 %v2827, %v2827
      %v2888 = vunpack.c.l.s4 1983009808
      %v2889 = vunpack.c.0.s8 %v2888
      %v2890 = vlaneseq
      %v2891 = vshrl.u32 %v2890, 7
      %v2892 = vsub.s32 %v2889, %v2891
      %v2893 = vrot.slane %v2885, %v2892
      %v2895 = vshrl.u32 %v2893, 16
      %v2897 = vrot.slane %v2895, 7
      %v2898 = vshll.u32 %v2893, 16
      %v2900 = vor.u32 %v2897, %v2898
      %vm2902 = vcmask 1041408
      %vm2903 = vmand %vm2902, %vm1132
      %v2904 = vld [vmem:[#allocation4] sm:$0x3]
      %v2905 = vsel %vm2903, %v2900, %v2904
      %2906 = vst [vmem:[#allocation4] sm:$0x3] %v2905
      %2907 = vst [vmem:[#allocation4 + $0x2] sm:$0x3] %v2885
      %v2908 = vrot.slane %v2895, 6
      %v2909 = vrot.slane %v2898, 7
      %v2910 = vor.u32 %v2908, %v2909
      %v2911 = vrot.slane %v2910, 2
      %vm2913 = vmand %vm2902, %vm2372
      %v2914 = vld [vmem:[#allocation4 + $0x4] sm:$0x3]
      %v2915 = vsel %vm2913, %v2911, %v2914
      %2916 = vst [vmem:[#allocation4 + $0x4] sm:$0x3] %v2915
      %v2917 = vld [vmem:[#allocation4] sm:$0x3f]
      %v2919 = vlaneseq
      %v2920 = vshrl.u32 %v2919, 7
      %v2921 = vsub.s32 0, %v2920
      %v2922 = vrot.slane %v2884, %v2921
      %v2925 = vcombine.high %v2917, %v2917
      %v2927 = vunpack.c.l.s4 1983009808
      %v2928 = vunpack.c.0.s8 %v2927
      %v2929 = vlaneseq
      %v2930 = vshrl.u32 %v2929, 7
      %v2931 = vsub.s32 %v2928, %v2930
      %v2932 = vrot.slane %v2917, %v2931
      %v2934 = vunpack.c.l.s4 1983009808
      %v2935 = vunpack.c.0.s8 %v2934
      %v2936 = vlaneseq
      %v2937 = vshrl.u32 %v2936, 7
      %v2938 = vsub.s32 %v2935, %v2937
      %v2939 = vrot.slane %v2925, %v2938
      %v2940 = vcombine.high %v2932, %v2932
      %v2992 = vunpack.c.l.b16 %v2836
      %v2993 = vunpack.c.l.b16 %v2837
      %v2994 = vunpack.c.l.b16 %v2838
      %v2995 = vunpack.c.l.b16 %v2839
      %v2996 = vunpack.c.l.b16 %v2840
      %v2997 = vunpack.c.l.b16 %v2841
      %v2998 = vunpack.c.l.b16 %v2842
      %v2999 = vunpack.c.l.b16 %v2843
      %v3000 = vunpack.c.l.b16 %v2844
      %v3001 = vunpack.c.l.b16 %v2845
      %v3002 = vunpack.c.l.b16 %v2846
      %v3003 = vunpack.c.l.b16 %v2847
      %v3004 = vunpack.c.l.b16 %v2848
      %v3005 = vunpack.c.l.b16 %v2849
      %v3006 = vunpack.c.l.b16 %v2850
      %v3007 = vunpack.c.l.b16 %v2851
      %v3008 = vunpack.c.l.b16 %v2852
      %v3009 = vunpack.c.l.b16 %v2853
      %v3010 = vunpack.c.l.b16 %v2854
      %v3011 = vunpack.c.l.b16 %v2855
      %v3012 = vunpack.c.l.b16 %v2856
      %v3013 = vunpack.c.l.b16 %v2857
      %v3014 = vunpack.c.l.b16 %v2858
      %v3015 = vunpack.c.l.b16 %v2859
      %v3016 = vunpack.c.l.b16 %v2860
      %v3017 = vunpack.c.l.b16 %v2861
      %v3018 = vunpack.c.l.b16 %v2862
      %v3019 = vunpack.c.l.b16 %v2863
      %v3020 = vunpack.c.l.b16 %v2864
      %v3021 = vunpack.c.l.b16 %v2865
      %v3022 = vunpack.c.l.b16 %v2866
      %v3023 = vunpack.c.l.b16 %v2867
      %v3024 = vunpack.c.l.b16 %v2868
      %v3025 = vunpack.c.l.b16 %v2869
      %v3026 = vunpack.c.l.b16 %v2870
      %v3027 = vunpack.c.l.b16 %v2871
      %v3028 = vunpack.c.l.b16 %v2872
      %v3029 = vunpack.c.l.b16 %v2873
      %v3030 = vunpack.c.l.b16 %v2874
      %v3031 = vunpack.c.l.b16 %v2875
      %v3032 = vunpack.c.l.b16 %v2876
      %v3033 = vunpack.c.l.b16 %v2877
      %v3034 = vunpack.c.l.b16 %v2878
      %v3035 = vunpack.c.l.b16 %v2879
      %v3036 = vunpack.c.l.b16 %v2880
      %v3037 = vunpack.c.l.b16 %v2881
      %v3038 = vunpack.c.l.b16 %v2882
      %v3039 = vunpack.c.l.b16 %v2883
      %v3040 = vpack.c.b16 %v2993, %v2992
      %v3041 = vpack.c.b16 %v2995, %v2994
      %v3042 = vpack.c.b16 %v2997, %v2996
      %v3043 = vpack.c.b16 %v2999, %v2998
      %v3044 = vpack.c.b16 %v3001, %v3000
      %v3045 = vpack.c.b16 %v3003, %v3002
      %v3046 = vpack.c.b16 %v3005, %v3004
      %v3047 = vpack.c.b16 %v3007, %v3006
      %v3048 = vpack.c.b16 %v3009, %v3008
      %v3049 = vpack.c.b16 %v3011, %v3010
      %v3050 = vpack.c.b16 %v3013, %v3012
      %v3051 = vpack.c.b16 %v3015, %v3014
      %v3052 = vpack.c.b16 %v3017, %v3016
      %v3053 = vpack.c.b16 %v3019, %v3018
      %v3054 = vpack.c.b16 %v3021, %v3020
      %v3055 = vpack.c.b16 %v3023, %v3022
      %v3056 = vpack.c.b16 %v3025, %v3024
      %v3057 = vpack.c.b16 %v3027, %v3026
      %v3058 = vpack.c.b16 %v3029, %v3028
      %v3059 = vpack.c.b16 %v3031, %v3030
      %v3060 = vpack.c.b16 %v3033, %v3032
      %v3061 = vpack.c.b16 %v3035, %v3034
      %v3062 = vpack.c.b16 %v3037, %v3036
      %v3063 = vpack.c.b16 %v3039, %v3038
      %3088 = vmatprep.subr.bf16.mxu0 0
      %3089 = vmatpush1.bf16.msra.mxu0 %v3040
      %3090 = vmatprep.subr.bf16.mxu0 0
      %3091 = vmatpush1.bf16.msra.mxu0 %v3041
      %3092 = vmatprep.subr.bf16.mxu0 0
      %3093 = vmatpush1.bf16.msra.mxu0 %v3042
      %3094 = vmatprep.subr.bf16.mxu0 0
      %3095 = vmatpush1.bf16.msra.mxu0 %v3043
      %3096 = vmatprep.subr.bf16.mxu0 0
      %3097 = vmatpush1.bf16.msra.mxu0 %v3044
      %3098 = vmatprep.subr.bf16.mxu0 0
      %3099 = vmatpush1.bf16.msra.mxu0 %v3045
      %3100 = vmatprep.subr.bf16.mxu0 0
      %3101 = vmatpush1.bf16.msra.mxu0 %v3046
      %3102 = vmatprep.subr.bf16.mxu0 0
      %3103 = vmatpush1.bf16.msra.mxu0 %v3047
      %3104 = vmatprep.subr.bf16.mxu0 0
      %3105 = vmatpush1.bf16.msra.mxu0 %v3048
      %3106 = vmatprep.subr.bf16.mxu0 0
      %3107 = vmatpush1.bf16.msra.mxu0 %v3049
      %3108 = vmatprep.subr.bf16.mxu0 0
      %3109 = vmatpush1.bf16.msra.mxu0 %v3050
      %3110 = vmatprep.subr.bf16.mxu0 0
      %3111 = vmatpush1.bf16.msra.mxu0 %v3051
      %3112 = vmatprep.subr.bf16.mxu0 0
      %3113 = vmatpush1.bf16.msra.mxu0 %v3052
      %3114 = vmatprep.subr.bf16.mxu0 0
      %3115 = vmatpush1.bf16.msra.mxu0 %v3053
      %3116 = vmatprep.subr.bf16.mxu0 0
      %3117 = vmatpush1.bf16.msra.mxu0 %v3054
      %3118 = vmatprep.subr.bf16.mxu0 0
      %3119 = vmatpush1.bf16.msra.mxu0 %v3055
      %3120 = vmatprep.mubr.bf16.mxu0 %v2940
      %3121 = vmatmul.mubr.bf16.gmra.mrb[0].mxu0 %v2932
      %v3122 = vpop.f32.mrb[0].mxu0
      %v3123 = vadd.f32 %v2922, %v3122
      %v3124 = vpop.f32.mrb[0].mxu0
      %v3125 = vpop.f32.mrb[0].mxu0
      %v3126 = vpop.f32.mrb[0].mxu0
      %3127 = vdwg.mxu0
      %3128 = vmatprep.subr.bf16.mxu0 0
      %3129 = vmatpush1.bf16.msra.mxu0 %v3056
      %3130 = vmatprep.subr.bf16.mxu0 0
      %3131 = vmatpush1.bf16.msra.mxu0 %v3057
      %3132 = vmatprep.subr.bf16.mxu0 0
      %3133 = vmatpush1.bf16.msra.mxu0 %v3058
      %3134 = vmatprep.subr.bf16.mxu0 0
      %3135 = vmatpush1.bf16.msra.mxu0 %v3059
      %3136 = vmatprep.subr.bf16.mxu0 0
      %3137 = vmatpush1.bf16.msra.mxu0 %v3060
      %3138 = vmatprep.subr.bf16.mxu0 0
      %3139 = vmatpush1.bf16.msra.mxu0 %v3061
      %3140 = vmatprep.subr.bf16.mxu0 0
      %3141 = vmatpush1.bf16.msra.mxu0 %v3062
      %3142 = vmatprep.subr.bf16.mxu0 0
      %3143 = vmatpush1.bf16.msra.mxu0 %v3063
      %3144 = vmatprep.subr.bf16.mxu0 0
      %3145 = vmatpush1.bf16.msra.mxu0 0
      %3146 = vmatprep.subr.bf16.mxu0 0
      %3147 = vmatpush1.bf16.msra.mxu0 0
      %3148 = vmatprep.subr.bf16.mxu0 0
      %3149 = vmatpush1.bf16.msra.mxu0 0
      %3150 = vmatprep.subr.bf16.mxu0 0
      %3151 = vmatpush1.bf16.msra.mxu0 0
      %3152 = vmatprep.subr.bf16.mxu0 0
      %3153 = vmatpush1.bf16.msra.mxu0 0
      %3154 = vmatprep.subr.bf16.mxu0 0
      %3155 = vmatpush1.bf16.msra.mxu0 0
      %3156 = vmatprep.subr.bf16.mxu0 0
      %3157 = vmatpush1.bf16.msra.mxu0 0
      %3158 = vmatprep.subr.bf16.mxu0 0
      %3159 = vmatpush1.bf16.msra.mxu0 0
      %3160 = vmatprep.mubr.bf16.mxu0 0
      %3161 = vmatmul.mubr.bf16.gmra.mrb[0].mxu0 %v2939
      %v3162 = vpop.f32.mrb[0].mxu0
      %v3163 = vadd.f32 %v3123, %v3162
      %v3164 = vpop.f32.mrb[0].mxu0
      %v3165 = vpop.f32.mrb[0].mxu0
      %v3166 = vpop.f32.mrb[0].mxu0
      %3167 = vdwg.mxu0
      %v3168 = vadd.f32 %v3163, %v2835
      %v3169 = vmax.f32 %v3168, 0.0
      %s3170 = scalar_lea.vmem %s8, 192
      %v3171 = vld [vmem:[%s3170] sm:$0xf]
      %v3172 = vld [vmem:[%s3170 + $0x4] sm:$0xf]
      %v3173 = vld [vmem:[%s3170 + $0x8] sm:$0xf]
      %v3174 = vld [vmem:[%s3170 + $0xc] sm:$0xf]
      %v3175 = vld [vmem:[%s3170 + $0x10] sm:$0xf]
      %v3176 = vld [vmem:[%s3170 + $0x14] sm:$0xf]
      %v3177 = vld [vmem:[%s3170 + $0x18] sm:$0xf]
      %v3178 = vld [vmem:[%s3170 + $0x1c] sm:$0xf]
      %v3179 = vld [vmem:[%s3170 + $0x20] sm:$0xf]
      %v3180 = vld [vmem:[%s3170 + $0x24] sm:$0xf]
      %v3181 = vld [vmem:[%s3170 + $0x28] sm:$0xf]
      %v3182 = vld [vmem:[%s3170 + $0x2c] sm:$0xf]
      %v3183 = vld [vmem:[%s3170 + $0x30] sm:$0xf]
      %v3184 = vld [vmem:[%s3170 + $0x34] sm:$0xf]
      %v3185 = vld [vmem:[%s3170 + $0x38] sm:$0xf]
      %v3186 = vld [vmem:[%s3170 + $0x3c] sm:$0xf]
      %v3187 = vld [vmem:[%s3170 + $0x40] sm:$0xf]
      %v3188 = vld [vmem:[%s3170 + $0x44] sm:$0xf]
      %v3189 = vld [vmem:[%s3170 + $0x48] sm:$0xf]
      %v3190 = vld [vmem:[%s3170 + $0x4c] sm:$0xf]
      %v3191 = vld [vmem:[%s3170 + $0x50] sm:$0xf]
      %v3192 = vld [vmem:[%s3170 + $0x54] sm:$0xf]
      %v3193 = vld [vmem:[%s3170 + $0x58] sm:$0xf]
      %v3194 = vld [vmem:[%s3170 + $0x5c] sm:$0xf]
      %v3195 = vld [vmem:[%s3170 + $0x60] sm:$0xf]
      %v3196 = vld [vmem:[%s3170 + $0x64] sm:$0xf]
      %v3197 = vld [vmem:[%s3170 + $0x68] sm:$0xf]
      %v3198 = vld [vmem:[%s3170 + $0x6c] sm:$0xf]
      %v3199 = vld [vmem:[%s3170 + $0x70] sm:$0xf]
      %v3200 = vld [vmem:[%s3170 + $0x74] sm:$0xf]
      %v3201 = vld [vmem:[%s3170 + $0x78] sm:$0xf]
      %v3202 = vld [vmem:[%s3170 + $0x7c] sm:$0xf]
      %v3203 = vld [vmem:[%s3170 + $0x80] sm:$0xf]
      %v3204 = vld [vmem:[%s3170 + $0x84] sm:$0xf]
      %v3205 = vld [vmem:[%s3170 + $0x88] sm:$0xf]
      %v3206 = vld [vmem:[%s3170 + $0x8c] sm:$0xf]
      %v3207 = vld [vmem:[%s3170 + $0x90] sm:$0xf]
      %v3208 = vld [vmem:[%s3170 + $0x94] sm:$0xf]
      %v3209 = vld [vmem:[%s3170 + $0x98] sm:$0xf]
      %v3210 = vld [vmem:[%s3170 + $0x9c] sm:$0xf]
      %v3211 = vld [vmem:[%s3170 + $0xa0] sm:$0xf]
      %v3212 = vld [vmem:[%s3170 + $0xa4] sm:$0xf]
      %v3213 = vld [vmem:[%s3170 + $0xa8] sm:$0xf]
      %v3214 = vld [vmem:[%s3170 + $0xac] sm:$0xf]
      %v3215 = vld [vmem:[%s3170 + $0xb0] sm:$0xf]
      %v3216 = vld [vmem:[%s3170 + $0xb4] sm:$0xf]
      %v3217 = vld [vmem:[%s3170 + $0xb8] sm:$0xf]
      %v3218 = vld [vmem:[%s3170 + $0xbc] sm:$0xf]
      %s3219 = scalar_lea.vmem %s9, 1
      %v3220 = vld [vmem:[%s3219] sm:$0x1]
      %v3221 = vpack.c.bf16 %v3169, %v3169
      %v3224 = vunpack.c.l.s4 1983009808
      %v3225 = vunpack.c.0.s8 %v3224
      %v3226 = vlaneseq
      %v3227 = vshrl.u32 %v3226, 7
      %v3228 = vsub.s32 %v3225, %v3227
      %v3229 = vrot.slane %v3221, %v3228
      %v3231 = vshrl.u32 %v3229, 16
      %v3233 = vrot.slane %v3231, 7
      %v3234 = vshll.u32 %v3229, 16
      %v3236 = vor.u32 %v3233, %v3234
      %v3238 = vld [vmem:[#allocation4] sm:$0x3]
      %v3239 = vsel %vm2903, %v3236, %v3238
      %3240 = vst [vmem:[#allocation4] sm:$0x3] %v3239
      %3241 = vst [vmem:[#allocation4 + $0x2] sm:$0x3] %v3221
      %v3242 = vrot.slane %v3231, 6
      %v3243 = vrot.slane %v3234, 7
      %v3244 = vor.u32 %v3242, %v3243
      %v3245 = vrot.slane %v3244, 2
      %v3247 = vld [vmem:[#allocation4 + $0x4] sm:$0x3]
      %v3248 = vsel %vm2913, %v3245, %v3247
      %3249 = vst [vmem:[#allocation4 + $0x4] sm:$0x3] %v3248
      %v3250 = vld [vmem:[#allocation4] sm:$0x3f]
      %v3252 = vlaneseq
      %v3253 = vshrl.u32 %v3252, 7
      %v3254 = vsub.s32 0, %v3253
      %v3255 = vrot.slane %v3220, %v3254
      %v3258 = vcombine.high %v3250, %v3250
      %v3260 = vunpack.c.l.s4 1983009808
      %v3261 = vunpack.c.0.s8 %v3260
      %v3262 = vlaneseq
      %v3263 = vshrl.u32 %v3262, 7
      %v3264 = vsub.s32 %v3261, %v3263
      %v3265 = vrot.slane %v3250, %v3264
      %v3267 = vunpack.c.l.s4 1983009808
      %v3268 = vunpack.c.0.s8 %v3267
      %v3269 = vlaneseq
      %v3270 = vshrl.u32 %v3269, 7
      %v3271 = vsub.s32 %v3268, %v3270
      %v3272 = vrot.slane %v3258, %v3271
      %v3273 = vcombine.high %v3265, %v3265
      %v3325 = vunpack.c.l.b16 %v3171
      %v3326 = vunpack.c.l.b16 %v3172
      %v3327 = vunpack.c.l.b16 %v3173
      %v3328 = vunpack.c.l.b16 %v3174
      %v3329 = vunpack.c.l.b16 %v3175
      %v3330 = vunpack.c.l.b16 %v3176
      %v3331 = vunpack.c.l.b16 %v3177
      %v3332 = vunpack.c.l.b16 %v3178
      %v3333 = vunpack.c.l.b16 %v3179
      %v3334 = vunpack.c.l.b16 %v3180
      %v3335 = vunpack.c.l.b16 %v3181
      %v3336 = vunpack.c.l.b16 %v3182
      %v3337 = vunpack.c.l.b16 %v3183
      %v3338 = vunpack.c.l.b16 %v3184
      %v3339 = vunpack.c.l.b16 %v3185
      %v3340 = vunpack.c.l.b16 %v3186
      %v3341 = vunpack.c.l.b16 %v3187
      %v3342 = vunpack.c.l.b16 %v3188
      %v3343 = vunpack.c.l.b16 %v3189
      %v3344 = vunpack.c.l.b16 %v3190
      %v3345 = vunpack.c.l.b16 %v3191
      %v3346 = vunpack.c.l.b16 %v3192
      %v3347 = vunpack.c.l.b16 %v3193
      %v3348 = vunpack.c.l.b16 %v3194
      %v3349 = vunpack.c.l.b16 %v3195
      %v3350 = vunpack.c.l.b16 %v3196
      %v3351 = vunpack.c.l.b16 %v3197
      %v3352 = vunpack.c.l.b16 %v3198
      %v3353 = vunpack.c.l.b16 %v3199
      %v3354 = vunpack.c.l.b16 %v3200
      %v3355 = vunpack.c.l.b16 %v3201
      %v3356 = vunpack.c.l.b16 %v3202
      %v3357 = vunpack.c.l.b16 %v3203
      %v3358 = vunpack.c.l.b16 %v3204
      %v3359 = vunpack.c.l.b16 %v3205
      %v3360 = vunpack.c.l.b16 %v3206
      %v3361 = vunpack.c.l.b16 %v3207
      %v3362 = vunpack.c.l.b16 %v3208
      %v3363 = vunpack.c.l.b16 %v3209
      %v3364 = vunpack.c.l.b16 %v3210
      %v3365 = vunpack.c.l.b16 %v3211
      %v3366 = vunpack.c.l.b16 %v3212
      %v3367 = vunpack.c.l.b16 %v3213
      %v3368 = vunpack.c.l.b16 %v3214
      %v3369 = vunpack.c.l.b16 %v3215
      %v3370 = vunpack.c.l.b16 %v3216
      %v3371 = vunpack.c.l.b16 %v3217
      %v3372 = vunpack.c.l.b16 %v3218
      %v3373 = vpack.c.b16 %v3326, %v3325
      %v3374 = vpack.c.b16 %v3328, %v3327
      %v3375 = vpack.c.b16 %v3330, %v3329
      %v3376 = vpack.c.b16 %v3332, %v3331
      %v3377 = vpack.c.b16 %v3334, %v3333
      %v3378 = vpack.c.b16 %v3336, %v3335
      %v3379 = vpack.c.b16 %v3338, %v3337
      %v3380 = vpack.c.b16 %v3340, %v3339
      %v3381 = vpack.c.b16 %v3342, %v3341
      %v3382 = vpack.c.b16 %v3344, %v3343
      %v3383 = vpack.c.b16 %v3346, %v3345
      %v3384 = vpack.c.b16 %v3348, %v3347
      %v3385 = vpack.c.b16 %v3350, %v3349
      %v3386 = vpack.c.b16 %v3352, %v3351
      %v3387 = vpack.c.b16 %v3354, %v3353
      %v3388 = vpack.c.b16 %v3356, %v3355
      %v3389 = vpack.c.b16 %v3358, %v3357
      %v3390 = vpack.c.b16 %v3360, %v3359
      %v3391 = vpack.c.b16 %v3362, %v3361
      %v3392 = vpack.c.b16 %v3364, %v3363
      %v3393 = vpack.c.b16 %v3366, %v3365
      %v3394 = vpack.c.b16 %v3368, %v3367
      %v3395 = vpack.c.b16 %v3370, %v3369
      %v3396 = vpack.c.b16 %v3372, %v3371
      %3421 = vmatprep.subr.bf16.mxu0 0
      %3422 = vmatpush1.bf16.msra.mxu0 %v3373
      %3423 = vmatprep.subr.bf16.mxu0 0
      %3424 = vmatpush1.bf16.msra.mxu0 %v3374
      %3425 = vmatprep.subr.bf16.mxu0 0
      %3426 = vmatpush1.bf16.msra.mxu0 %v3375
      %3427 = vmatprep.subr.bf16.mxu0 0
      %3428 = vmatpush1.bf16.msra.mxu0 %v3376
      %3429 = vmatprep.subr.bf16.mxu0 0
      %3430 = vmatpush1.bf16.msra.mxu0 %v3377
      %3431 = vmatprep.subr.bf16.mxu0 0
      %3432 = vmatpush1.bf16.msra.mxu0 %v3378
      %3433 = vmatprep.subr.bf16.mxu0 0
      %3434 = vmatpush1.bf16.msra.mxu0 %v3379
      %3435 = vmatprep.subr.bf16.mxu0 0
      %3436 = vmatpush1.bf16.msra.mxu0 %v3380
      %3437 = vmatprep.subr.bf16.mxu0 0
      %3438 = vmatpush1.bf16.msra.mxu0 %v3381
      %3439 = vmatprep.subr.bf16.mxu0 0
      %3440 = vmatpush1.bf16.msra.mxu0 %v3382
      %3441 = vmatprep.subr.bf16.mxu0 0
      %3442 = vmatpush1.bf16.msra.mxu0 %v3383
      %3443 = vmatprep.subr.bf16.mxu0 0
      %3444 = vmatpush1.bf16.msra.mxu0 %v3384
      %3445 = vmatprep.subr.bf16.mxu0 0
      %3446 = vmatpush1.bf16.msra.mxu0 %v3385
      %3447 = vmatprep.subr.bf16.mxu0 0
      %3448 = vmatpush1.bf16.msra.mxu0 %v3386
      %3449 = vmatprep.subr.bf16.mxu0 0
      %3450 = vmatpush1.bf16.msra.mxu0 %v3387
      %3451 = vmatprep.subr.bf16.mxu0 0
      %3452 = vmatpush1.bf16.msra.mxu0 %v3388
      %3453 = vmatprep.mubr.bf16.mxu0 %v3273
      %3454 = vmatmul.mubr.bf16.gmra.mrb[0].mxu0 %v3265
      %v3455 = vpop.f32.mrb[0].mxu0
      %v3456 = vadd.f32 %v3255, %v3455
      %v3457 = vpop.f32.mrb[0].mxu0
      %v3458 = vpop.f32.mrb[0].mxu0
      %v3459 = vpop.f32.mrb[0].mxu0
      %3460 = vdwg.mxu0
      %3461 = vmatprep.subr.bf16.mxu0 0
      %3462 = vmatpush1.bf16.msra.mxu0 %v3389
      %3463 = vmatprep.subr.bf16.mxu0 0
      %3464 = vmatpush1.bf16.msra.mxu0 %v3390
      %3465 = vmatprep.subr.bf16.mxu0 0
      %3466 = vmatpush1.bf16.msra.mxu0 %v3391
      %3467 = vmatprep.subr.bf16.mxu0 0
      %3468 = vmatpush1.bf16.msra.mxu0 %v3392
      %3469 = vmatprep.subr.bf16.mxu0 0
      %3470 = vmatpush1.bf16.msra.mxu0 %v3393
      %3471 = vmatprep.subr.bf16.mxu0 0
      %3472 = vmatpush1.bf16.msra.mxu0 %v3394
      %3473 = vmatprep.subr.bf16.mxu0 0
      %3474 = vmatpush1.bf16.msra.mxu0 %v3395
      %3475 = vmatprep.subr.bf16.mxu0 0
      %3476 = vmatpush1.bf16.msra.mxu0 %v3396
      %3477 = vmatprep.subr.bf16.mxu0 0
      %3478 = vmatpush1.bf16.msra.mxu0 0
      %3479 = vmatprep.subr.bf16.mxu0 0
      %3480 = vmatpush1.bf16.msra.mxu0 0
      %3481 = vmatprep.subr.bf16.mxu0 0
      %3482 = vmatpush1.bf16.msra.mxu0 0
      %3483 = vmatprep.subr.bf16.mxu0 0
      %3484 = vmatpush1.bf16.msra.mxu0 0
      %3485 = vmatprep.subr.bf16.mxu0 0
      %3486 = vmatpush1.bf16.msra.mxu0 0
      %3487 = vmatprep.subr.bf16.mxu0 0
      %3488 = vmatpush1.bf16.msra.mxu0 0
      %3489 = vmatprep.subr.bf16.mxu0 0
      %3490 = vmatpush1.bf16.msra.mxu0 0
      %3491 = vmatprep.subr.bf16.mxu0 0
      %3492 = vmatpush1.bf16.msra.mxu0 0
      %3493 = vmatprep.mubr.bf16.mxu0 0
      %3494 = vmatmul.mubr.bf16.gmra.mrb[0].mxu0 %v3272
      %v3495 = vpop.f32.mrb[0].mxu0
      %v3496 = vadd.f32 %v3456, %v3495
      %v3497 = vpop.f32.mrb[0].mxu0
      %v3498 = vpop.f32.mrb[0].mxu0
      %v3499 = vpop.f32.mrb[0].mxu0
      %3500 = vdwg.mxu0
      %v3501 = vmax.f32 %v3496, 0.0
      %s3502 = scalar_lea.vmem %s8, 384
      %v3503 = vld [vmem:[%s3502] sm:$0xf]
      %v3504 = vld [vmem:[%s3502 + $0x4] sm:$0xf]
      %v3505 = vld [vmem:[%s3502 + $0x8] sm:$0xf]
      %v3506 = vld [vmem:[%s3502 + $0xc] sm:$0xf]
      %v3507 = vld [vmem:[%s3502 + $0x10] sm:$0xf]
      %v3508 = vld [vmem:[%s3502 + $0x14] sm:$0xf]
      %v3509 = vld [vmem:[%s3502 + $0x18] sm:$0xf]
      %v3510 = vld [vmem:[%s3502 + $0x1c] sm:$0xf]
      %v3511 = vld [vmem:[%s3502 + $0x20] sm:$0xf]
      %v3512 = vld [vmem:[%s3502 + $0x24] sm:$0xf]
      %v3513 = vld [vmem:[%s3502 + $0x28] sm:$0xf]
      %v3514 = vld [vmem:[%s3502 + $0x2c] sm:$0xf]
      %v3515 = vld [vmem:[%s3502 + $0x30] sm:$0xf]
      %v3516 = vld [vmem:[%s3502 + $0x34] sm:$0xf]
      %v3517 = vld [vmem:[%s3502 + $0x38] sm:$0xf]
      %v3518 = vld [vmem:[%s3502 + $0x3c] sm:$0xf]
      %v3519 = vld [vmem:[%s3502 + $0x40] sm:$0xf]
      %v3520 = vld [vmem:[%s3502 + $0x44] sm:$0xf]
      %v3521 = vld [vmem:[%s3502 + $0x48] sm:$0xf]
      %v3522 = vld [vmem:[%s3502 + $0x4c] sm:$0xf]
      %v3523 = vld [vmem:[%s3502 + $0x50] sm:$0xf]
      %v3524 = vld [vmem:[%s3502 + $0x54] sm:$0xf]
      %v3525 = vld [vmem:[%s3502 + $0x58] sm:$0xf]
      %v3526 = vld [vmem:[%s3502 + $0x5c] sm:$0xf]
      %v3527 = vld [vmem:[%s3502 + $0x60] sm:$0xf]
      %v3528 = vld [vmem:[%s3502 + $0x64] sm:$0xf]
      %v3529 = vld [vmem:[%s3502 + $0x68] sm:$0xf]
      %v3530 = vld [vmem:[%s3502 + $0x6c] sm:$0xf]
      %v3531 = vld [vmem:[%s3502 + $0x70] sm:$0xf]
      %v3532 = vld [vmem:[%s3502 + $0x74] sm:$0xf]
      %v3533 = vld [vmem:[%s3502 + $0x78] sm:$0xf]
      %v3534 = vld [vmem:[%s3502 + $0x7c] sm:$0xf]
      %v3535 = vld [vmem:[%s3502 + $0x80] sm:$0xf]
      %v3536 = vld [vmem:[%s3502 + $0x84] sm:$0xf]
      %v3537 = vld [vmem:[%s3502 + $0x88] sm:$0xf]
      %v3538 = vld [vmem:[%s3502 + $0x8c] sm:$0xf]
      %v3539 = vld [vmem:[%s3502 + $0x90] sm:$0xf]
      %v3540 = vld [vmem:[%s3502 + $0x94] sm:$0xf]
      %v3541 = vld [vmem:[%s3502 + $0x98] sm:$0xf]
      %v3542 = vld [vmem:[%s3502 + $0x9c] sm:$0xf]
      %v3543 = vld [vmem:[%s3502 + $0xa0] sm:$0xf]
      %v3544 = vld [vmem:[%s3502 + $0xa4] sm:$0xf]
      %v3545 = vld [vmem:[%s3502 + $0xa8] sm:$0xf]
      %v3546 = vld [vmem:[%s3502 + $0xac] sm:$0xf]
      %v3547 = vld [vmem:[%s3502 + $0xb0] sm:$0xf]
      %v3548 = vld [vmem:[%s3502 + $0xb4] sm:$0xf]
      %v3549 = vld [vmem:[%s3502 + $0xb8] sm:$0xf]
      %v3550 = vld [vmem:[%s3502 + $0xbc] sm:$0xf]
      %s3551 = scalar_lea.vmem %s9, 2
      %v3552 = vld [vmem:[%s3551] sm:$0x1]
      %v3553 = vpack.c.bf16 %v3501, %v3501
      %v3556 = vunpack.c.l.s4 1983009808
      %v3557 = vunpack.c.0.s8 %v3556
      %v3558 = vlaneseq
      %v3559 = vshrl.u32 %v3558, 7
      %v3560 = vsub.s32 %v3557, %v3559
      %v3561 = vrot.slane %v3553, %v3560
      %v3563 = vshrl.u32 %v3561, 16
      %v3565 = vrot.slane %v3563, 7
      %v3566 = vshll.u32 %v3561, 16
      %v3568 = vor.u32 %v3565, %v3566
      %v3570 = vld [vmem:[#allocation4] sm:$0x3]
      %v3571 = vsel %vm2903, %v3568, %v3570
      %3572 = vst [vmem:[#allocation4] sm:$0x3] %v3571
      %3573 = vst [vmem:[#allocation4 + $0x2] sm:$0x3] %v3553
      %v3574 = vrot.slane %v3563, 6
      %v3575 = vrot.slane %v3566, 7
      %v3576 = vor.u32 %v3574, %v3575
      %v3577 = vrot.slane %v3576, 2
      %v3579 = vld [vmem:[#allocation4 + $0x4] sm:$0x3]
      %v3580 = vsel %vm2913, %v3577, %v3579
      %3581 = vst [vmem:[#allocation4 + $0x4] sm:$0x3] %v3580
      %v3582 = vld [vmem:[#allocation4] sm:$0x3f]
      %v3584 = vlaneseq
      %v3585 = vshrl.u32 %v3584, 7
      %v3586 = vsub.s32 0, %v3585
      %v3587 = vrot.slane %v3552, %v3586
      %v3590 = vcombine.high %v3582, %v3582
      %v3592 = vunpack.c.l.s4 1983009808
      %v3593 = vunpack.c.0.s8 %v3592
      %v3594 = vlaneseq
      %v3595 = vshrl.u32 %v3594, 7
      %v3596 = vsub.s32 %v3593, %v3595
      %v3597 = vrot.slane %v3582, %v3596
      %v3599 = vunpack.c.l.s4 1983009808
      %v3600 = vunpack.c.0.s8 %v3599
      %v3601 = vlaneseq
      %v3602 = vshrl.u32 %v3601, 7
      %v3603 = vsub.s32 %v3600, %v3602
      %v3604 = vrot.slane %v3590, %v3603
      %v3605 = vcombine.high %v3597, %v3597
      %v3657 = vunpack.c.l.b16 %v3503
      %v3658 = vunpack.c.l.b16 %v3504
      %v3659 = vunpack.c.l.b16 %v3505
      %v3660 = vunpack.c.l.b16 %v3506
      %v3661 = vunpack.c.l.b16 %v3507
      %v3662 = vunpack.c.l.b16 %v3508
      %v3663 = vunpack.c.l.b16 %v3509
      %v3664 = vunpack.c.l.b16 %v3510
      %v3665 = vunpack.c.l.b16 %v3511
      %v3666 = vunpack.c.l.b16 %v3512
      %v3667 = vunpack.c.l.b16 %v3513
      %v3668 = vunpack.c.l.b16 %v3514
      %v3669 = vunpack.c.l.b16 %v3515
      %v3670 = vunpack.c.l.b16 %v3516
      %v3671 = vunpack.c.l.b16 %v3517
      %v3672 = vunpack.c.l.b16 %v3518
      %v3673 = vunpack.c.l.b16 %v3519
      %v3674 = vunpack.c.l.b16 %v3520
      %v3675 = vunpack.c.l.b16 %v3521
      %v3676 = vunpack.c.l.b16 %v3522
      %v3677 = vunpack.c.l.b16 %v3523
      %v3678 = vunpack.c.l.b16 %v3524
      %v3679 = vunpack.c.l.b16 %v3525
      %v3680 = vunpack.c.l.b16 %v3526
      %v3681 = vunpack.c.l.b16 %v3527
      %v3682 = vunpack.c.l.b16 %v3528
      %v3683 = vunpack.c.l.b16 %v3529
      %v3684 = vunpack.c.l.b16 %v3530
      %v3685 = vunpack.c.l.b16 %v3531
      %v3686 = vunpack.c.l.b16 %v3532
      %v3687 = vunpack.c.l.b16 %v3533
      %v3688 = vunpack.c.l.b16 %v3534
      %v3689 = vunpack.c.l.b16 %v3535
      %v3690 = vunpack.c.l.b16 %v3536
      %v3691 = vunpack.c.l.b16 %v3537
      %v3692 = vunpack.c.l.b16 %v3538
      %v3693 = vunpack.c.l.b16 %v3539
      %v3694 = vunpack.c.l.b16 %v3540
      %v3695 = vunpack.c.l.b16 %v3541
      %v3696 = vunpack.c.l.b16 %v3542
      %v3697 = vunpack.c.l.b16 %v3543
      %v3698 = vunpack.c.l.b16 %v3544
      %v3699 = vunpack.c.l.b16 %v3545
      %v3700 = vunpack.c.l.b16 %v3546
      %v3701 = vunpack.c.l.b16 %v3547
      %v3702 = vunpack.c.l.b16 %v3548
      %v3703 = vunpack.c.l.b16 %v3549
      %v3704 = vunpack.c.l.b16 %v3550
      %v3705 = vpack.c.b16 %v3658, %v3657
      %v3706 = vpack.c.b16 %v3660, %v3659
      %v3707 = vpack.c.b16 %v3662, %v3661
      %v3708 = vpack.c.b16 %v3664, %v3663
      %v3709 = vpack.c.b16 %v3666, %v3665
      %v3710 = vpack.c.b16 %v3668, %v3667
      %v3711 = vpack.c.b16 %v3670, %v3669
      %v3712 = vpack.c.b16 %v3672, %v3671
      %v3713 = vpack.c.b16 %v3674, %v3673
      %v3714 = vpack.c.b16 %v3676, %v3675
      %v3715 = vpack.c.b16 %v3678, %v3677
      %v3716 = vpack.c.b16 %v3680, %v3679
      %v3717 = vpack.c.b16 %v3682, %v3681
      %v3718 = vpack.c.b16 %v3684, %v3683
      %v3719 = vpack.c.b16 %v3686, %v3685
      %v3720 = vpack.c.b16 %v3688, %v3687
      %v3721 = vpack.c.b16 %v3690, %v3689
      %v3722 = vpack.c.b16 %v3692, %v3691
      %v3723 = vpack.c.b16 %v3694, %v3693
      %v3724 = vpack.c.b16 %v3696, %v3695
      %v3725 = vpack.c.b16 %v3698, %v3697
      %v3726 = vpack.c.b16 %v3700, %v3699
      %v3727 = vpack.c.b16 %v3702, %v3701
      %v3728 = vpack.c.b16 %v3704, %v3703
      %3753 = vmatprep.subr.bf16.mxu0 0
      %3754 = vmatpush1.bf16.msra.mxu0 %v3705
      %3755 = vmatprep.subr.bf16.mxu0 0
      %3756 = vmatpush1.bf16.msra.mxu0 %v3706
      %3757 = vmatprep.subr.bf16.mxu0 0
      %3758 = vmatpush1.bf16.msra.mxu0 %v3707
      %3759 = vmatprep.subr.bf16.mxu0 0
      %3760 = vmatpush1.bf16.msra.mxu0 %v3708
      %3761 = vmatprep.subr.bf16.mxu0 0
      %3762 = vmatpush1.bf16.msra.mxu0 %v3709
      %3763 = vmatprep.subr.bf16.mxu0 0
      %3764 = vmatpush1.bf16.msra.mxu0 %v3710
      %3765 = vmatprep.subr.bf16.mxu0 0
      %3766 = vmatpush1.bf16.msra.mxu0 %v3711
      %3767 = vmatprep.subr.bf16.mxu0 0
      %3768 = vmatpush1.bf16.msra.mxu0 %v3712
      %3769 = vmatprep.subr.bf16.mxu0 0
      %3770 = vmatpush1.bf16.msra.mxu0 %v3713
      %3771 = vmatprep.subr.bf16.mxu0 0
      %3772 = vmatpush1.bf16.msra.mxu0 %v3714
      %3773 = vmatprep.subr.bf16.mxu0 0
      %3774 = vmatpush1.bf16.msra.mxu0 %v3715
      %3775 = vmatprep.subr.bf16.mxu0 0
      %3776 = vmatpush1.bf16.msra.mxu0 %v3716
      %3777 = vmatprep.subr.bf16.mxu0 0
      %3778 = vmatpush1.bf16.msra.mxu0 %v3717
      %3779 = vmatprep.subr.bf16.mxu0 0
      %3780 = vmatpush1.bf16.msra.mxu0 %v3718
      %3781 = vmatprep.subr.bf16.mxu0 0
      %3782 = vmatpush1.bf16.msra.mxu0 %v3719
      %3783 = vmatprep.subr.bf16.mxu0 0
      %3784 = vmatpush1.bf16.msra.mxu0 %v3720
      %3785 = vmatprep.mubr.bf16.mxu0 %v3605
      %3786 = vmatmul.mubr.bf16.gmra.mrb[0].mxu0 %v3597
      %v3787 = vpop.f32.mrb[0].mxu0
      %v3788 = vadd.f32 %v3587, %v3787
      %v3789 = vpop.f32.mrb[0].mxu0
      %v3790 = vpop.f32.mrb[0].mxu0
      %v3791 = vpop.f32.mrb[0].mxu0
      %3792 = vdwg.mxu0
      %3793 = vmatprep.subr.bf16.mxu0 0
      %3794 = vmatpush1.bf16.msra.mxu0 %v3721
      %3795 = vmatprep.subr.bf16.mxu0 0
      %3796 = vmatpush1.bf16.msra.mxu0 %v3722
      %3797 = vmatprep.subr.bf16.mxu0 0
      %3798 = vmatpush1.bf16.msra.mxu0 %v3723
      %3799 = vmatprep.subr.bf16.mxu0 0
      %3800 = vmatpush1.bf16.msra.mxu0 %v3724
      %3801 = vmatprep.subr.bf16.mxu0 0
      %3802 = vmatpush1.bf16.msra.mxu0 %v3725
      %3803 = vmatprep.subr.bf16.mxu0 0
      %3804 = vmatpush1.bf16.msra.mxu0 %v3726
      %3805 = vmatprep.subr.bf16.mxu0 0
      %3806 = vmatpush1.bf16.msra.mxu0 %v3727
      %3807 = vmatprep.subr.bf16.mxu0 0
      %3808 = vmatpush1.bf16.msra.mxu0 %v3728
      %3809 = vmatprep.subr.bf16.mxu0 0
      %3810 = vmatpush1.bf16.msra.mxu0 0
      %3811 = vmatprep.subr.bf16.mxu0 0
      %3812 = vmatpush1.bf16.msra.mxu0 0
      %3813 = vmatprep.subr.bf16.mxu0 0
      %3814 = vmatpush1.bf16.msra.mxu0 0
      %3815 = vmatprep.subr.bf16.mxu0 0
      %3816 = vmatpush1.bf16.msra.mxu0 0
      %3817 = vmatprep.subr.bf16.mxu0 0
      %3818 = vmatpush1.bf16.msra.mxu0 0
      %3819 = vmatprep.subr.bf16.mxu0 0
      %3820 = vmatpush1.bf16.msra.mxu0 0
      %3821 = vmatprep.subr.bf16.mxu0 0
      %3822 = vmatpush1.bf16.msra.mxu0 0
      %3823 = vmatprep.subr.bf16.mxu0 0
      %3824 = vmatpush1.bf16.msra.mxu0 0
      %3825 = vmatprep.mubr.bf16.mxu0 0
      %3826 = vmatmul.mubr.bf16.gmra.mrb[0].mxu0 %v3604
      %v3827 = vpop.f32.mrb[0].mxu0
      %v3828 = vadd.f32 %v3788, %v3827
      %v3829 = vpop.f32.mrb[0].mxu0
      %v3830 = vpop.f32.mrb[0].mxu0
      %v3831 = vpop.f32.mrb[0].mxu0
      %3832 = vdwg.mxu0
      %v3833 = vadd.f32 %v3828, %v3169
      %v3834 = vmax.f32 %v3833, 0.0
      %3835 = vst [vmem:[%s357] sm:$0xf] %v3834
      %p3836 = scmp.lt.s32.totalorder %s21, 1
      %s3837 = scalar_select %p3836, %s21, 1
      %s3838 = smul.addr %s3837, 4
      %s3839 = scalar_lea.vmem %s10, %s3838
      // Predicated region
      $region61: #{resnet_forward.1} parent=59 // pred_check
        %p3840 = pneg %p254
      $region62: #{resnet_forward.1} parent=59 // pred_check_branch
        %3842 = sbr.rel (%p3840) target = $region64
      $region63: #{resnet_forward.1} parent=59 // pred_region
        _
      $region64: #{resnet_forward.1} parent=59 // pred_fallthru
        _
    $region60: #{resnet_forward.1} parent=5 // pred_fallthru
      _
    %p3843 = scmp.le.s32.totalorder 2, %s16
    // Predicated region
    $region65: #{resnet_forward.1} parent=5 // pred_check
      %p3844 = pneg %p3843
    $region66: #{resnet_forward.1} parent=5 // pred_check_branch
      %3846 = sbr.rel (%p3844) target = $region68
    $region67: #{resnet_forward.1} parent=5 // pred_region
      %s3847 = ssub.s32 %s16, 2
      // Predicated region
      $region69: #{resnet_forward.1} parent=67 // pred_check
        %p3848 = pneg %p260
      $region70: #{resnet_forward.1} parent=67 // pred_check_branch
        %3850 = sbr.rel (%p3848) target = $region72
      $region71: #{resnet_forward.1} parent=67 // pred_region
        %p3851 = scmp.lt.s32.totalorder %s22, 1
        %s3852 = scalar_select %p3851, %s22, 1
        %s3853 = smul.addr %s3852, 4
        %s3854 = scalar_lea.vmem %s10, %s3853
      $region72: #{resnet_forward.1} parent=67 // pred_fallthru
        _
    $region68: #{resnet_forward.1} parent=5 // pred_fallthru
      _
  $region6: #{resnet_forward.1} parent=0 // loop_footer
    %s20 = sadd.s32 1, %s16
  $region7: #{resnet_forward.1} parent=0 // loop_footer_branch
    %15 = sbr.rel target = $region3
  $region8: #{resnet_forward.1} parent=0 // loop_exit
    _

</llo_original>
